<compile_context>
chip_gen: v7x
topology: tpu7x:2x2x1
jax: 0.10.0
libtpu: 0.0.40
codegen_flags: <defaults>
</compile_context>

<pallas_src>
import functools

import jax
import jax.numpy as jnp
from jax.experimental import pallas as pl
from jax.experimental.pallas import tpu as pltpu


# ----------------------------------------------------------------------------
# Fused kernel: conv1+BN1+ReLU -> conv2+BN2 -> (+ conv1x1+BN or identity) -> ReLU
# ----------------------------------------------------------------------------
def _fused_basic_block_kernel(*refs, H, W, Cin, Cout, has_proj):
    if has_proj:
        (x_ref, w1_ref, s1_ref, b1_ref, w2_ref, s2_ref, b2_ref,
         wsc_ref, ssc_ref, bsc_ref, o_ref, xp_s, y1p_s) = refs
    else:
        (x_ref, w1_ref, s1_ref, b1_ref, w2_ref, s2_ref, b2_ref,
         o_ref, xp_s, y1p_s) = refs
        wsc_ref = ssc_ref = bsc_ref = None

    HW = H * W

    # ---- in-VMEM halo padding (replaces the wrapper jnp.pad HBM passes) ----
    xp_s[...] = jnp.zeros_like(xp_s)
    y1p_s[...] = jnp.zeros_like(y1p_s)
    xp_s[1:H + 1, 1:W + 1, :] = x_ref[0].astype(xp_s.dtype)       # (H, W, Cin)

    def im2col(src, C):
        # single (HW, 9*C) patch matrix -> one MXU matmul per conv
        return jnp.concatenate(
            [src[dy:dy + H, dx:dx + W, :].reshape(HW, C)
             for dy in range(3) for dx in range(3)], axis=1)

    # ---- conv1 + BN1 + ReLU (bf16 MXU operands, f32 accumulation) ----------
    col1 = im2col(xp_s, Cin).astype(jnp.bfloat16)                 # (HW, 9*Cin)
    y1 = jnp.dot(col1, w1_ref[...], preferred_element_type=jnp.float32)
    y1 = jnp.maximum(y1 * s1_ref[...] + b1_ref[...], 0.0)         # (HW, Cout) f32

    # ---- conv2 + BN2 (y1 stays in VMEM, never written to HBM) --------------
    y1p_s[1:H + 1, 1:W + 1, :] = y1.reshape(H, W, Cout)
    col2 = im2col(y1p_s, Cout).astype(jnp.bfloat16)               # (HW, 9*Cout)
    main = jnp.dot(col2, w2_ref[...], preferred_element_type=jnp.float32)
    main = main * s2_ref[...] + b2_ref[...]

    # ---- shortcut -----------------------------------------------------------
    x_flat = xp_s[1:H + 1, 1:W + 1, :].reshape(HW, Cin)           # f32
    if has_proj:
        sc = jnp.dot(x_flat.astype(jnp.bfloat16), wsc_ref[...],
                     preferred_element_type=jnp.float32)
        sc = sc * ssc_ref[...] + bsc_ref[...]
    else:
        sc = x_flat                                               # identity add

    out = jnp.maximum(main + sc, 0.0)                             # (HW, Cout) f32

    # ---- lane-dense store: (1, Cout, HW) with HW (=256) on the lane axis ----
    o_ref[...] = jnp.transpose(out)[None, :, :].astype(o_ref.dtype)


# ----------------------------------------------------------------------------
# Wrapper
# ----------------------------------------------------------------------------
def _fold_bn(gamma, beta, mean, var, eps=1e-5):
    scale = gamma / jnp.sqrt(var + eps)
    bias = beta - mean * scale
    return (scale.reshape(1, -1).astype(jnp.float32),
            bias.reshape(1, -1).astype(jnp.float32))


def basic_block_forward(x_nchw, params):
    """ResNet BasicBlock forward (stride=1). x_nchw: (N, Cin, H, W) float32."""
    N, Cin, H, W = x_nchw.shape
    Cout = params["w1"].shape[-1]
    HW = H * W
    has_proj = (Cin != Cout)   # PyTorch: projection iff stride != 1 or Cin != planes

    # NHWC once (single XLA pass); activations/weights go to bf16 for the MXU.
    x_nhwc = jnp.transpose(x_nchw, (0, 2, 3, 1)).astype(jnp.bfloat16)
    w1_r = params["w1"].reshape(9 * Cin, Cout).astype(jnp.bfloat16)   # (ky,kx,ci)->rows
    w2_r = params["w2"].reshape(9 * Cout, Cout).astype(jnp.bfloat16)
    s1, b1 = _fold_bn(params["bn1_g"], params["bn1_b"],
                      params["bn1_m"], params["bn1_v"])
    s2, b2 = _fold_bn(params["bn2_g"], params["bn2_b"],
                      params["bn2_m"], params["bn2_v"])

    def const_spec(shape):
        nd = len(shape)
        return pl.BlockSpec(shape, lambda b, _nd=nd: (0,) * _nd)

    in_specs = [
        pl.BlockSpec((1, H, W, Cin), lambda b: (b, 0, 0, 0)),
        const_spec((9 * Cin, Cout)),
        const_spec((1, Cout)),
        const_spec((1, Cout)),
        const_spec((9 * Cout, Cout)),
        const_spec((1, Cout)),
        const_spec((1, Cout)),
    ]
    args = [x_nhwc, w1_r, s1, b1, w2_r, s2, b2]
    if has_proj:
        wsc = params["wsc"].astype(jnp.bfloat16)
        ssc, bsc = _fold_bn(params["bnsc_g"], params["bnsc_b"],
                            params["bnsc_m"], params["bnsc_v"])
        in_specs += [const_spec((Cin, Cout)), const_spec((1, Cout)),
                     const_spec((1, Cout))]
        args += [wsc, ssc, bsc]

    out = pl.pallas_call(
        functools.partial(_fused_basic_block_kernel,
                          H=H, W=W, Cin=Cin, Cout=Cout, has_proj=has_proj),
        out_shape=jax.ShapeDtypeStruct((N, Cout, HW), jnp.float32),
        grid_spec=pltpu.PrefetchScalarGridSpec(
            num_scalar_prefetch=0,
            grid=(N,),
            in_specs=in_specs,
            out_specs=pl.BlockSpec((1, Cout, HW), lambda b: (b, 0, 0)),
            scratch_shapes=[pltpu.VMEM((H + 2, W + 2, Cin), jnp.float32),
                            pltpu.VMEM((H + 2, W + 2, Cout), jnp.float32)],
        ),
        compiler_params=pltpu.CompilerParams(
            dimension_semantics=("parallel",)),
    )(*args)

    return out.reshape(N, Cout, H, W)      # free reshape: already NCHW-major


# ----------------------------------------------------------------------------
# Pure-JAX f32 reference (PyTorch semantics) for correctness
# ----------------------------------------------------------------------------
def _ref_forward(x_nchw, params):
    N, Cin, H, W = x_nchw.shape
    Cout = params["w1"].shape[-1]
    x = jnp.transpose(x_nchw, (0, 2, 3, 1))
    dn = ("NHWC", "HWIO", "NHWC")
    conv = lambda a, w: jax.lax.conv_general_dilated(
        a, w, (1, 1), "SAME", dimension_numbers=dn,
        precision=jax.lax.Precision.HIGHEST)
    s1, b1 = _fold_bn(params["bn1_g"], params["bn1_b"],
                      params["bn1_m"], params["bn1_v"])
    s2, b2 = _fold_bn(params["bn2_g"], params["bn2_b"],
                      params["bn2_m"], params["bn2_v"])
    y = jnp.maximum(conv(x, params["w1"]) * s1 + b1, 0.0)
    y = conv(y, params["w2"]) * s2 + b2
    if Cin != Cout:
        ssc, bsc = _fold_bn(params["bnsc_g"], params["bnsc_b"],
                            params["bnsc_m"], params["bnsc_v"])
        sc = conv(x, params["wsc"][None, None]) * ssc + bsc
    else:
        sc = x
    out = jnp.maximum(y + sc, 0.0)
    return jnp.transpose(out, (0, 3, 1, 2))


def _make_params(key, cin, cout):
    ks = jax.random.split(key, 16)
    p = {
        "w1": 0.1 * jax.random.normal(ks[0], (3, 3, cin, cout), jnp.float32),
        "w2": 0.1 * jax.random.normal(ks[1], (3, 3, cout, cout), jnp.float32),
        "bn1_g": 1.0 + 0.1 * jax.random.normal(ks[2], (cout,), jnp.float32),
        "bn1_b": 0.1 * jax.random.normal(ks[3], (cout,), jnp.float32),
        "bn1_m": 0.1 * jax.random.normal(ks[4], (cout,), jnp.float32),
        "bn1_v": 1.0 + 0.1 * jax.random.uniform(ks[5], (cout,), jnp.float32),
        "bn2_g": 1.0 + 0.1 * jax.random.normal(ks[6], (cout,), jnp.float32),
        "bn2_b": 0.1 * jax.random.normal(ks[7], (cout,), jnp.float32),
        "bn2_m": 0.1 * jax.random.normal(ks[8], (cout,), jnp.float32),
        "bn2_v": 1.0 + 0.1 * jax.random.uniform(ks[9], (cout,), jnp.float32),
    }
    if cin != cout:
        p["wsc"] = 0.1 * jax.random.normal(ks[10], (cin, cout), jnp.float32)
        p["bnsc_g"] = 1.0 + 0.1 * jax.random.normal(ks[11], (cout,), jnp.float32)
        p["bnsc_b"] = 0.1 * jax.random.normal(ks[12], (cout,), jnp.float32)
        p["bnsc_m"] = 0.1 * jax.random.normal(ks[13], (cout,), jnp.float32)
        p["bnsc_v"] = 1.0 + 0.1 * jax.random.uniform(ks[14], (cout,), jnp.float32)
    return p


# ----------------------------------------------------------------------------
if __name__ == "__main__":
    key = jax.random.PRNGKey(0)
    k_p1, k_p2, k_x1, k_x2 = jax.random.split(key, 4)

    # Config A: Cin != Cout  -> projection (conv1x1 + BN) shortcut.
    N, Cin, Cout, H, W = 2, 4, 8, 16, 16
    params_a = _make_params(k_p1, Cin, Cout)
    x_a = jax.random.normal(k_x1, (N, Cin, H, W), jnp.float32)
    out_a = jax.block_until_ready(basic_block_forward(x_a, params_a))
    ref_a = jax.block_until_ready(_ref_forward(x_a, params_a))
    assert out_a.shape == (N, Cout, H, W), out_a.shape
    err_a = float(jnp.max(jnp.abs(out_a - ref_a)))
    assert jnp.allclose(out_a, ref_a, atol=3e-2, rtol=3e-2), err_a

    # Config B: Cin == Cout  -> identity shortcut (no projection matmul).
    params_b = _make_params(k_p2, 8, 8)
    x_b = jax.random.normal(k_x2, (N, 8, H, W), jnp.float32)
    out_b = jax.block_until_ready(basic_block_forward(x_b, params_b))
    ref_b = jax.block_until_ready(_ref_forward(x_b, params_b))
    assert out_b.shape == (N, 8, H, W), out_b.shape
    err_b = float(jnp.max(jnp.abs(out_b - ref_b)))
    assert jnp.allclose(out_b, ref_b, atol=3e-2, rtol=3e-2), err_b

    print("KERNEL_OK")
</pallas_src>

<mosaic_0001>
module attributes {stable_mosaic.version = 11 : i64} {
  func.func @_fused_basic_block_kernel(%arg0: i32, %arg1: memref<1x16x16x4xbf16, #tpu.memory_space<vmem>>, %arg2: memref<36x8xbf16, #tpu.memory_space<vmem>>, %arg3: memref<1x8xf32, #tpu.memory_space<vmem>>, %arg4: memref<1x8xf32, #tpu.memory_space<vmem>>, %arg5: memref<72x8xbf16, #tpu.memory_space<vmem>>, %arg6: memref<1x8xf32, #tpu.memory_space<vmem>>, %arg7: memref<1x8xf32, #tpu.memory_space<vmem>>, %arg8: memref<4x8xbf16, #tpu.memory_space<vmem>>, %arg9: memref<1x8xf32, #tpu.memory_space<vmem>>, %arg10: memref<1x8xf32, #tpu.memory_space<vmem>>, %arg11: memref<1x8x256xf32, #tpu.memory_space<vmem>>, %arg12: memref<18x18x4xf32, #tpu.memory_space<vmem>>, %arg13: memref<18x18x8xf32, #tpu.memory_space<vmem>>) attributes {dimension_semantics = [#tpu.dimension_semantics<parallel>], iteration_bounds = array<i64: 2>, scalar_prefetch = 0 : i64, scratch_operands = 2 : i64, tpu.core_type = #tpu.core_type<tc>, window_params = [{transform_indices = @transform_0, window_bounds = array<i64: 1, 16, 16, 4>}, {pipeline_mode = #tpu.pipeline_mode<synchronous>, transform_indices = @transform_1, window_bounds = array<i64: 36, 8>}, {pipeline_mode = #tpu.pipeline_mode<synchronous>, transform_indices = @transform_2, window_bounds = array<i64: 1, 8>}, {pipeline_mode = #tpu.pipeline_mode<synchronous>, transform_indices = @transform_3, window_bounds = array<i64: 1, 8>}, {pipeline_mode = #tpu.pipeline_mode<synchronous>, transform_indices = @transform_4, window_bounds = array<i64: 72, 8>}, {pipeline_mode = #tpu.pipeline_mode<synchronous>, transform_indices = @transform_5, window_bounds = array<i64: 1, 8>}, {pipeline_mode = #tpu.pipeline_mode<synchronous>, transform_indices = @transform_6, window_bounds = array<i64: 1, 8>}, {pipeline_mode = #tpu.pipeline_mode<synchronous>, transform_indices = @transform_7, window_bounds = array<i64: 4, 8>}, {pipeline_mode = #tpu.pipeline_mode<synchronous>, transform_indices = @transform_8, window_bounds = array<i64: 1, 8>}, {pipeline_mode = #tpu.pipeline_mode<synchronous>, transform_indices = @transform_9, window_bounds = array<i64: 1, 8>}, {transform_indices = @transform_10, window_bounds = array<i64: 1, 8, 256>}]} {
    %cst = arith.constant 0.000000e+00 : f32
    %0 = vector.broadcast %cst : f32 to vector<18x18x4xf32>
    %c0 = arith.constant 0 : index
    %c0_0 = arith.constant 0 : index
    %c0_1 = arith.constant 0 : index
    %1 = vector.load %arg12[%c0, %c0_0, %c0_1] : memref<18x18x4xf32, #tpu.memory_space<vmem>>, vector<18x18x4xf32>
    tpu.vector_store %arg12[%c0, %c0_0, %c0_1], %0 {strides = array<i32>} : memref<18x18x4xf32, #tpu.memory_space<vmem>>, vector<18x18x4xf32>,
    %cst_2 = arith.constant 0.000000e+00 : f32
    %2 = vector.broadcast %cst_2 : f32 to vector<18x18x8xf32>
    %c0_3 = arith.constant 0 : index
    %c0_4 = arith.constant 0 : index
    %c0_5 = arith.constant 0 : index
    %3 = vector.load %arg13[%c0_3, %c0_4, %c0_5] : memref<18x18x8xf32, #tpu.memory_space<vmem>>, vector<18x18x8xf32>
    tpu.vector_store %arg13[%c0_3, %c0_4, %c0_5], %2 {strides = array<i32>} : memref<18x18x8xf32, #tpu.memory_space<vmem>>, vector<18x18x8xf32>,
    %c0_6 = arith.constant 0 : index
    %c0_7 = arith.constant 0 : index
    %c0_8 = arith.constant 0 : index
    %c0_9 = arith.constant 0 : index
    %4 = vector.load %arg1[%c0_6, %c0_7, %c0_8, %c0_9] : memref<1x16x16x4xbf16, #tpu.memory_space<vmem>>, vector<1x16x16x4xbf16>
    %5 = vector.shape_cast %4 : vector<1x16x16x4xbf16> to vector<16x16x4xbf16>
    %6 = arith.extf %5 : vector<16x16x4xbf16> to vector<16x16x4xf32>
    %c1 = arith.constant 1 : index
    %c1_10 = arith.constant 1 : index
    %c0_11 = arith.constant 0 : index
    %7 = vector.load %arg12[%c1, %c1_10, %c0_11] : memref<18x18x4xf32, #tpu.memory_space<vmem>>, vector<16x16x4xf32>
    tpu.vector_store %arg12[%c1, %c1_10, %c0_11], %6 {strides = array<i32>} : memref<18x18x4xf32, #tpu.memory_space<vmem>>, vector<16x16x4xf32>,
    %c0_12 = arith.constant 0 : index
    %c0_13 = arith.constant 0 : index
    %c0_14 = arith.constant 0 : index
    %8 = vector.load %arg12[%c0_12, %c0_13, %c0_14] : memref<18x18x4xf32, #tpu.memory_space<vmem>>, vector<16x16x4xf32>
    %9 = vector.shape_cast %8 : vector<16x16x4xf32> to vector<256x4xf32>
    %c0_15 = arith.constant 0 : index
    %c1_16 = arith.constant 1 : index
    %c0_17 = arith.constant 0 : index
    %10 = vector.load %arg12[%c0_15, %c1_16, %c0_17] : memref<18x18x4xf32, #tpu.memory_space<vmem>>, vector<16x16x4xf32>
    %11 = vector.shape_cast %10 : vector<16x16x4xf32> to vector<256x4xf32>
    %c0_18 = arith.constant 0 : index
    %c2 = arith.constant 2 : index
    %c0_19 = arith.constant 0 : index
    %12 = vector.load %arg12[%c0_18, %c2, %c0_19] : memref<18x18x4xf32, #tpu.memory_space<vmem>>, vector<16x16x4xf32>
    %13 = vector.shape_cast %12 : vector<16x16x4xf32> to vector<256x4xf32>
    %c1_20 = arith.constant 1 : index
    %c0_21 = arith.constant 0 : index
    %c0_22 = arith.constant 0 : index
    %14 = vector.load %arg12[%c1_20, %c0_21, %c0_22] : memref<18x18x4xf32, #tpu.memory_space<vmem>>, vector<16x16x4xf32>
    %15 = vector.shape_cast %14 : vector<16x16x4xf32> to vector<256x4xf32>
    %c1_23 = arith.constant 1 : index
    %c1_24 = arith.constant 1 : index
    %c0_25 = arith.constant 0 : index
    %16 = vector.load %arg12[%c1_23, %c1_24, %c0_25] : memref<18x18x4xf32, #tpu.memory_space<vmem>>, vector<16x16x4xf32>
    %17 = vector.shape_cast %16 : vector<16x16x4xf32> to vector<256x4xf32>
    %c1_26 = arith.constant 1 : index
    %c2_27 = arith.constant 2 : index
    %c0_28 = arith.constant 0 : index
    %18 = vector.load %arg12[%c1_26, %c2_27, %c0_28] : memref<18x18x4xf32, #tpu.memory_space<vmem>>, vector<16x16x4xf32>
    %19 = vector.shape_cast %18 : vector<16x16x4xf32> to vector<256x4xf32>
    %c2_29 = arith.constant 2 : index
    %c0_30 = arith.constant 0 : index
    %c0_31 = arith.constant 0 : index
    %20 = vector.load %arg12[%c2_29, %c0_30, %c0_31] : memref<18x18x4xf32, #tpu.memory_space<vmem>>, vector<16x16x4xf32>
    %21 = vector.shape_cast %20 : vector<16x16x4xf32> to vector<256x4xf32>
    %c2_32 = arith.constant 2 : index
    %c1_33 = arith.constant 1 : index
    %c0_34 = arith.constant 0 : index
    %22 = vector.load %arg12[%c2_32, %c1_33, %c0_34] : memref<18x18x4xf32, #tpu.memory_space<vmem>>, vector<16x16x4xf32>
    %23 = vector.shape_cast %22 : vector<16x16x4xf32> to vector<256x4xf32>
    %c2_35 = arith.constant 2 : index
    %c2_36 = arith.constant 2 : index
    %c0_37 = arith.constant 0 : index
    %24 = vector.load %arg12[%c2_35, %c2_36, %c0_37] : memref<18x18x4xf32, #tpu.memory_space<vmem>>, vector<16x16x4xf32>
    %25 = vector.shape_cast %24 : vector<16x16x4xf32> to vector<256x4xf32>
    %26 = tpu.concatenate %9, %11, %13, %15, %17, %19, %21, %23, %25 in 1 : vector<256x4xf32>, vector<256x4xf32>, vector<256x4xf32>, vector<256x4xf32>, vector<256x4xf32>, vector<256x4xf32>, vector<256x4xf32>, vector<256x4xf32>, vector<256x4xf32> -> vector<256x36xf32>
    %27 = arith.truncf %26 : vector<256x36xf32> to vector<256x36xbf16>
    %c0_38 = arith.constant 0 : index
    %c0_39 = arith.constant 0 : index
    %28 = vector.load %arg2[%c0_38, %c0_39] : memref<36x8xbf16, #tpu.memory_space<vmem>>, vector<36x8xbf16>
    %cst_40 = arith.constant dense<0.000000e+00> : vector<256x8xf32>
    %29 = tpu.matmul %27, %28, %cst_40 {dimension_numbers = #tpu.dot_dimension_numbers<[1], [0], [0], [1], [0, 0, 1, 1], [], []>} : vector<256x36xbf16>, vector<36x8xbf16>, vector<256x8xf32> -> vector<256x8xf32>
    %c0_41 = arith.constant 0 : index
    %c0_42 = arith.constant 0 : index
    %30 = vector.load %arg3[%c0_41, %c0_42] : memref<1x8xf32, #tpu.memory_space<vmem>>, vector<1x8xf32>
    %31 = vector.broadcast %30 : vector<1x8xf32> to vector<256x8xf32>
    %32 = arith.mulf %29, %31 : vector<256x8xf32>
    %c0_43 = arith.constant 0 : index
    %c0_44 = arith.constant 0 : index
    %33 = vector.load %arg4[%c0_43, %c0_44] : memref<1x8xf32, #tpu.memory_space<vmem>>, vector<1x8xf32>
    %34 = vector.broadcast %33 : vector<1x8xf32> to vector<256x8xf32>
    %35 = arith.addf %32, %34 : vector<256x8xf32>
    %cst_45 = arith.constant 0.000000e+00 : f32
    %36 = vector.broadcast %cst_45 : f32 to vector<256x8xf32>
    %37 = arith.maximumf %35, %36 : vector<256x8xf32>
    %38 = vector.shape_cast %37 : vector<256x8xf32> to vector<16x16x8xf32>
    %c1_46 = arith.constant 1 : index
    %c1_47 = arith.constant 1 : index
    %c0_48 = arith.constant 0 : index
    %39 = vector.load %arg13[%c1_46, %c1_47, %c0_48] : memref<18x18x8xf32, #tpu.memory_space<vmem>>, vector<16x16x8xf32>
    tpu.vector_store %arg13[%c1_46, %c1_47, %c0_48], %38 {strides = array<i32>} : memref<18x18x8xf32, #tpu.memory_space<vmem>>, vector<16x16x8xf32>,
    %c0_49 = arith.constant 0 : index
    %c0_50 = arith.constant 0 : index
    %c0_51 = arith.constant 0 : index
    %40 = vector.load %arg13[%c0_49, %c0_50, %c0_51] : memref<18x18x8xf32, #tpu.memory_space<vmem>>, vector<16x16x8xf32>
    %41 = vector.shape_cast %40 : vector<16x16x8xf32> to vector<256x8xf32>
    %c0_52 = arith.constant 0 : index
    %c1_53 = arith.constant 1 : index
    %c0_54 = arith.constant 0 : index
    %42 = vector.load %arg13[%c0_52, %c1_53, %c0_54] : memref<18x18x8xf32, #tpu.memory_space<vmem>>, vector<16x16x8xf32>
    %43 = vector.shape_cast %42 : vector<16x16x8xf32> to vector<256x8xf32>
    %c0_55 = arith.constant 0 : index
    %c2_56 = arith.constant 2 : index
    %c0_57 = arith.constant 0 : index
    %44 = vector.load %arg13[%c0_55, %c2_56, %c0_57] : memref<18x18x8xf32, #tpu.memory_space<vmem>>, vector<16x16x8xf32>
    %45 = vector.shape_cast %44 : vector<16x16x8xf32> to vector<256x8xf32>
    %c1_58 = arith.constant 1 : index
    %c0_59 = arith.constant 0 : index
    %c0_60 = arith.constant 0 : index
    %46 = vector.load %arg13[%c1_58, %c0_59, %c0_60] : memref<18x18x8xf32, #tpu.memory_space<vmem>>, vector<16x16x8xf32>
    %47 = vector.shape_cast %46 : vector<16x16x8xf32> to vector<256x8xf32>
    %c1_61 = arith.constant 1 : index
    %c1_62 = arith.constant 1 : index
    %c0_63 = arith.constant 0 : index
    %48 = vector.load %arg13[%c1_61, %c1_62, %c0_63] : memref<18x18x8xf32, #tpu.memory_space<vmem>>, vector<16x16x8xf32>
    %49 = vector.shape_cast %48 : vector<16x16x8xf32> to vector<256x8xf32>
    %c1_64 = arith.constant 1 : index
    %c2_65 = arith.constant 2 : index
    %c0_66 = arith.constant 0 : index
    %50 = vector.load %arg13[%c1_64, %c2_65, %c0_66] : memref<18x18x8xf32, #tpu.memory_space<vmem>>, vector<16x16x8xf32>
    %51 = vector.shape_cast %50 : vector<16x16x8xf32> to vector<256x8xf32>
    %c2_67 = arith.constant 2 : index
    %c0_68 = arith.constant 0 : index
    %c0_69 = arith.constant 0 : index
    %52 = vector.load %arg13[%c2_67, %c0_68, %c0_69] : memref<18x18x8xf32, #tpu.memory_space<vmem>>, vector<16x16x8xf32>
    %53 = vector.shape_cast %52 : vector<16x16x8xf32> to vector<256x8xf32>
    %c2_70 = arith.constant 2 : index
    %c1_71 = arith.constant 1 : index
    %c0_72 = arith.constant 0 : index
    %54 = vector.load %arg13[%c2_70, %c1_71, %c0_72] : memref<18x18x8xf32, #tpu.memory_space<vmem>>, vector<16x16x8xf32>
    %55 = vector.shape_cast %54 : vector<16x16x8xf32> to vector<256x8xf32>
    %c2_73 = arith.constant 2 : index
    %c2_74 = arith.constant 2 : index
    %c0_75 = arith.constant 0 : index
    %56 = vector.load %arg13[%c2_73, %c2_74, %c0_75] : memref<18x18x8xf32, #tpu.memory_space<vmem>>, vector<16x16x8xf32>
    %57 = vector.shape_cast %56 : vector<16x16x8xf32> to vector<256x8xf32>
    %58 = tpu.concatenate %41, %43, %45, %47, %49, %51, %53, %55, %57 in 1 : vector<256x8xf32>, vector<256x8xf32>, vector<256x8xf32>, vector<256x8xf32>, vector<256x8xf32>, vector<256x8xf32>, vector<256x8xf32>, vector<256x8xf32>, vector<256x8xf32> -> vector<256x72xf32>
    %59 = arith.truncf %58 : vector<256x72xf32> to vector<256x72xbf16>
    %c0_76 = arith.constant 0 : index
    %c0_77 = arith.constant 0 : index
    %60 = vector.load %arg5[%c0_76, %c0_77] : memref<72x8xbf16, #tpu.memory_space<vmem>>, vector<72x8xbf16>
    %cst_78 = arith.constant dense<0.000000e+00> : vector<256x8xf32>
    %61 = tpu.matmul %59, %60, %cst_78 {dimension_numbers = #tpu.dot_dimension_numbers<[1], [0], [0], [1], [0, 0, 1, 1], [], []>} : vector<256x72xbf16>, vector<72x8xbf16>, vector<256x8xf32> -> vector<256x8xf32>
    %c0_79 = arith.constant 0 : index
    %c0_80 = arith.constant 0 : index
    %62 = vector.load %arg6[%c0_79, %c0_80] : memref<1x8xf32, #tpu.memory_space<vmem>>, vector<1x8xf32>
    %63 = vector.broadcast %62 : vector<1x8xf32> to vector<256x8xf32>
    %64 = arith.mulf %61, %63 : vector<256x8xf32>
    %c0_81 = arith.constant 0 : index
    %c0_82 = arith.constant 0 : index
    %65 = vector.load %arg7[%c0_81, %c0_82] : memref<1x8xf32, #tpu.memory_space<vmem>>, vector<1x8xf32>
    %66 = vector.broadcast %65 : vector<1x8xf32> to vector<256x8xf32>
    %67 = arith.addf %64, %66 : vector<256x8xf32>
    %c1_83 = arith.constant 1 : index
    %c1_84 = arith.constant 1 : index
    %c0_85 = arith.constant 0 : index
    %68 = vector.load %arg12[%c1_83, %c1_84, %c0_85] : memref<18x18x4xf32, #tpu.memory_space<vmem>>, vector<16x16x4xf32>
    %69 = vector.shape_cast %68 : vector<16x16x4xf32> to vector<256x4xf32>
    %70 = arith.truncf %69 : vector<256x4xf32> to vector<256x4xbf16>
    %c0_86 = arith.constant 0 : index
    %c0_87 = arith.constant 0 : index
    %71 = vector.load %arg8[%c0_86, %c0_87] : memref<4x8xbf16, #tpu.memory_space<vmem>>, vector<4x8xbf16>
    %cst_88 = arith.constant dense<0.000000e+00> : vector<256x8xf32>
    %72 = tpu.matmul %70, %71, %cst_88 {dimension_numbers = #tpu.dot_dimension_numbers<[1], [0], [0], [1], [0, 0, 1, 1], [], []>} : vector<256x4xbf16>, vector<4x8xbf16>, vector<256x8xf32> -> vector<256x8xf32>
    %c0_89 = arith.constant 0 : index
    %c0_90 = arith.constant 0 : index
    %73 = vector.load %arg9[%c0_89, %c0_90] : memref<1x8xf32, #tpu.memory_space<vmem>>, vector<1x8xf32>
    %74 = vector.broadcast %73 : vector<1x8xf32> to vector<256x8xf32>
    %75 = arith.mulf %72, %74 : vector<256x8xf32>
    %c0_91 = arith.constant 0 : index
    %c0_92 = arith.constant 0 : index
    %76 = vector.load %arg10[%c0_91, %c0_92] : memref<1x8xf32, #tpu.memory_space<vmem>>, vector<1x8xf32>
    %77 = vector.broadcast %76 : vector<1x8xf32> to vector<256x8xf32>
    %78 = arith.addf %75, %77 : vector<256x8xf32>
    %79 = arith.addf %67, %78 : vector<256x8xf32>
    %cst_93 = arith.constant 0.000000e+00 : f32
    %80 = vector.broadcast %cst_93 : f32 to vector<256x8xf32>
    %81 = arith.maximumf %79, %80 : vector<256x8xf32>
    %82 = tpu.transpose %81, [1, 0] : vector<256x8xf32> -> vector<8x256xf32>
    %83 = vector.shape_cast %82 : vector<8x256xf32> to vector<1x8x256xf32>
    %c0_94 = arith.constant 0 : index
    %c0_95 = arith.constant 0 : index
    %c0_96 = arith.constant 0 : index
    %84 = vector.load %arg11[%c0_94, %c0_95, %c0_96] : memref<1x8x256xf32, #tpu.memory_space<vmem>>, vector<1x8x256xf32>
    tpu.vector_store %arg11[%c0_94, %c0_95, %c0_96], %83 {strides = array<i32>} : memref<1x8x256xf32, #tpu.memory_space<vmem>>, vector<1x8x256xf32>,
    return
  }
  func.func @transform_0(%arg0: i32) -> (i32, i32, i32, i32) {
    %c0_i32 = arith.constant 0 : i32
    %c0_i32_0 = arith.constant 0 : i32
    %c0_i32_1 = arith.constant 0 : i32
    %c0_i32_2 = arith.constant 0 : i32
    return %arg0, %c0_i32, %c0_i32_0, %c0_i32_1 : i32, i32, i32, i32
  }
  func.func @transform_1(%arg0: i32) -> (i32, i32) {
    %c0_i32 = arith.constant 0 : i32
    %c0_i32_0 = arith.constant 0 : i32
    %c0_i32_1 = arith.constant 0 : i32
    return %c0_i32, %c0_i32_0 : i32, i32
  }
  func.func @transform_2(%arg0: i32) -> (i32, i32) {
    %c0_i32 = arith.constant 0 : i32
    %c0_i32_0 = arith.constant 0 : i32
    %c0_i32_1 = arith.constant 0 : i32
    return %c0_i32, %c0_i32_0 : i32, i32
  }
  func.func @transform_3(%arg0: i32) -> (i32, i32) {
    %c0_i32 = arith.constant 0 : i32
    %c0_i32_0 = arith.constant 0 : i32
    %c0_i32_1 = arith.constant 0 : i32
    return %c0_i32, %c0_i32_0 : i32, i32
  }
  func.func @transform_4(%arg0: i32) -> (i32, i32) {
    %c0_i32 = arith.constant 0 : i32
    %c0_i32_0 = arith.constant 0 : i32
    %c0_i32_1 = arith.constant 0 : i32
    return %c0_i32, %c0_i32_0 : i32, i32
  }
  func.func @transform_5(%arg0: i32) -> (i32, i32) {
    %c0_i32 = arith.constant 0 : i32
    %c0_i32_0 = arith.constant 0 : i32
    %c0_i32_1 = arith.constant 0 : i32
    return %c0_i32, %c0_i32_0 : i32, i32
  }
  func.func @transform_6(%arg0: i32) -> (i32, i32) {
    %c0_i32 = arith.constant 0 : i32
    %c0_i32_0 = arith.constant 0 : i32
    %c0_i32_1 = arith.constant 0 : i32
    return %c0_i32, %c0_i32_0 : i32, i32
  }
  func.func @transform_7(%arg0: i32) -> (i32, i32) {
    %c0_i32 = arith.constant 0 : i32
    %c0_i32_0 = arith.constant 0 : i32
    %c0_i32_1 = arith.constant 0 : i32
    return %c0_i32, %c0_i32_0 : i32, i32
  }
  func.func @transform_8(%arg0: i32) -> (i32, i32) {
    %c0_i32 = arith.constant 0 : i32
    %c0_i32_0 = arith.constant 0 : i32
    %c0_i32_1 = arith.constant 0 : i32
    return %c0_i32, %c0_i32_0 : i32, i32
  }
  func.func @transform_9(%arg0: i32) -> (i32, i32) {
    %c0_i32 = arith.constant 0 : i32
    %c0_i32_0 = arith.constant 0 : i32
    %c0_i32_1 = arith.constant 0 : i32
    return %c0_i32, %c0_i32_0 : i32, i32
  }
  func.func @transform_10(%arg0: i32) -> (i32, i32, i32) {
    %c0_i32 = arith.constant 0 : i32
    %c0_i32_0 = arith.constant 0 : i32
    %c0_i32_1 = arith.constant 0 : i32
    return %arg0, %c0_i32, %c0_i32_0 : i32, i32, i32
  }
}

</mosaic_0001>

<llo_original>
// kernel: tpu_custom_call.1
$region0: #{tpu_custom_call.1}
  #allocation0 [shape = 'u32[]', space=smem, size = 0x4, offset = 0x4, fixed_abs, tag = 'smem constant byte address 0x4 - core index']
  #allocation1 [shape = 'u32[144,128]{1,0:T(1,128)}', space=vmem, size = 0x12000, scoped, tag = 'internal scratch']
  #allocation2 [shape = 'f32[18,18,4]{2,1,0:T(8,128)}', space=vmem, size = 0x36000, scoped, tag = 'scratch operand']
  #allocation3 [shape = 'f32[18,18,8]{2,1,0:T(8,128)}', space=vmem, size = 0x36000, scoped, tag = 'scratch operand']
  %s0 = inlined_call_operand.vmem [shape: bf16[2,16,16,4], index: 0, kind: input, shape index: {}]
  %s1 = inlined_call_operand.vmem [shape: bf16[36,8], index: 1, kind: input, shape index: {}]
  %s2 = inlined_call_operand.vmem [shape: f32[1,8], index: 2, kind: input, shape index: {}]
  %s3 = inlined_call_operand.vmem [shape: f32[1,8], index: 3, kind: input, shape index: {}]
  %s4 = inlined_call_operand.vmem [shape: bf16[72,8], index: 4, kind: input, shape index: {}]
  %s5 = inlined_call_operand.vmem [shape: f32[1,8], index: 5, kind: input, shape index: {}]
  %s6 = inlined_call_operand.vmem [shape: f32[1,8], index: 6, kind: input, shape index: {}]
  %s7 = inlined_call_operand.vmem [shape: bf16[4,8], index: 7, kind: input, shape index: {}]
  %s8 = inlined_call_operand.vmem [shape: f32[1,8], index: 8, kind: input, shape index: {}]
  %s9 = inlined_call_operand.vmem [shape: f32[1,8], index: 9, kind: input, shape index: {}]
  %s10 = inlined_call_operand.hbm [shape: f32[2,8,256], index: 10, kind: output, shape index: {}]
  %s11 = sld [smem:[#allocation0]]
  $region73: #{tpu_custom_call.1} parent=0
    _
  %s13 = ssub.s32 1, %s11
  %s14 = scalar_select 0, %s13, %s11
  $region1: #{tpu_custom_call.1} parent=0
    #allocation4 [shape = 'u8[16384]{0}', space=vmem, size = 0x4000, scoped, tag = 'output window, operand 0']
    #allocation5 [shape = 's32[2]{0}', space=sflag, size = 0x8, scoped, tag = 'scoped memory for tpu_custom_call.1']
    %15 = vsyncpa [#allocation5], 0
    %s16 = scalar_lea.sflag [#allocation5], 1
    %17 = vsyncpa %s16, 0
    loop: start=0, step=1, limit=4
    $region2: #{tpu_custom_call.1} parent=1 // loop_pre_header
      _
    $region3: #{tpu_custom_call.1} parent=1 // loop_header
      %s19 = sphi 0, %s23
      %p20 = scmp.ge.s32.totalorder %s19, 4
      %s29 = sphi 0, %s31
      %s32 = sphi 0, %s29
      %s33 = sphi 0, %s32
      %s49 = sphi 0, %s33
      %s53 = sphi 0, %s53
      %s55 = sphi 0, %s53
      %s56 = sphi 0, %s55
      %s70 = sphi 0, %s56
      %s74 = sphi 0, %s74
      %s76 = sphi 0, %s74
      %s77 = sphi 0, %s76
      %s91 = sphi 0, %s77
      %s95 = sphi 0, %s95
      %s97 = sphi 0, %s95
      %s98 = sphi 0, %s97
      %s112 = sphi 0, %s98
      %s116 = sphi 0, %s116
      %s118 = sphi 0, %s116
      %s119 = sphi 0, %s118
      %s133 = sphi 0, %s119
      %s137 = sphi 0, %s137
      %s139 = sphi 0, %s137
      %s140 = sphi 0, %s139
      %s154 = sphi 0, %s140
      %s158 = sphi 0, %s158
      %s160 = sphi 0, %s158
      %s161 = sphi 0, %s160
      %s175 = sphi 0, %s161
      %s179 = sphi 0, %s179
      %s181 = sphi 0, %s179
      %s182 = sphi 0, %s181
      %s196 = sphi 0, %s182
      %s200 = sphi 0, %s200
      %s202 = sphi 0, %s200
      %s203 = sphi 0, %s202
      %s217 = sphi 0, %s203
      %s221 = sphi 0, %s221
      %s223 = sphi 0, %s221
      %s224 = sphi 0, %s223
      %s238 = sphi 0, %s224
      %s244 = sphi 0, %s246
      %s247 = sphi 0, %s244
      %s248 = sphi 0, %s247
      %s264 = sphi 0, %s248
    $region4: #{tpu_custom_call.1} parent=1 // loop_header_branch
      %22 = sbr.rel (%p20) target = $region8
    $region5: #{tpu_custom_call.1} parent=1 // loop_body
      %s24 = ssub.s32 %s19, 1
      %s25 = ssub.s32 %s19, 2
      %s26 = sadd.s32 %s19, 1
      %s27 = ssub.s32 %s19, %s26
      %p28 = scmp.eq.s32.totalorder %s27, 0
      %s30 = sadd.s32 %s29, 1
      %s31 = scalar_select %p28, %s29, %s30
      %p34 = pneg %p28
      %p35 = scmp.eq.s32.totalorder %s19, 1
      %p36 = por %p34, %p35
      %p37 = scmp.ne.s32.totalorder %s29, %s32
      %p38 = scmp.eq.s32.totalorder %s19, 0
      %p39 = por %p37, %p38
      %p40 = scmp.ne.s32.totalorder %s29, %s32
      %p41 = scmp.eq.s32.totalorder %s24, 1
      %p42 = por %p40, %p41
      %p43 = scmp.ne.s32.totalorder %s32, %s33
      %p44 = scmp.eq.s32.totalorder %s24, 0
      %p45 = por %p43, %p44
      %p46 = scmp.ne.s32.totalorder %s32, %s33
      %p47 = scmp.eq.s32.totalorder %s25, 1
      %p48 = por %p46, %p47
      %p50 = scmp.ne.s32.totalorder %s33, %s49
      %p51 = scmp.eq.s32.totalorder %s25, 0
      %p52 = por %p50, %p51
      %s54 = sadd.s32 %s53, 1
      %p57 = scmp.eq.s32.totalorder %s19, 1
      %p58 = scmp.ne.s32.totalorder %s53, %s55
      %p59 = scmp.eq.s32.totalorder %s19, 0
      %p60 = por %p58, %p59
      %p61 = scmp.ne.s32.totalorder %s53, %s55
      %p62 = scmp.eq.s32.totalorder %s24, 1
      %p63 = por %p61, %p62
      %p64 = scmp.ne.s32.totalorder %s55, %s56
      %p65 = scmp.eq.s32.totalorder %s24, 0
      %p66 = por %p64, %p65
      %p67 = scmp.ne.s32.totalorder %s55, %s56
      %p68 = scmp.eq.s32.totalorder %s25, 1
      %p69 = por %p67, %p68
      %p71 = scmp.ne.s32.totalorder %s56, %s70
      %p72 = scmp.eq.s32.totalorder %s25, 0
      %p73 = por %p71, %p72
      %s75 = sadd.s32 %s74, 1
      %p78 = scmp.eq.s32.totalorder %s19, 1
      %p79 = scmp.ne.s32.totalorder %s74, %s76
      %p80 = scmp.eq.s32.totalorder %s19, 0
      %p81 = por %p79, %p80
      %p82 = scmp.ne.s32.totalorder %s74, %s76
      %p83 = scmp.eq.s32.totalorder %s24, 1
      %p84 = por %p82, %p83
      %p85 = scmp.ne.s32.totalorder %s76, %s77
      %p86 = scmp.eq.s32.totalorder %s24, 0
      %p87 = por %p85, %p86
      %p88 = scmp.ne.s32.totalorder %s76, %s77
      %p89 = scmp.eq.s32.totalorder %s25, 1
      %p90 = por %p88, %p89
      %p92 = scmp.ne.s32.totalorder %s77, %s91
      %p93 = scmp.eq.s32.totalorder %s25, 0
      %p94 = por %p92, %p93
      %s96 = sadd.s32 %s95, 1
      %p99 = scmp.eq.s32.totalorder %s19, 1
      %p100 = scmp.ne.s32.totalorder %s95, %s97
      %p101 = scmp.eq.s32.totalorder %s19, 0
      %p102 = por %p100, %p101
      %p103 = scmp.ne.s32.totalorder %s95, %s97
      %p104 = scmp.eq.s32.totalorder %s24, 1
      %p105 = por %p103, %p104
      %p106 = scmp.ne.s32.totalorder %s97, %s98
      %p107 = scmp.eq.s32.totalorder %s24, 0
      %p108 = por %p106, %p107
      %p109 = scmp.ne.s32.totalorder %s97, %s98
      %p110 = scmp.eq.s32.totalorder %s25, 1
      %p111 = por %p109, %p110
      %p113 = scmp.ne.s32.totalorder %s98, %s112
      %p114 = scmp.eq.s32.totalorder %s25, 0
      %p115 = por %p113, %p114
      %s117 = sadd.s32 %s116, 1
      %p120 = scmp.eq.s32.totalorder %s19, 1
      %p121 = scmp.ne.s32.totalorder %s116, %s118
      %p122 = scmp.eq.s32.totalorder %s19, 0
      %p123 = por %p121, %p122
      %p124 = scmp.ne.s32.totalorder %s116, %s118
      %p125 = scmp.eq.s32.totalorder %s24, 1
      %p126 = por %p124, %p125
      %p127 = scmp.ne.s32.totalorder %s118, %s119
      %p128 = scmp.eq.s32.totalorder %s24, 0
      %p129 = por %p127, %p128
      %p130 = scmp.ne.s32.totalorder %s118, %s119
      %p131 = scmp.eq.s32.totalorder %s25, 1
      %p132 = por %p130, %p131
      %p134 = scmp.ne.s32.totalorder %s119, %s133
      %p135 = scmp.eq.s32.totalorder %s25, 0
      %p136 = por %p134, %p135
      %s138 = sadd.s32 %s137, 1
      %p141 = scmp.eq.s32.totalorder %s19, 1
      %p142 = scmp.ne.s32.totalorder %s137, %s139
      %p143 = scmp.eq.s32.totalorder %s19, 0
      %p144 = por %p142, %p143
      %p145 = scmp.ne.s32.totalorder %s137, %s139
      %p146 = scmp.eq.s32.totalorder %s24, 1
      %p147 = por %p145, %p146
      %p148 = scmp.ne.s32.totalorder %s139, %s140
      %p149 = scmp.eq.s32.totalorder %s24, 0
      %p150 = por %p148, %p149
      %p151 = scmp.ne.s32.totalorder %s139, %s140
      %p152 = scmp.eq.s32.totalorder %s25, 1
      %p153 = por %p151, %p152
      %p155 = scmp.ne.s32.totalorder %s140, %s154
      %p156 = scmp.eq.s32.totalorder %s25, 0
      %p157 = por %p155, %p156
      %s159 = sadd.s32 %s158, 1
      %p162 = scmp.eq.s32.totalorder %s19, 1
      %p163 = scmp.ne.s32.totalorder %s158, %s160
      %p164 = scmp.eq.s32.totalorder %s19, 0
      %p165 = por %p163, %p164
      %p166 = scmp.ne.s32.totalorder %s158, %s160
      %p167 = scmp.eq.s32.totalorder %s24, 1
      %p168 = por %p166, %p167
      %p169 = scmp.ne.s32.totalorder %s160, %s161
      %p170 = scmp.eq.s32.totalorder %s24, 0
      %p171 = por %p169, %p170
      %p172 = scmp.ne.s32.totalorder %s160, %s161
      %p173 = scmp.eq.s32.totalorder %s25, 1
      %p174 = por %p172, %p173
      %p176 = scmp.ne.s32.totalorder %s161, %s175
      %p177 = scmp.eq.s32.totalorder %s25, 0
      %p178 = por %p176, %p177
      %s180 = sadd.s32 %s179, 1
      %p183 = scmp.eq.s32.totalorder %s19, 1
      %p184 = scmp.ne.s32.totalorder %s179, %s181
      %p185 = scmp.eq.s32.totalorder %s19, 0
      %p186 = por %p184, %p185
      %p187 = scmp.ne.s32.totalorder %s179, %s181
      %p188 = scmp.eq.s32.totalorder %s24, 1
      %p189 = por %p187, %p188
      %p190 = scmp.ne.s32.totalorder %s181, %s182
      %p191 = scmp.eq.s32.totalorder %s24, 0
      %p192 = por %p190, %p191
      %p193 = scmp.ne.s32.totalorder %s181, %s182
      %p194 = scmp.eq.s32.totalorder %s25, 1
      %p195 = por %p193, %p194
      %p197 = scmp.ne.s32.totalorder %s182, %s196
      %p198 = scmp.eq.s32.totalorder %s25, 0
      %p199 = por %p197, %p198
      %s201 = sadd.s32 %s200, 1
      %p204 = scmp.eq.s32.totalorder %s19, 1
      %p205 = scmp.ne.s32.totalorder %s200, %s202
      %p206 = scmp.eq.s32.totalorder %s19, 0
      %p207 = por %p205, %p206
      %p208 = scmp.ne.s32.totalorder %s200, %s202
      %p209 = scmp.eq.s32.totalorder %s24, 1
      %p210 = por %p208, %p209
      %p211 = scmp.ne.s32.totalorder %s202, %s203
      %p212 = scmp.eq.s32.totalorder %s24, 0
      %p213 = por %p211, %p212
      %p214 = scmp.ne.s32.totalorder %s202, %s203
      %p215 = scmp.eq.s32.totalorder %s25, 1
      %p216 = por %p214, %p215
      %p218 = scmp.ne.s32.totalorder %s203, %s217
      %p219 = scmp.eq.s32.totalorder %s25, 0
      %p220 = por %p218, %p219
      %s222 = sadd.s32 %s221, 1
      %p225 = scmp.eq.s32.totalorder %s19, 1
      %p226 = scmp.ne.s32.totalorder %s221, %s223
      %p227 = scmp.eq.s32.totalorder %s19, 0
      %p228 = por %p226, %p227
      %p229 = scmp.ne.s32.totalorder %s221, %s223
      %p230 = scmp.eq.s32.totalorder %s24, 1
      %p231 = por %p229, %p230
      %p232 = scmp.ne.s32.totalorder %s223, %s224
      %p233 = scmp.eq.s32.totalorder %s24, 0
      %p234 = por %p232, %p233
      %p235 = scmp.ne.s32.totalorder %s223, %s224
      %p236 = scmp.eq.s32.totalorder %s25, 1
      %p237 = por %p235, %p236
      %p239 = scmp.ne.s32.totalorder %s224, %s238
      %p240 = scmp.eq.s32.totalorder %s25, 0
      %p241 = por %p239, %p240
      %s242 = ssub.s32 %s19, %s26
      %p243 = scmp.eq.s32.totalorder %s242, 0
      %s245 = sadd.s32 %s244, 1
      %s246 = scalar_select %p243, %s244, %s245
      %p249 = pneg %p243
      %p250 = scmp.eq.s32.totalorder %s19, 1
      %p251 = por %p249, %p250
      %p252 = scmp.ne.s32.totalorder %s244, %s247
      %p253 = scmp.eq.s32.totalorder %s19, 0
      %p254 = por %p252, %p253
      %p255 = scmp.ne.s32.totalorder %s244, %s247
      %p256 = scmp.eq.s32.totalorder %s24, 1
      %p257 = por %p255, %p256
      %p258 = scmp.ne.s32.totalorder %s247, %s248
      %p259 = scmp.eq.s32.totalorder %s24, 0
      %p260 = por %p258, %p259
      %p261 = scmp.ne.s32.totalorder %s247, %s248
      %p262 = scmp.eq.s32.totalorder %s25, 1
      %p263 = por %p261, %p262
      %p265 = scmp.ne.s32.totalorder %s248, %s264
      %p266 = scmp.eq.s32.totalorder %s25, 0
      %p267 = por %p265, %p266
      %p268 = scmp.le.s32.totalorder 1, %s19
      %p269 = scmp.lt.s32.totalorder %s19, 3
      %p270 = pnand %p268, %p269
      %p271 = pneg %p270
      // Predicated region
      $region9: #{tpu_custom_call.1} parent=5 // pred_check
        _
      $region10: #{tpu_custom_call.1} parent=5 // pred_check_branch
        %273 = sbr.rel (%p270) target = $region12
      $region11: #{tpu_custom_call.1} parent=5 // pred_region
        %s274 = ssub.s32 %s19, 1
        // Predicated region
        $region13: #{tpu_custom_call.1} parent=11 // pred_check
          %p275 = pneg %p66
        $region14: #{tpu_custom_call.1} parent=11 // pred_check_branch
          %277 = sbr.rel (%p275) target = $region16
        $region15: #{tpu_custom_call.1} parent=11 // pred_region
          _
        $region16: #{tpu_custom_call.1} parent=11 // pred_fallthru
          _
        // Predicated region
        $region17: #{tpu_custom_call.1} parent=11 // pred_check
          %p278 = pneg %p87
        $region18: #{tpu_custom_call.1} parent=11 // pred_check_branch
          %280 = sbr.rel (%p278) target = $region20
        $region19: #{tpu_custom_call.1} parent=11 // pred_region
          _
        $region20: #{tpu_custom_call.1} parent=11 // pred_fallthru
          _
        // Predicated region
        $region21: #{tpu_custom_call.1} parent=11 // pred_check
          %p281 = pneg %p108
        $region22: #{tpu_custom_call.1} parent=11 // pred_check_branch
          %283 = sbr.rel (%p281) target = $region24
        $region23: #{tpu_custom_call.1} parent=11 // pred_region
          _
        $region24: #{tpu_custom_call.1} parent=11 // pred_fallthru
          _
        // Predicated region
        $region25: #{tpu_custom_call.1} parent=11 // pred_check
          %p284 = pneg %p129
        $region26: #{tpu_custom_call.1} parent=11 // pred_check_branch
          %286 = sbr.rel (%p284) target = $region28
        $region27: #{tpu_custom_call.1} parent=11 // pred_region
          _
        $region28: #{tpu_custom_call.1} parent=11 // pred_fallthru
          _
        // Predicated region
        $region29: #{tpu_custom_call.1} parent=11 // pred_check
          %p287 = pneg %p150
        $region30: #{tpu_custom_call.1} parent=11 // pred_check_branch
          %289 = sbr.rel (%p287) target = $region32
        $region31: #{tpu_custom_call.1} parent=11 // pred_region
          _
        $region32: #{tpu_custom_call.1} parent=11 // pred_fallthru
          _
        // Predicated region
        $region33: #{tpu_custom_call.1} parent=11 // pred_check
          %p290 = pneg %p171
        $region34: #{tpu_custom_call.1} parent=11 // pred_check_branch
          %292 = sbr.rel (%p290) target = $region36
        $region35: #{tpu_custom_call.1} parent=11 // pred_region
          _
        $region36: #{tpu_custom_call.1} parent=11 // pred_fallthru
          _
        // Predicated region
        $region37: #{tpu_custom_call.1} parent=11 // pred_check
          %p293 = pneg %p192
        $region38: #{tpu_custom_call.1} parent=11 // pred_check_branch
          %295 = sbr.rel (%p293) target = $region40
        $region39: #{tpu_custom_call.1} parent=11 // pred_region
          _
        $region40: #{tpu_custom_call.1} parent=11 // pred_fallthru
          _
        // Predicated region
        $region41: #{tpu_custom_call.1} parent=11 // pred_check
          %p296 = pneg %p213
        $region42: #{tpu_custom_call.1} parent=11 // pred_check_branch
          %298 = sbr.rel (%p296) target = $region44
        $region43: #{tpu_custom_call.1} parent=11 // pred_region
          _
        $region44: #{tpu_custom_call.1} parent=11 // pred_fallthru
          _
        // Predicated region
        $region45: #{tpu_custom_call.1} parent=11 // pred_check
          %p299 = pneg %p234
        $region46: #{tpu_custom_call.1} parent=11 // pred_check_branch
          %301 = sbr.rel (%p299) target = $region48
        $region47: #{tpu_custom_call.1} parent=11 // pred_region
          _
        $region48: #{tpu_custom_call.1} parent=11 // pred_fallthru
          _
      $region12: #{tpu_custom_call.1} parent=5 // pred_fallthru
        _
      %p302 = scmp.lt.s32.totalorder %s19, 2
      // Predicated region
      $region49: #{tpu_custom_call.1} parent=5 // pred_check
        %p303 = pneg %p302
      $region50: #{tpu_custom_call.1} parent=5 // pred_check_branch
        %305 = sbr.rel (%p303) target = $region52
      $region51: #{tpu_custom_call.1} parent=5 // pred_region
        // Predicated region
        $region53: #{tpu_custom_call.1} parent=51 // pred_check
          %p306 = pneg %p39
        $region54: #{tpu_custom_call.1} parent=51 // pred_check_branch
          %308 = sbr.rel (%p306) target = $region56
        $region55: #{tpu_custom_call.1} parent=51 // pred_region
          %p309 = scmp.lt.s32.totalorder %s19, 1
          %s310 = scalar_select %p309, %s19, 1
          %s311 = smul.addr %s310, 32
          %s312 = smul.addr %s311, 4
          %s313 = scalar_lea.vmem %s0, %s312
        $region56: #{tpu_custom_call.1} parent=51 // pred_fallthru
          _
      $region52: #{tpu_custom_call.1} parent=5 // pred_fallthru
        _
      %p314 = scmp.le.s32.totalorder 1, %s19
      %p315 = scmp.lt.s32.totalorder %s19, 3
      %p316 = pnand %p314, %p315
      %p317 = pneg %p316
      // Predicated region
      $region57: #{tpu_custom_call.1} parent=5 // pred_check
        _
      $region58: #{tpu_custom_call.1} parent=5 // pred_check_branch
        %319 = sbr.rel (%p316) target = $region60
      $region59: #{tpu_custom_call.1} parent=5 // pred_region
        %s320 = ssub.s32 %s19, 1
        %p321 = scmp.lt.s32.totalorder %s24, 1
        %s322 = scalar_select %p321, %s24, 1
        %s323 = smul.addr %s322, 32
        %s324 = smul.addr %s323, 4
        %s325 = scalar_lea.vmem %s0, %s324
        %p326 = pneg %p45
        %p327 = pneg %p42
        %p328 = pneg %p66
        %p329 = pneg %p63
        %p330 = pneg %p87
        %p331 = pneg %p84
        %p332 = pneg %p108
        %p333 = pneg %p105
        %p334 = pneg %p129
        %p335 = pneg %p126
        %p336 = pneg %p150
        %p337 = pneg %p147
        %p338 = pneg %p171
        %p339 = pneg %p168
        %p340 = pneg %p192
        %p341 = pneg %p189
        %p342 = pneg %p213
        %p343 = pneg %p210
        %p344 = pneg %p234
        %p345 = pneg %p231
        %p346 = pneg %p260
        %p347 = pneg %p257
        %s348 = sand.u32 %s247, 1
        %s349 = scalar_lea.sflag [#allocation5], %s348
        %s350 = sand.u32 %s247, 1
        %s351 = smul.addr %s350, 16
        %s352 = scalar_lea.vmem [#allocation4], %s351
        %p353 = scmp.lt.s32.totalorder %s24, 1
        %s354 = scalar_select %p353, %s24, 1
        %s355 = smul.addr %s354, 32
        %s356 = smul.addr %s355, 4
        %s357 = scalar_lea.vmem %s0, %s356
        %vm359 = vcmask 31744
        %360 = vst.msk [vmem:[#allocation2] sm:$0xff] %vm359, 0.0
        %361 = vst.msk [vmem:[#allocation2 + $0x8] sm:$0xff] %vm359, 0.0
        %vm362 = vcmask 25600
        %363 = vst.msk [vmem:[#allocation2 + $0x10] sm:$0x3] %vm362, 0.0
        %364 = vst.msk [vmem:[#allocation2 + $0x18] sm:$0xff] %vm359, 0.0
        %365 = vst.msk [vmem:[#allocation2 + $0x20] sm:$0xff] %vm359, 0.0
        %366 = vst.msk [vmem:[#allocation2 + $0x28] sm:$0x3] %vm362, 0.0
        %367 = vst.msk [vmem:[#allocation2 + $0x30] sm:$0xff] %vm359, 0.0
        %368 = vst.msk [vmem:[#allocation2 + $0x38] sm:$0xff] %vm359, 0.0
        %369 = vst.msk [vmem:[#allocation2 + $0x40] sm:$0x3] %vm362, 0.0
        %370 = vst.msk [vmem:[#allocation2 + $0x48] sm:$0xff] %vm359, 0.0
        %371 = vst.msk [vmem:[#allocation2 + $0x50] sm:$0xff] %vm359, 0.0
        %372 = vst.msk [vmem:[#allocation2 + $0x58] sm:$0x3] %vm362, 0.0
        %373 = vst.msk [vmem:[#allocation2 + $0x60] sm:$0xff] %vm359, 0.0
        %374 = vst.msk [vmem:[#allocation2 + $0x68] sm:$0xff] %vm359, 0.0
        %375 = vst.msk [vmem:[#allocation2 + $0x70] sm:$0x3] %vm362, 0.0
        %376 = vst.msk [vmem:[#allocation2 + $0x78] sm:$0xff] %vm359, 0.0
        %377 = vst.msk [vmem:[#allocation2 + $0x80] sm:$0xff] %vm359, 0.0
        %378 = vst.msk [vmem:[#allocation2 + $0x88] sm:$0x3] %vm362, 0.0
        %379 = vst.msk [vmem:[#allocation2 + $0x90] sm:$0xff] %vm359, 0.0
        %380 = vst.msk [vmem:[#allocation2 + $0x98] sm:$0xff] %vm359, 0.0
        %381 = vst.msk [vmem:[#allocation2 + $0xa0] sm:$0x3] %vm362, 0.0
        %382 = vst.msk [vmem:[#allocation2 + $0xa8] sm:$0xff] %vm359, 0.0
        %383 = vst.msk [vmem:[#allocation2 + $0xb0] sm:$0xff] %vm359, 0.0
        %384 = vst.msk [vmem:[#allocation2 + $0xb8] sm:$0x3] %vm362, 0.0
        %385 = vst.msk [vmem:[#allocation2 + $0xc0] sm:$0xff] %vm359, 0.0
        %386 = vst.msk [vmem:[#allocation2 + $0xc8] sm:$0xff] %vm359, 0.0
        %387 = vst.msk [vmem:[#allocation2 + $0xd0] sm:$0x3] %vm362, 0.0
        %388 = vst.msk [vmem:[#allocation2 + $0xd8] sm:$0xff] %vm359, 0.0
        %389 = vst.msk [vmem:[#allocation2 + $0xe0] sm:$0xff] %vm359, 0.0
        %390 = vst.msk [vmem:[#allocation2 + $0xe8] sm:$0x3] %vm362, 0.0
        %391 = vst.msk [vmem:[#allocation2 + $0xf0] sm:$0xff] %vm359, 0.0
        %392 = vst.msk [vmem:[#allocation2 + $0xf8] sm:$0xff] %vm359, 0.0
        %393 = vst.msk [vmem:[#allocation2 + $0x100] sm:$0x3] %vm362, 0.0
        %394 = vst.msk [vmem:[#allocation2 + $0x108] sm:$0xff] %vm359, 0.0
        %395 = vst.msk [vmem:[#allocation2 + $0x110] sm:$0xff] %vm359, 0.0
        %396 = vst.msk [vmem:[#allocation2 + $0x118] sm:$0x3] %vm362, 0.0
        %397 = vst.msk [vmem:[#allocation2 + $0x120] sm:$0xff] %vm359, 0.0
        %398 = vst.msk [vmem:[#allocation2 + $0x128] sm:$0xff] %vm359, 0.0
        %399 = vst.msk [vmem:[#allocation2 + $0x130] sm:$0x3] %vm362, 0.0
        %400 = vst.msk [vmem:[#allocation2 + $0x138] sm:$0xff] %vm359, 0.0
        %401 = vst.msk [vmem:[#allocation2 + $0x140] sm:$0xff] %vm359, 0.0
        %402 = vst.msk [vmem:[#allocation2 + $0x148] sm:$0x3] %vm362, 0.0
        %403 = vst.msk [vmem:[#allocation2 + $0x150] sm:$0xff] %vm359, 0.0
        %404 = vst.msk [vmem:[#allocation2 + $0x158] sm:$0xff] %vm359, 0.0
        %405 = vst.msk [vmem:[#allocation2 + $0x160] sm:$0x3] %vm362, 0.0
        %406 = vst.msk [vmem:[#allocation2 + $0x168] sm:$0xff] %vm359, 0.0
        %407 = vst.msk [vmem:[#allocation2 + $0x170] sm:$0xff] %vm359, 0.0
        %408 = vst.msk [vmem:[#allocation2 + $0x178] sm:$0x3] %vm362, 0.0
        %409 = vst.msk [vmem:[#allocation2 + $0x180] sm:$0xff] %vm359, 0.0
        %410 = vst.msk [vmem:[#allocation2 + $0x188] sm:$0xff] %vm359, 0.0
        %411 = vst.msk [vmem:[#allocation2 + $0x190] sm:$0x3] %vm362, 0.0
        %412 = vst.msk [vmem:[#allocation2 + $0x198] sm:$0xff] %vm359, 0.0
        %413 = vst.msk [vmem:[#allocation2 + $0x1a0] sm:$0xff] %vm359, 0.0
        %414 = vst.msk [vmem:[#allocation2 + $0x1a8] sm:$0x3] %vm362, 0.0
        %vm415 = vcmask 64512
        %416 = vst.msk [vmem:[#allocation3] sm:$0xff] %vm415, 0.0
        %417 = vst.msk [vmem:[#allocation3 + $0x8] sm:$0xff] %vm415, 0.0
        %vm418 = vcmask 58368
        %419 = vst.msk [vmem:[#allocation3 + $0x10] sm:$0x3] %vm418, 0.0
        %420 = vst.msk [vmem:[#allocation3 + $0x18] sm:$0xff] %vm415, 0.0
        %421 = vst.msk [vmem:[#allocation3 + $0x20] sm:$0xff] %vm415, 0.0
        %422 = vst.msk [vmem:[#allocation3 + $0x28] sm:$0x3] %vm418, 0.0
        %423 = vst.msk [vmem:[#allocation3 + $0x30] sm:$0xff] %vm415, 0.0
        %424 = vst.msk [vmem:[#allocation3 + $0x38] sm:$0xff] %vm415, 0.0
        %425 = vst.msk [vmem:[#allocation3 + $0x40] sm:$0x3] %vm418, 0.0
        %426 = vst.msk [vmem:[#allocation3 + $0x48] sm:$0xff] %vm415, 0.0
        %427 = vst.msk [vmem:[#allocation3 + $0x50] sm:$0xff] %vm415, 0.0
        %428 = vst.msk [vmem:[#allocation3 + $0x58] sm:$0x3] %vm418, 0.0
        %429 = vst.msk [vmem:[#allocation3 + $0x60] sm:$0xff] %vm415, 0.0
        %430 = vst.msk [vmem:[#allocation3 + $0x68] sm:$0xff] %vm415, 0.0
        %431 = vst.msk [vmem:[#allocation3 + $0x70] sm:$0x3] %vm418, 0.0
        %432 = vst.msk [vmem:[#allocation3 + $0x78] sm:$0xff] %vm415, 0.0
        %433 = vst.msk [vmem:[#allocation3 + $0x80] sm:$0xff] %vm415, 0.0
        %434 = vst.msk [vmem:[#allocation3 + $0x88] sm:$0x3] %vm418, 0.0
        %435 = vst.msk [vmem:[#allocation3 + $0x90] sm:$0xff] %vm415, 0.0
        %436 = vst.msk [vmem:[#allocation3 + $0x98] sm:$0xff] %vm415, 0.0
        %437 = vst.msk [vmem:[#allocation3 + $0xa0] sm:$0x3] %vm418, 0.0
        %438 = vst.msk [vmem:[#allocation3 + $0xa8] sm:$0xff] %vm415, 0.0
        %439 = vst.msk [vmem:[#allocation3 + $0xb0] sm:$0xff] %vm415, 0.0
        %440 = vst.msk [vmem:[#allocation3 + $0xb8] sm:$0x3] %vm418, 0.0
        %441 = vst.msk [vmem:[#allocation3 + $0xc0] sm:$0xff] %vm415, 0.0
        %442 = vst.msk [vmem:[#allocation3 + $0xc8] sm:$0xff] %vm415, 0.0
        %443 = vst.msk [vmem:[#allocation3 + $0xd0] sm:$0x3] %vm418, 0.0
        %444 = vst.msk [vmem:[#allocation3 + $0xd8] sm:$0xff] %vm415, 0.0
        %445 = vst.msk [vmem:[#allocation3 + $0xe0] sm:$0xff] %vm415, 0.0
        %446 = vst.msk [vmem:[#allocation3 + $0xe8] sm:$0x3] %vm418, 0.0
        %447 = vst.msk [vmem:[#allocation3 + $0xf0] sm:$0xff] %vm415, 0.0
        %448 = vst.msk [vmem:[#allocation3 + $0xf8] sm:$0xff] %vm415, 0.0
        %449 = vst.msk [vmem:[#allocation3 + $0x100] sm:$0x3] %vm418, 0.0
        %450 = vst.msk [vmem:[#allocation3 + $0x108] sm:$0xff] %vm415, 0.0
        %451 = vst.msk [vmem:[#allocation3 + $0x110] sm:$0xff] %vm415, 0.0
        %452 = vst.msk [vmem:[#allocation3 + $0x118] sm:$0x3] %vm418, 0.0
        %453 = vst.msk [vmem:[#allocation3 + $0x120] sm:$0xff] %vm415, 0.0
        %454 = vst.msk [vmem:[#allocation3 + $0x128] sm:$0xff] %vm415, 0.0
        %455 = vst.msk [vmem:[#allocation3 + $0x130] sm:$0x3] %vm418, 0.0
        %456 = vst.msk [vmem:[#allocation3 + $0x138] sm:$0xff] %vm415, 0.0
        %457 = vst.msk [vmem:[#allocation3 + $0x140] sm:$0xff] %vm415, 0.0
        %458 = vst.msk [vmem:[#allocation3 + $0x148] sm:$0x3] %vm418, 0.0
        %459 = vst.msk [vmem:[#allocation3 + $0x150] sm:$0xff] %vm415, 0.0
        %460 = vst.msk [vmem:[#allocation3 + $0x158] sm:$0xff] %vm415, 0.0
        %461 = vst.msk [vmem:[#allocation3 + $0x160] sm:$0x3] %vm418, 0.0
        %462 = vst.msk [vmem:[#allocation3 + $0x168] sm:$0xff] %vm415, 0.0
        %463 = vst.msk [vmem:[#allocation3 + $0x170] sm:$0xff] %vm415, 0.0
        %464 = vst.msk [vmem:[#allocation3 + $0x178] sm:$0x3] %vm418, 0.0
        %465 = vst.msk [vmem:[#allocation3 + $0x180] sm:$0xff] %vm415, 0.0
        %466 = vst.msk [vmem:[#allocation3 + $0x188] sm:$0xff] %vm415, 0.0
        %467 = vst.msk [vmem:[#allocation3 + $0x190] sm:$0x3] %vm418, 0.0
        %468 = vst.msk [vmem:[#allocation3 + $0x198] sm:$0xff] %vm415, 0.0
        %469 = vst.msk [vmem:[#allocation3 + $0x1a0] sm:$0xff] %vm415, 0.0
        %470 = vst.msk [vmem:[#allocation3 + $0x1a8] sm:$0x3] %vm418, 0.0
        %v471 = vld [vmem:[%s357] sm:$0xf]
        %v472 = vld [vmem:[%s357 + $0x4] sm:$0xf]
        %v473 = vld [vmem:[%s357 + $0x8] sm:$0xf]
        %v474 = vld [vmem:[%s357 + $0xc] sm:$0xf]
        %v475 = vld [vmem:[%s357 + $0x10] sm:$0xf]
        %v476 = vld [vmem:[%s357 + $0x14] sm:$0xf]
        %v477 = vld [vmem:[%s357 + $0x18] sm:$0xf]
        %v478 = vld [vmem:[%s357 + $0x1c] sm:$0xf]
        %v479 = vld [vmem:[%s357 + $0x20] sm:$0xf]
        %v480 = vld [vmem:[%s357 + $0x24] sm:$0xf]
        %v481 = vld [vmem:[%s357 + $0x28] sm:$0xf]
        %v482 = vld [vmem:[%s357 + $0x2c] sm:$0xf]
        %v483 = vld [vmem:[%s357 + $0x30] sm:$0xf]
        %v484 = vld [vmem:[%s357 + $0x34] sm:$0xf]
        %v485 = vld [vmem:[%s357 + $0x38] sm:$0xf]
        %v486 = vld [vmem:[%s357 + $0x3c] sm:$0xf]
        %v487 = vld [vmem:[%s357 + $0x40] sm:$0xf]
        %v488 = vld [vmem:[%s357 + $0x44] sm:$0xf]
        %v489 = vld [vmem:[%s357 + $0x48] sm:$0xf]
        %v490 = vld [vmem:[%s357 + $0x4c] sm:$0xf]
        %v491 = vld [vmem:[%s357 + $0x50] sm:$0xf]
        %v492 = vld [vmem:[%s357 + $0x54] sm:$0xf]
        %v493 = vld [vmem:[%s357 + $0x58] sm:$0xf]
        %v494 = vld [vmem:[%s357 + $0x5c] sm:$0xf]
        %v495 = vld [vmem:[%s357 + $0x60] sm:$0xf]
        %v496 = vld [vmem:[%s357 + $0x64] sm:$0xf]
        %v497 = vld [vmem:[%s357 + $0x68] sm:$0xf]
        %v498 = vld [vmem:[%s357 + $0x6c] sm:$0xf]
        %v499 = vld [vmem:[%s357 + $0x70] sm:$0xf]
        %v500 = vld [vmem:[%s357 + $0x74] sm:$0xf]
        %v501 = vld [vmem:[%s357 + $0x78] sm:$0xf]
        %v502 = vld [vmem:[%s357 + $0x7c] sm:$0xf]
        %v503 = vunpack.c.l.bf16 %v471
        %v504 = vunpack.c.l.bf16 %v472
        %v505 = vunpack.c.l.bf16 %v473
        %v506 = vunpack.c.l.bf16 %v474
        %v507 = vunpack.c.l.bf16 %v475
        %v508 = vunpack.c.l.bf16 %v476
        %v509 = vunpack.c.l.bf16 %v477
        %v510 = vunpack.c.l.bf16 %v478
        %v511 = vunpack.c.l.bf16 %v479
        %v512 = vunpack.c.l.bf16 %v480
        %v513 = vunpack.c.l.bf16 %v481
        %v514 = vunpack.c.l.bf16 %v482
        %v515 = vunpack.c.l.bf16 %v483
        %v516 = vunpack.c.l.bf16 %v484
        %v517 = vunpack.c.l.bf16 %v485
        %v518 = vunpack.c.l.bf16 %v486
        %v519 = vunpack.c.l.bf16 %v487
        %v520 = vunpack.c.l.bf16 %v488
        %v521 = vunpack.c.l.bf16 %v489
        %v522 = vunpack.c.l.bf16 %v490
        %v523 = vunpack.c.l.bf16 %v491
        %v524 = vunpack.c.l.bf16 %v492
        %v525 = vunpack.c.l.bf16 %v493
        %v526 = vunpack.c.l.bf16 %v494
        %v527 = vunpack.c.l.bf16 %v495
        %v528 = vunpack.c.l.bf16 %v496
        %v529 = vunpack.c.l.bf16 %v497
        %v530 = vunpack.c.l.bf16 %v498
        %v531 = vunpack.c.l.bf16 %v499
        %v532 = vunpack.c.l.bf16 %v500
        %v533 = vunpack.c.l.bf16 %v501
        %v534 = vunpack.c.l.bf16 %v502
        %s535 = scalar_lea.vmem [#allocation2], 24
        %536 = vst.msk [vmem:[%s535 + $0x1] sm:$0xff] %vm359, %v503
        %537 = vst.msk [vmem:[%s535 + $0x9] sm:$0xff] %vm359, %v504
        %538 = vst.msk [vmem:[%s535 + $0x19] sm:$0xff] %vm359, %v505
        %539 = vst.msk [vmem:[%s535 + $0x21] sm:$0xff] %vm359, %v506
        %540 = vst.msk [vmem:[%s535 + $0x31] sm:$0xff] %vm359, %v507
        %541 = vst.msk [vmem:[%s535 + $0x39] sm:$0xff] %vm359, %v508
        %542 = vst.msk [vmem:[%s535 + $0x49] sm:$0xff] %vm359, %v509
        %543 = vst.msk [vmem:[%s535 + $0x51] sm:$0xff] %vm359, %v510
        %544 = vst.msk [vmem:[%s535 + $0x61] sm:$0xff] %vm359, %v511
        %545 = vst.msk [vmem:[%s535 + $0x69] sm:$0xff] %vm359, %v512
        %546 = vst.msk [vmem:[%s535 + $0x79] sm:$0xff] %vm359, %v513
        %547 = vst.msk [vmem:[%s535 + $0x81] sm:$0xff] %vm359, %v514
        %548 = vst.msk [vmem:[%s535 + $0x91] sm:$0xff] %vm359, %v515
        %549 = vst.msk [vmem:[%s535 + $0x99] sm:$0xff] %vm359, %v516
        %550 = vst.msk [vmem:[%s535 + $0xa9] sm:$0xff] %vm359, %v517
        %551 = vst.msk [vmem:[%s535 + $0xb1] sm:$0xff] %vm359, %v518
        %552 = vst.msk [vmem:[%s535 + $0xc1] sm:$0xff] %vm359, %v519
        %553 = vst.msk [vmem:[%s535 + $0xc9] sm:$0xff] %vm359, %v520
        %554 = vst.msk [vmem:[%s535 + $0xd9] sm:$0xff] %vm359, %v521
        %555 = vst.msk [vmem:[%s535 + $0xe1] sm:$0xff] %vm359, %v522
        %556 = vst.msk [vmem:[%s535 + $0xf1] sm:$0xff] %vm359, %v523
        %557 = vst.msk [vmem:[%s535 + $0xf9] sm:$0xff] %vm359, %v524
        %558 = vst.msk [vmem:[%s535 + $0x109] sm:$0xff] %vm359, %v525
        %559 = vst.msk [vmem:[%s535 + $0x111] sm:$0xff] %vm359, %v526
        %560 = vst.msk [vmem:[%s535 + $0x121] sm:$0xff] %vm359, %v527
        %561 = vst.msk [vmem:[%s535 + $0x129] sm:$0xff] %vm359, %v528
        %562 = vst.msk [vmem:[%s535 + $0x139] sm:$0xff] %vm359, %v529
        %563 = vst.msk [vmem:[%s535 + $0x141] sm:$0xff] %vm359, %v530
        %564 = vst.msk [vmem:[%s535 + $0x151] sm:$0xff] %vm359, %v531
        %565 = vst.msk [vmem:[%s535 + $0x159] sm:$0xff] %vm359, %v532
        %566 = vst.msk [vmem:[%s535 + $0x169] sm:$0xff] %vm359, %v533
        %567 = vst.msk [vmem:[%s535 + $0x171] sm:$0xff] %vm359, %v534
        %v568 = vld [vmem:[#allocation2] sm:$0xff]
        %v569 = vld [vmem:[#allocation2 + $0x8] sm:$0xff]
        %v570 = vld [vmem:[#allocation2 + $0x18] sm:$0xff]
        %v571 = vld [vmem:[#allocation2 + $0x20] sm:$0xff]
        %v572 = vld [vmem:[#allocation2 + $0x30] sm:$0xff]
        %v573 = vld [vmem:[#allocation2 + $0x38] sm:$0xff]
        %v574 = vld [vmem:[#allocation2 + $0x48] sm:$0xff]
        %v575 = vld [vmem:[#allocation2 + $0x50] sm:$0xff]
        %v576 = vld [vmem:[#allocation2 + $0x60] sm:$0xff]
        %v577 = vld [vmem:[#allocation2 + $0x68] sm:$0xff]
        %v578 = vld [vmem:[#allocation2 + $0x78] sm:$0xff]
        %v579 = vld [vmem:[#allocation2 + $0x80] sm:$0xff]
        %v580 = vld [vmem:[#allocation2 + $0x90] sm:$0xff]
        %v581 = vld [vmem:[#allocation2 + $0x98] sm:$0xff]
        %v582 = vld [vmem:[#allocation2 + $0xa8] sm:$0xff]
        %v583 = vld [vmem:[#allocation2 + $0xb0] sm:$0xff]
        %v584 = vld [vmem:[#allocation2 + $0xc0] sm:$0xff]
        %v585 = vld [vmem:[#allocation2 + $0xc8] sm:$0xff]
        %v586 = vld [vmem:[#allocation2 + $0xd8] sm:$0xff]
        %v587 = vld [vmem:[#allocation2 + $0xe0] sm:$0xff]
        %v588 = vld [vmem:[#allocation2 + $0xf0] sm:$0xff]
        %v589 = vld [vmem:[#allocation2 + $0xf8] sm:$0xff]
        %v590 = vld [vmem:[#allocation2 + $0x108] sm:$0xff]
        %v591 = vld [vmem:[#allocation2 + $0x110] sm:$0xff]
        %v592 = vld [vmem:[#allocation2 + $0x120] sm:$0xff]
        %v593 = vld [vmem:[#allocation2 + $0x128] sm:$0xff]
        %v594 = vld [vmem:[#allocation2 + $0x138] sm:$0xff]
        %v595 = vld [vmem:[#allocation2 + $0x140] sm:$0xff]
        %v596 = vld [vmem:[#allocation2 + $0x150] sm:$0xff]
        %v597 = vld [vmem:[#allocation2 + $0x158] sm:$0xff]
        %v598 = vld [vmem:[#allocation2 + $0x168] sm:$0xff]
        %v599 = vld [vmem:[#allocation2 + $0x170] sm:$0xff]
        %v600 = vld [vmem:[#allocation2 + $0x1] sm:$0xff]
        %v601 = vld [vmem:[#allocation2 + $0x9] sm:$0xff]
        %v602 = vld [vmem:[#allocation2 + $0x19] sm:$0xff]
        %v603 = vld [vmem:[#allocation2 + $0x21] sm:$0xff]
        %v604 = vld [vmem:[#allocation2 + $0x31] sm:$0xff]
        %v605 = vld [vmem:[#allocation2 + $0x39] sm:$0xff]
        %v606 = vld [vmem:[#allocation2 + $0x49] sm:$0xff]
        %v607 = vld [vmem:[#allocation2 + $0x51] sm:$0xff]
        %v608 = vld [vmem:[#allocation2 + $0x61] sm:$0xff]
        %v609 = vld [vmem:[#allocation2 + $0x69] sm:$0xff]
        %v610 = vld [vmem:[#allocation2 + $0x79] sm:$0xff]
        %v611 = vld [vmem:[#allocation2 + $0x81] sm:$0xff]
        %v612 = vld [vmem:[#allocation2 + $0x91] sm:$0xff]
        %v613 = vld [vmem:[#allocation2 + $0x99] sm:$0xff]
        %v614 = vld [vmem:[#allocation2 + $0xa9] sm:$0xff]
        %v615 = vld [vmem:[#allocation2 + $0xb1] sm:$0xff]
        %v616 = vld [vmem:[#allocation2 + $0xc1] sm:$0xff]
        %v617 = vld [vmem:[#allocation2 + $0xc9] sm:$0xff]
        %v618 = vld [vmem:[#allocation2 + $0xd9] sm:$0xff]
        %v619 = vld [vmem:[#allocation2 + $0xe1] sm:$0xff]
        %v620 = vld [vmem:[#allocation2 + $0xf1] sm:$0xff]
        %v621 = vld [vmem:[#allocation2 + $0xf9] sm:$0xff]
        %v622 = vld [vmem:[#allocation2 + $0x109] sm:$0xff]
        %v623 = vld [vmem:[#allocation2 + $0x111] sm:$0xff]
        %v624 = vld [vmem:[#allocation2 + $0x121] sm:$0xff]
        %v625 = vld [vmem:[#allocation2 + $0x129] sm:$0xff]
        %v626 = vld [vmem:[#allocation2 + $0x139] sm:$0xff]
        %v627 = vld [vmem:[#allocation2 + $0x141] sm:$0xff]
        %v628 = vld [vmem:[#allocation2 + $0x151] sm:$0xff]
        %v629 = vld [vmem:[#allocation2 + $0x159] sm:$0xff]
        %v630 = vld [vmem:[#allocation2 + $0x169] sm:$0xff]
        %v631 = vld [vmem:[#allocation2 + $0x171] sm:$0xff]
        %v632 = vld [vmem:[#allocation2 + $0x2] sm:$0xff]
        %v633 = vld [vmem:[#allocation2 + $0xa] sm:$0xff]
        %v634 = vld [vmem:[#allocation2 + $0x1a] sm:$0xff]
        %v635 = vld [vmem:[#allocation2 + $0x22] sm:$0xff]
        %v636 = vld [vmem:[#allocation2 + $0x32] sm:$0xff]
        %v637 = vld [vmem:[#allocation2 + $0x3a] sm:$0xff]
        %v638 = vld [vmem:[#allocation2 + $0x4a] sm:$0xff]
        %v639 = vld [vmem:[#allocation2 + $0x52] sm:$0xff]
        %v640 = vld [vmem:[#allocation2 + $0x62] sm:$0xff]
        %v641 = vld [vmem:[#allocation2 + $0x6a] sm:$0xff]
        %v642 = vld [vmem:[#allocation2 + $0x7a] sm:$0xff]
        %v643 = vld [vmem:[#allocation2 + $0x82] sm:$0xff]
        %v644 = vld [vmem:[#allocation2 + $0x92] sm:$0xff]
        %v645 = vld [vmem:[#allocation2 + $0x9a] sm:$0xff]
        %v646 = vld [vmem:[#allocation2 + $0xaa] sm:$0xff]
        %v647 = vld [vmem:[#allocation2 + $0xb2] sm:$0xff]
        %v648 = vld [vmem:[#allocation2 + $0xc2] sm:$0xff]
        %v649 = vld [vmem:[#allocation2 + $0xca] sm:$0xff]
        %v650 = vld [vmem:[#allocation2 + $0xda] sm:$0xff]
        %v651 = vld [vmem:[#allocation2 + $0xe2] sm:$0xff]
        %v652 = vld [vmem:[#allocation2 + $0xf2] sm:$0xff]
        %v653 = vld [vmem:[#allocation2 + $0xfa] sm:$0xff]
        %v654 = vld [vmem:[#allocation2 + $0x10a] sm:$0xff]
        %v655 = vld [vmem:[#allocation2 + $0x112] sm:$0xff]
        %v656 = vld [vmem:[#allocation2 + $0x122] sm:$0xff]
        %v657 = vld [vmem:[#allocation2 + $0x12a] sm:$0xff]
        %v658 = vld [vmem:[#allocation2 + $0x13a] sm:$0xff]
        %v659 = vld [vmem:[#allocation2 + $0x142] sm:$0xff]
        %v660 = vld [vmem:[#allocation2 + $0x152] sm:$0xff]
        %v661 = vld [vmem:[#allocation2 + $0x15a] sm:$0xff]
        %v662 = vld [vmem:[#allocation2 + $0x16a] sm:$0xff]
        %v663 = vld [vmem:[#allocation2 + $0x172] sm:$0xff]
        %v664 = vld [vmem:[%s535] sm:$0xff]
        %v665 = vld [vmem:[%s535 + $0x8] sm:$0xff]
        %v666 = vld [vmem:[%s535 + $0x18] sm:$0xff]
        %v667 = vld [vmem:[%s535 + $0x20] sm:$0xff]
        %v668 = vld [vmem:[%s535 + $0x30] sm:$0xff]
        %v669 = vld [vmem:[%s535 + $0x38] sm:$0xff]
        %v670 = vld [vmem:[%s535 + $0x48] sm:$0xff]
        %v671 = vld [vmem:[%s535 + $0x50] sm:$0xff]
        %v672 = vld [vmem:[%s535 + $0x60] sm:$0xff]
        %v673 = vld [vmem:[%s535 + $0x68] sm:$0xff]
        %v674 = vld [vmem:[%s535 + $0x78] sm:$0xff]
        %v675 = vld [vmem:[%s535 + $0x80] sm:$0xff]
        %v676 = vld [vmem:[%s535 + $0x90] sm:$0xff]
        %v677 = vld [vmem:[%s535 + $0x98] sm:$0xff]
        %v678 = vld [vmem:[%s535 + $0xa8] sm:$0xff]
        %v679 = vld [vmem:[%s535 + $0xb0] sm:$0xff]
        %v680 = vld [vmem:[%s535 + $0xc0] sm:$0xff]
        %v681 = vld [vmem:[%s535 + $0xc8] sm:$0xff]
        %v682 = vld [vmem:[%s535 + $0xd8] sm:$0xff]
        %v683 = vld [vmem:[%s535 + $0xe0] sm:$0xff]
        %v684 = vld [vmem:[%s535 + $0xf0] sm:$0xff]
        %v685 = vld [vmem:[%s535 + $0xf8] sm:$0xff]
        %v686 = vld [vmem:[%s535 + $0x108] sm:$0xff]
        %v687 = vld [vmem:[%s535 + $0x110] sm:$0xff]
        %v688 = vld [vmem:[%s535 + $0x120] sm:$0xff]
        %v689 = vld [vmem:[%s535 + $0x128] sm:$0xff]
        %v690 = vld [vmem:[%s535 + $0x138] sm:$0xff]
        %v691 = vld [vmem:[%s535 + $0x140] sm:$0xff]
        %v692 = vld [vmem:[%s535 + $0x150] sm:$0xff]
        %v693 = vld [vmem:[%s535 + $0x158] sm:$0xff]
        %v694 = vld [vmem:[%s535 + $0x168] sm:$0xff]
        %v695 = vld [vmem:[%s535 + $0x170] sm:$0xff]
        %v696 = vld [vmem:[%s535 + $0x1] sm:$0xff]
        %v697 = vld [vmem:[%s535 + $0x9] sm:$0xff]
        %v698 = vld [vmem:[%s535 + $0x19] sm:$0xff]
        %v699 = vld [vmem:[%s535 + $0x21] sm:$0xff]
        %v700 = vld [vmem:[%s535 + $0x31] sm:$0xff]
        %v701 = vld [vmem:[%s535 + $0x39] sm:$0xff]
        %v702 = vld [vmem:[%s535 + $0x49] sm:$0xff]
        %v703 = vld [vmem:[%s535 + $0x51] sm:$0xff]
        %v704 = vld [vmem:[%s535 + $0x61] sm:$0xff]
        %v705 = vld [vmem:[%s535 + $0x69] sm:$0xff]
        %v706 = vld [vmem:[%s535 + $0x79] sm:$0xff]
        %v707 = vld [vmem:[%s535 + $0x81] sm:$0xff]
        %v708 = vld [vmem:[%s535 + $0x91] sm:$0xff]
        %v709 = vld [vmem:[%s535 + $0x99] sm:$0xff]
        %v710 = vld [vmem:[%s535 + $0xa9] sm:$0xff]
        %v711 = vld [vmem:[%s535 + $0xb1] sm:$0xff]
        %v712 = vld [vmem:[%s535 + $0xc1] sm:$0xff]
        %v713 = vld [vmem:[%s535 + $0xc9] sm:$0xff]
        %v714 = vld [vmem:[%s535 + $0xd9] sm:$0xff]
        %v715 = vld [vmem:[%s535 + $0xe1] sm:$0xff]
        %v716 = vld [vmem:[%s535 + $0xf1] sm:$0xff]
        %v717 = vld [vmem:[%s535 + $0xf9] sm:$0xff]
        %v718 = vld [vmem:[%s535 + $0x109] sm:$0xff]
        %v719 = vld [vmem:[%s535 + $0x111] sm:$0xff]
        %v720 = vld [vmem:[%s535 + $0x121] sm:$0xff]
        %v721 = vld [vmem:[%s535 + $0x129] sm:$0xff]
        %v722 = vld [vmem:[%s535 + $0x139] sm:$0xff]
        %v723 = vld [vmem:[%s535 + $0x141] sm:$0xff]
        %v724 = vld [vmem:[%s535 + $0x151] sm:$0xff]
        %v725 = vld [vmem:[%s535 + $0x159] sm:$0xff]
        %v726 = vld [vmem:[%s535 + $0x169] sm:$0xff]
        %v727 = vld [vmem:[%s535 + $0x171] sm:$0xff]
        %v728 = vld [vmem:[%s535 + $0x2] sm:$0xff]
        %v729 = vld [vmem:[%s535 + $0xa] sm:$0xff]
        %v730 = vld [vmem:[%s535 + $0x1a] sm:$0xff]
        %v731 = vld [vmem:[%s535 + $0x22] sm:$0xff]
        %v732 = vld [vmem:[%s535 + $0x32] sm:$0xff]
        %v733 = vld [vmem:[%s535 + $0x3a] sm:$0xff]
        %v734 = vld [vmem:[%s535 + $0x4a] sm:$0xff]
        %v735 = vld [vmem:[%s535 + $0x52] sm:$0xff]
        %v736 = vld [vmem:[%s535 + $0x62] sm:$0xff]
        %v737 = vld [vmem:[%s535 + $0x6a] sm:$0xff]
        %v738 = vld [vmem:[%s535 + $0x7a] sm:$0xff]
        %v739 = vld [vmem:[%s535 + $0x82] sm:$0xff]
        %v740 = vld [vmem:[%s535 + $0x92] sm:$0xff]
        %v741 = vld [vmem:[%s535 + $0x9a] sm:$0xff]
        %v742 = vld [vmem:[%s535 + $0xaa] sm:$0xff]
        %v743 = vld [vmem:[%s535 + $0xb2] sm:$0xff]
        %v744 = vld [vmem:[%s535 + $0xc2] sm:$0xff]
        %v745 = vld [vmem:[%s535 + $0xca] sm:$0xff]
        %v746 = vld [vmem:[%s535 + $0xda] sm:$0xff]
        %v747 = vld [vmem:[%s535 + $0xe2] sm:$0xff]
        %v748 = vld [vmem:[%s535 + $0xf2] sm:$0xff]
        %v749 = vld [vmem:[%s535 + $0xfa] sm:$0xff]
        %v750 = vld [vmem:[%s535 + $0x10a] sm:$0xff]
        %v751 = vld [vmem:[%s535 + $0x112] sm:$0xff]
        %v752 = vld [vmem:[%s535 + $0x122] sm:$0xff]
        %v753 = vld [vmem:[%s535 + $0x12a] sm:$0xff]
        %v754 = vld [vmem:[%s535 + $0x13a] sm:$0xff]
        %v755 = vld [vmem:[%s535 + $0x142] sm:$0xff]
        %v756 = vld [vmem:[%s535 + $0x152] sm:$0xff]
        %v757 = vld [vmem:[%s535 + $0x15a] sm:$0xff]
        %v758 = vld [vmem:[%s535 + $0x16a] sm:$0xff]
        %v759 = vld [vmem:[%s535 + $0x172] sm:$0xff]
        %s760 = scalar_lea.vmem [#allocation2], 48
        %v761 = vld [vmem:[%s760] sm:$0xff]
        %v762 = vld [vmem:[%s760 + $0x8] sm:$0xff]
        %v763 = vld [vmem:[%s760 + $0x18] sm:$0xff]
        %v764 = vld [vmem:[%s760 + $0x20] sm:$0xff]
        %v765 = vld [vmem:[%s760 + $0x30] sm:$0xff]
        %v766 = vld [vmem:[%s760 + $0x38] sm:$0xff]
        %v767 = vld [vmem:[%s760 + $0x48] sm:$0xff]
        %v768 = vld [vmem:[%s760 + $0x50] sm:$0xff]
        %v769 = vld [vmem:[%s760 + $0x60] sm:$0xff]
        %v770 = vld [vmem:[%s760 + $0x68] sm:$0xff]
        %v771 = vld [vmem:[%s760 + $0x78] sm:$0xff]
        %v772 = vld [vmem:[%s760 + $0x80] sm:$0xff]
        %v773 = vld [vmem:[%s760 + $0x90] sm:$0xff]
        %v774 = vld [vmem:[%s760 + $0x98] sm:$0xff]
        %v775 = vld [vmem:[%s760 + $0xa8] sm:$0xff]
        %v776 = vld [vmem:[%s760 + $0xb0] sm:$0xff]
        %v777 = vld [vmem:[%s760 + $0xc0] sm:$0xff]
        %v778 = vld [vmem:[%s760 + $0xc8] sm:$0xff]
        %v779 = vld [vmem:[%s760 + $0xd8] sm:$0xff]
        %v780 = vld [vmem:[%s760 + $0xe0] sm:$0xff]
        %v781 = vld [vmem:[%s760 + $0xf0] sm:$0xff]
        %v782 = vld [vmem:[%s760 + $0xf8] sm:$0xff]
        %v783 = vld [vmem:[%s760 + $0x108] sm:$0xff]
        %v784 = vld [vmem:[%s760 + $0x110] sm:$0xff]
        %v785 = vld [vmem:[%s760 + $0x120] sm:$0xff]
        %v786 = vld [vmem:[%s760 + $0x128] sm:$0xff]
        %v787 = vld [vmem:[%s760 + $0x138] sm:$0xff]
        %v788 = vld [vmem:[%s760 + $0x140] sm:$0xff]
        %v789 = vld [vmem:[%s760 + $0x150] sm:$0xff]
        %v790 = vld [vmem:[%s760 + $0x158] sm:$0xff]
        %v791 = vld [vmem:[%s760 + $0x168] sm:$0xff]
        %v792 = vld [vmem:[%s760 + $0x170] sm:$0xff]
        %v793 = vld [vmem:[%s760 + $0x1] sm:$0xff]
        %v794 = vld [vmem:[%s760 + $0x9] sm:$0xff]
        %v795 = vld [vmem:[%s760 + $0x19] sm:$0xff]
        %v796 = vld [vmem:[%s760 + $0x21] sm:$0xff]
        %v797 = vld [vmem:[%s760 + $0x31] sm:$0xff]
        %v798 = vld [vmem:[%s760 + $0x39] sm:$0xff]
        %v799 = vld [vmem:[%s760 + $0x49] sm:$0xff]
        %v800 = vld [vmem:[%s760 + $0x51] sm:$0xff]
        %v801 = vld [vmem:[%s760 + $0x61] sm:$0xff]
        %v802 = vld [vmem:[%s760 + $0x69] sm:$0xff]
        %v803 = vld [vmem:[%s760 + $0x79] sm:$0xff]
        %v804 = vld [vmem:[%s760 + $0x81] sm:$0xff]
        %v805 = vld [vmem:[%s760 + $0x91] sm:$0xff]
        %v806 = vld [vmem:[%s760 + $0x99] sm:$0xff]
        %v807 = vld [vmem:[%s760 + $0xa9] sm:$0xff]
        %v808 = vld [vmem:[%s760 + $0xb1] sm:$0xff]
        %v809 = vld [vmem:[%s760 + $0xc1] sm:$0xff]
        %v810 = vld [vmem:[%s760 + $0xc9] sm:$0xff]
        %v811 = vld [vmem:[%s760 + $0xd9] sm:$0xff]
        %v812 = vld [vmem:[%s760 + $0xe1] sm:$0xff]
        %v813 = vld [vmem:[%s760 + $0xf1] sm:$0xff]
        %v814 = vld [vmem:[%s760 + $0xf9] sm:$0xff]
        %v815 = vld [vmem:[%s760 + $0x109] sm:$0xff]
        %v816 = vld [vmem:[%s760 + $0x111] sm:$0xff]
        %v817 = vld [vmem:[%s760 + $0x121] sm:$0xff]
        %v818 = vld [vmem:[%s760 + $0x129] sm:$0xff]
        %v819 = vld [vmem:[%s760 + $0x139] sm:$0xff]
        %v820 = vld [vmem:[%s760 + $0x141] sm:$0xff]
        %v821 = vld [vmem:[%s760 + $0x151] sm:$0xff]
        %v822 = vld [vmem:[%s760 + $0x159] sm:$0xff]
        %v823 = vld [vmem:[%s760 + $0x169] sm:$0xff]
        %v824 = vld [vmem:[%s760 + $0x171] sm:$0xff]
        %v825 = vld [vmem:[%s760 + $0x2] sm:$0xff]
        %v826 = vld [vmem:[%s760 + $0xa] sm:$0xff]
        %v827 = vld [vmem:[%s760 + $0x1a] sm:$0xff]
        %v828 = vld [vmem:[%s760 + $0x22] sm:$0xff]
        %v829 = vld [vmem:[%s760 + $0x32] sm:$0xff]
        %v830 = vld [vmem:[%s760 + $0x3a] sm:$0xff]
        %v831 = vld [vmem:[%s760 + $0x4a] sm:$0xff]
        %v832 = vld [vmem:[%s760 + $0x52] sm:$0xff]
        %v833 = vld [vmem:[%s760 + $0x62] sm:$0xff]
        %v834 = vld [vmem:[%s760 + $0x6a] sm:$0xff]
        %v835 = vld [vmem:[%s760 + $0x7a] sm:$0xff]
        %v836 = vld [vmem:[%s760 + $0x82] sm:$0xff]
        %v837 = vld [vmem:[%s760 + $0x92] sm:$0xff]
        %v838 = vld [vmem:[%s760 + $0x9a] sm:$0xff]
        %v839 = vld [vmem:[%s760 + $0xaa] sm:$0xff]
        %v840 = vld [vmem:[%s760 + $0xb2] sm:$0xff]
        %v841 = vld [vmem:[%s760 + $0xc2] sm:$0xff]
        %v842 = vld [vmem:[%s760 + $0xca] sm:$0xff]
        %v843 = vld [vmem:[%s760 + $0xda] sm:$0xff]
        %v844 = vld [vmem:[%s760 + $0xe2] sm:$0xff]
        %v845 = vld [vmem:[%s760 + $0xf2] sm:$0xff]
        %v846 = vld [vmem:[%s760 + $0xfa] sm:$0xff]
        %v847 = vld [vmem:[%s760 + $0x10a] sm:$0xff]
        %v848 = vld [vmem:[%s760 + $0x112] sm:$0xff]
        %v849 = vld [vmem:[%s760 + $0x122] sm:$0xff]
        %v850 = vld [vmem:[%s760 + $0x12a] sm:$0xff]
        %v851 = vld [vmem:[%s760 + $0x13a] sm:$0xff]
        %v852 = vld [vmem:[%s760 + $0x142] sm:$0xff]
        %v853 = vld [vmem:[%s760 + $0x152] sm:$0xff]
        %v854 = vld [vmem:[%s760 + $0x15a] sm:$0xff]
        %v855 = vld [vmem:[%s760 + $0x16a] sm:$0xff]
        %v856 = vld [vmem:[%s760 + $0x172] sm:$0xff]
        %889 = vrot.lane.b32.xlu0 %v600, 4
        %v890 = vpop.permute.xlu0 %889
        %891 = vrot.lane.b32.xlu0 %v601, 4
        %v892 = vpop.permute.xlu0 %891
        %893 = vrot.lane.b32.xlu0 %v602, 4
        %v894 = vpop.permute.xlu0 %893
        %895 = vrot.lane.b32.xlu0 %v603, 4
        %v896 = vpop.permute.xlu0 %895
        %897 = vrot.lane.b32.xlu0 %v604, 4
        %v898 = vpop.permute.xlu0 %897
        %899 = vrot.lane.b32.xlu0 %v605, 4
        %v900 = vpop.permute.xlu0 %899
        %901 = vrot.lane.b32.xlu0 %v606, 4
        %v902 = vpop.permute.xlu0 %901
        %903 = vrot.lane.b32.xlu0 %v607, 4
        %v904 = vpop.permute.xlu0 %903
        %905 = vrot.lane.b32.xlu0 %v608, 4
        %v906 = vpop.permute.xlu0 %905
        %907 = vrot.lane.b32.xlu0 %v609, 4
        %v908 = vpop.permute.xlu0 %907
        %909 = vrot.lane.b32.xlu0 %v610, 4
        %v910 = vpop.permute.xlu0 %909
        %911 = vrot.lane.b32.xlu0 %v611, 4
        %v912 = vpop.permute.xlu0 %911
        %913 = vrot.lane.b32.xlu0 %v612, 4
        %v914 = vpop.permute.xlu0 %913
        %915 = vrot.lane.b32.xlu0 %v613, 4
        %v916 = vpop.permute.xlu0 %915
        %917 = vrot.lane.b32.xlu0 %v614, 4
        %v918 = vpop.permute.xlu0 %917
        %919 = vrot.lane.b32.xlu0 %v615, 4
        %v920 = vpop.permute.xlu0 %919
        %921 = vrot.lane.b32.xlu0 %v616, 4
        %v922 = vpop.permute.xlu0 %921
        %923 = vrot.lane.b32.xlu0 %v617, 4
        %v924 = vpop.permute.xlu0 %923
        %925 = vrot.lane.b32.xlu0 %v618, 4
        %v926 = vpop.permute.xlu0 %925
        %927 = vrot.lane.b32.xlu0 %v619, 4
        %v928 = vpop.permute.xlu0 %927
        %929 = vrot.lane.b32.xlu0 %v620, 4
        %v930 = vpop.permute.xlu0 %929
        %931 = vrot.lane.b32.xlu0 %v621, 4
        %v932 = vpop.permute.xlu0 %931
        %933 = vrot.lane.b32.xlu0 %v622, 4
        %v934 = vpop.permute.xlu0 %933
        %935 = vrot.lane.b32.xlu0 %v623, 4
        %v936 = vpop.permute.xlu0 %935
        %937 = vrot.lane.b32.xlu0 %v624, 4
        %v938 = vpop.permute.xlu0 %937
        %939 = vrot.lane.b32.xlu0 %v625, 4
        %v940 = vpop.permute.xlu0 %939
        %941 = vrot.lane.b32.xlu0 %v626, 4
        %v942 = vpop.permute.xlu0 %941
        %943 = vrot.lane.b32.xlu0 %v627, 4
        %v944 = vpop.permute.xlu0 %943
        %945 = vrot.lane.b32.xlu0 %v628, 4
        %v946 = vpop.permute.xlu0 %945
        %947 = vrot.lane.b32.xlu0 %v629, 4
        %v948 = vpop.permute.xlu0 %947
        %949 = vrot.lane.b32.xlu0 %v630, 4
        %v950 = vpop.permute.xlu0 %949
        %951 = vrot.lane.b32.xlu0 %v631, 4
        %v952 = vpop.permute.xlu0 %951
        %1017 = vrot.lane.b32.xlu0 %v632, 8
        %v1018 = vpop.permute.xlu0 %1017
        %1019 = vrot.lane.b32.xlu0 %v633, 8
        %v1020 = vpop.permute.xlu0 %1019
        %1021 = vrot.lane.b32.xlu0 %v634, 8
        %v1022 = vpop.permute.xlu0 %1021
        %1023 = vrot.lane.b32.xlu0 %v635, 8
        %v1024 = vpop.permute.xlu0 %1023
        %1025 = vrot.lane.b32.xlu0 %v636, 8
        %v1026 = vpop.permute.xlu0 %1025
        %1027 = vrot.lane.b32.xlu0 %v637, 8
        %v1028 = vpop.permute.xlu0 %1027
        %1029 = vrot.lane.b32.xlu0 %v638, 8
        %v1030 = vpop.permute.xlu0 %1029
        %1031 = vrot.lane.b32.xlu0 %v639, 8
        %v1032 = vpop.permute.xlu0 %1031
        %1033 = vrot.lane.b32.xlu0 %v640, 8
        %v1034 = vpop.permute.xlu0 %1033
        %1035 = vrot.lane.b32.xlu0 %v641, 8
        %v1036 = vpop.permute.xlu0 %1035
        %1037 = vrot.lane.b32.xlu0 %v642, 8
        %v1038 = vpop.permute.xlu0 %1037
        %1039 = vrot.lane.b32.xlu0 %v643, 8
        %v1040 = vpop.permute.xlu0 %1039
        %1041 = vrot.lane.b32.xlu0 %v644, 8
        %v1042 = vpop.permute.xlu0 %1041
        %1043 = vrot.lane.b32.xlu0 %v645, 8
        %v1044 = vpop.permute.xlu0 %1043
        %1045 = vrot.lane.b32.xlu0 %v646, 8
        %v1046 = vpop.permute.xlu0 %1045
        %1047 = vrot.lane.b32.xlu0 %v647, 8
        %v1048 = vpop.permute.xlu0 %1047
        %1049 = vrot.lane.b32.xlu0 %v648, 8
        %v1050 = vpop.permute.xlu0 %1049
        %1051 = vrot.lane.b32.xlu0 %v649, 8
        %v1052 = vpop.permute.xlu0 %1051
        %1053 = vrot.lane.b32.xlu0 %v650, 8
        %v1054 = vpop.permute.xlu0 %1053
        %1055 = vrot.lane.b32.xlu0 %v651, 8
        %v1056 = vpop.permute.xlu0 %1055
        %1057 = vrot.lane.b32.xlu0 %v652, 8
        %v1058 = vpop.permute.xlu0 %1057
        %1059 = vrot.lane.b32.xlu0 %v653, 8
        %v1060 = vpop.permute.xlu0 %1059
        %1061 = vrot.lane.b32.xlu0 %v654, 8
        %v1062 = vpop.permute.xlu0 %1061
        %1063 = vrot.lane.b32.xlu0 %v655, 8
        %v1064 = vpop.permute.xlu0 %1063
        %1065 = vrot.lane.b32.xlu0 %v656, 8
        %v1066 = vpop.permute.xlu0 %1065
        %1067 = vrot.lane.b32.xlu0 %v657, 8
        %v1068 = vpop.permute.xlu0 %1067
        %1069 = vrot.lane.b32.xlu0 %v658, 8
        %v1070 = vpop.permute.xlu0 %1069
        %1071 = vrot.lane.b32.xlu0 %v659, 8
        %v1072 = vpop.permute.xlu0 %1071
        %1073 = vrot.lane.b32.xlu0 %v660, 8
        %v1074 = vpop.permute.xlu0 %1073
        %1075 = vrot.lane.b32.xlu0 %v661, 8
        %v1076 = vpop.permute.xlu0 %1075
        %1077 = vrot.lane.b32.xlu0 %v662, 8
        %v1078 = vpop.permute.xlu0 %1077
        %1079 = vrot.lane.b32.xlu0 %v663, 8
        %v1080 = vpop.permute.xlu0 %1079
        %1145 = vrot.lane.b32.xlu0 %v664, 12
        %v1146 = vpop.permute.xlu0 %1145
        %1147 = vrot.lane.b32.xlu0 %v665, 12
        %v1148 = vpop.permute.xlu0 %1147
        %1149 = vrot.lane.b32.xlu0 %v666, 12
        %v1150 = vpop.permute.xlu0 %1149
        %1151 = vrot.lane.b32.xlu0 %v667, 12
        %v1152 = vpop.permute.xlu0 %1151
        %1153 = vrot.lane.b32.xlu0 %v668, 12
        %v1154 = vpop.permute.xlu0 %1153
        %1155 = vrot.lane.b32.xlu0 %v669, 12
        %v1156 = vpop.permute.xlu0 %1155
        %1157 = vrot.lane.b32.xlu0 %v670, 12
        %v1158 = vpop.permute.xlu0 %1157
        %1159 = vrot.lane.b32.xlu0 %v671, 12
        %v1160 = vpop.permute.xlu0 %1159
        %1161 = vrot.lane.b32.xlu0 %v672, 12
        %v1162 = vpop.permute.xlu0 %1161
        %1163 = vrot.lane.b32.xlu0 %v673, 12
        %v1164 = vpop.permute.xlu0 %1163
        %1165 = vrot.lane.b32.xlu0 %v674, 12
        %v1166 = vpop.permute.xlu0 %1165
        %1167 = vrot.lane.b32.xlu0 %v675, 12
        %v1168 = vpop.permute.xlu0 %1167
        %1169 = vrot.lane.b32.xlu0 %v676, 12
        %v1170 = vpop.permute.xlu0 %1169
        %1171 = vrot.lane.b32.xlu0 %v677, 12
        %v1172 = vpop.permute.xlu0 %1171
        %1173 = vrot.lane.b32.xlu0 %v678, 12
        %v1174 = vpop.permute.xlu0 %1173
        %1175 = vrot.lane.b32.xlu0 %v679, 12
        %v1176 = vpop.permute.xlu0 %1175
        %1177 = vrot.lane.b32.xlu0 %v680, 12
        %v1178 = vpop.permute.xlu0 %1177
        %1179 = vrot.lane.b32.xlu0 %v681, 12
        %v1180 = vpop.permute.xlu0 %1179
        %1181 = vrot.lane.b32.xlu0 %v682, 12
        %v1182 = vpop.permute.xlu0 %1181
        %1183 = vrot.lane.b32.xlu0 %v683, 12
        %v1184 = vpop.permute.xlu0 %1183
        %1185 = vrot.lane.b32.xlu0 %v684, 12
        %v1186 = vpop.permute.xlu0 %1185
        %1187 = vrot.lane.b32.xlu0 %v685, 12
        %v1188 = vpop.permute.xlu0 %1187
        %1189 = vrot.lane.b32.xlu0 %v686, 12
        %v1190 = vpop.permute.xlu0 %1189
        %1191 = vrot.lane.b32.xlu0 %v687, 12
        %v1192 = vpop.permute.xlu0 %1191
        %1193 = vrot.lane.b32.xlu0 %v688, 12
        %v1194 = vpop.permute.xlu0 %1193
        %1195 = vrot.lane.b32.xlu0 %v689, 12
        %v1196 = vpop.permute.xlu0 %1195
        %1197 = vrot.lane.b32.xlu0 %v690, 12
        %v1198 = vpop.permute.xlu0 %1197
        %1199 = vrot.lane.b32.xlu0 %v691, 12
        %v1200 = vpop.permute.xlu0 %1199
        %1201 = vrot.lane.b32.xlu0 %v692, 12
        %v1202 = vpop.permute.xlu0 %1201
        %1203 = vrot.lane.b32.xlu0 %v693, 12
        %v1204 = vpop.permute.xlu0 %1203
        %1205 = vrot.lane.b32.xlu0 %v694, 12
        %v1206 = vpop.permute.xlu0 %1205
        %1207 = vrot.lane.b32.xlu0 %v695, 12
        %v1208 = vpop.permute.xlu0 %1207
        %1273 = vrot.lane.b32.xlu0 %v696, 16
        %v1274 = vpop.permute.xlu0 %1273
        %1275 = vrot.lane.b32.xlu0 %v697, 16
        %v1276 = vpop.permute.xlu0 %1275
        %1277 = vrot.lane.b32.xlu0 %v698, 16
        %v1278 = vpop.permute.xlu0 %1277
        %1279 = vrot.lane.b32.xlu0 %v699, 16
        %v1280 = vpop.permute.xlu0 %1279
        %1281 = vrot.lane.b32.xlu0 %v700, 16
        %v1282 = vpop.permute.xlu0 %1281
        %1283 = vrot.lane.b32.xlu0 %v701, 16
        %v1284 = vpop.permute.xlu0 %1283
        %1285 = vrot.lane.b32.xlu0 %v702, 16
        %v1286 = vpop.permute.xlu0 %1285
        %1287 = vrot.lane.b32.xlu0 %v703, 16
        %v1288 = vpop.permute.xlu0 %1287
        %1289 = vrot.lane.b32.xlu0 %v704, 16
        %v1290 = vpop.permute.xlu0 %1289
        %1291 = vrot.lane.b32.xlu0 %v705, 16
        %v1292 = vpop.permute.xlu0 %1291
        %1293 = vrot.lane.b32.xlu0 %v706, 16
        %v1294 = vpop.permute.xlu0 %1293
        %1295 = vrot.lane.b32.xlu0 %v707, 16
        %v1296 = vpop.permute.xlu0 %1295
        %1297 = vrot.lane.b32.xlu0 %v708, 16
        %v1298 = vpop.permute.xlu0 %1297
        %1299 = vrot.lane.b32.xlu0 %v709, 16
        %v1300 = vpop.permute.xlu0 %1299
        %1301 = vrot.lane.b32.xlu0 %v710, 16
        %v1302 = vpop.permute.xlu0 %1301
        %1303 = vrot.lane.b32.xlu0 %v711, 16
        %v1304 = vpop.permute.xlu0 %1303
        %1305 = vrot.lane.b32.xlu0 %v712, 16
        %v1306 = vpop.permute.xlu0 %1305
        %1307 = vrot.lane.b32.xlu0 %v713, 16
        %v1308 = vpop.permute.xlu0 %1307
        %1309 = vrot.lane.b32.xlu0 %v714, 16
        %v1310 = vpop.permute.xlu0 %1309
        %1311 = vrot.lane.b32.xlu0 %v715, 16
        %v1312 = vpop.permute.xlu0 %1311
        %1313 = vrot.lane.b32.xlu0 %v716, 16
        %v1314 = vpop.permute.xlu0 %1313
        %1315 = vrot.lane.b32.xlu0 %v717, 16
        %v1316 = vpop.permute.xlu0 %1315
        %1317 = vrot.lane.b32.xlu0 %v718, 16
        %v1318 = vpop.permute.xlu0 %1317
        %1319 = vrot.lane.b32.xlu0 %v719, 16
        %v1320 = vpop.permute.xlu0 %1319
        %1321 = vrot.lane.b32.xlu0 %v720, 16
        %v1322 = vpop.permute.xlu0 %1321
        %1323 = vrot.lane.b32.xlu0 %v721, 16
        %v1324 = vpop.permute.xlu0 %1323
        %1325 = vrot.lane.b32.xlu0 %v722, 16
        %v1326 = vpop.permute.xlu0 %1325
        %1327 = vrot.lane.b32.xlu0 %v723, 16
        %v1328 = vpop.permute.xlu0 %1327
        %1329 = vrot.lane.b32.xlu0 %v724, 16
        %v1330 = vpop.permute.xlu0 %1329
        %1331 = vrot.lane.b32.xlu0 %v725, 16
        %v1332 = vpop.permute.xlu0 %1331
        %1333 = vrot.lane.b32.xlu0 %v726, 16
        %v1334 = vpop.permute.xlu0 %1333
        %1335 = vrot.lane.b32.xlu0 %v727, 16
        %v1336 = vpop.permute.xlu0 %1335
        %1401 = vrot.lane.b32.xlu0 %v728, 20
        %v1402 = vpop.permute.xlu0 %1401
        %1403 = vrot.lane.b32.xlu0 %v729, 20
        %v1404 = vpop.permute.xlu0 %1403
        %1405 = vrot.lane.b32.xlu0 %v730, 20
        %v1406 = vpop.permute.xlu0 %1405
        %1407 = vrot.lane.b32.xlu0 %v731, 20
        %v1408 = vpop.permute.xlu0 %1407
        %1409 = vrot.lane.b32.xlu0 %v732, 20
        %v1410 = vpop.permute.xlu0 %1409
        %1411 = vrot.lane.b32.xlu0 %v733, 20
        %v1412 = vpop.permute.xlu0 %1411
        %1413 = vrot.lane.b32.xlu0 %v734, 20
        %v1414 = vpop.permute.xlu0 %1413
        %1415 = vrot.lane.b32.xlu0 %v735, 20
        %v1416 = vpop.permute.xlu0 %1415
        %1417 = vrot.lane.b32.xlu0 %v736, 20
        %v1418 = vpop.permute.xlu0 %1417
        %1419 = vrot.lane.b32.xlu0 %v737, 20
        %v1420 = vpop.permute.xlu0 %1419
        %1421 = vrot.lane.b32.xlu0 %v738, 20
        %v1422 = vpop.permute.xlu0 %1421
        %1423 = vrot.lane.b32.xlu0 %v739, 20
        %v1424 = vpop.permute.xlu0 %1423
        %1425 = vrot.lane.b32.xlu0 %v740, 20
        %v1426 = vpop.permute.xlu0 %1425
        %1427 = vrot.lane.b32.xlu0 %v741, 20
        %v1428 = vpop.permute.xlu0 %1427
        %1429 = vrot.lane.b32.xlu0 %v742, 20
        %v1430 = vpop.permute.xlu0 %1429
        %1431 = vrot.lane.b32.xlu0 %v743, 20
        %v1432 = vpop.permute.xlu0 %1431
        %1433 = vrot.lane.b32.xlu0 %v744, 20
        %v1434 = vpop.permute.xlu0 %1433
        %1435 = vrot.lane.b32.xlu0 %v745, 20
        %v1436 = vpop.permute.xlu0 %1435
        %1437 = vrot.lane.b32.xlu0 %v746, 20
        %v1438 = vpop.permute.xlu0 %1437
        %1439 = vrot.lane.b32.xlu0 %v747, 20
        %v1440 = vpop.permute.xlu0 %1439
        %1441 = vrot.lane.b32.xlu0 %v748, 20
        %v1442 = vpop.permute.xlu0 %1441
        %1443 = vrot.lane.b32.xlu0 %v749, 20
        %v1444 = vpop.permute.xlu0 %1443
        %1445 = vrot.lane.b32.xlu0 %v750, 20
        %v1446 = vpop.permute.xlu0 %1445
        %1447 = vrot.lane.b32.xlu0 %v751, 20
        %v1448 = vpop.permute.xlu0 %1447
        %1449 = vrot.lane.b32.xlu0 %v752, 20
        %v1450 = vpop.permute.xlu0 %1449
        %1451 = vrot.lane.b32.xlu0 %v753, 20
        %v1452 = vpop.permute.xlu0 %1451
        %1453 = vrot.lane.b32.xlu0 %v754, 20
        %v1454 = vpop.permute.xlu0 %1453
        %1455 = vrot.lane.b32.xlu0 %v755, 20
        %v1456 = vpop.permute.xlu0 %1455
        %1457 = vrot.lane.b32.xlu0 %v756, 20
        %v1458 = vpop.permute.xlu0 %1457
        %1459 = vrot.lane.b32.xlu0 %v757, 20
        %v1460 = vpop.permute.xlu0 %1459
        %1461 = vrot.lane.b32.xlu0 %v758, 20
        %v1462 = vpop.permute.xlu0 %1461
        %1463 = vrot.lane.b32.xlu0 %v759, 20
        %v1464 = vpop.permute.xlu0 %1463
        %1529 = vrot.lane.b32.xlu0 %v761, 24
        %v1530 = vpop.permute.xlu0 %1529
        %1531 = vrot.lane.b32.xlu0 %v762, 24
        %v1532 = vpop.permute.xlu0 %1531
        %1533 = vrot.lane.b32.xlu0 %v763, 24
        %v1534 = vpop.permute.xlu0 %1533
        %1535 = vrot.lane.b32.xlu0 %v764, 24
        %v1536 = vpop.permute.xlu0 %1535
        %1537 = vrot.lane.b32.xlu0 %v765, 24
        %v1538 = vpop.permute.xlu0 %1537
        %1539 = vrot.lane.b32.xlu0 %v766, 24
        %v1540 = vpop.permute.xlu0 %1539
        %1541 = vrot.lane.b32.xlu0 %v767, 24
        %v1542 = vpop.permute.xlu0 %1541
        %1543 = vrot.lane.b32.xlu0 %v768, 24
        %v1544 = vpop.permute.xlu0 %1543
        %1545 = vrot.lane.b32.xlu0 %v769, 24
        %v1546 = vpop.permute.xlu0 %1545
        %1547 = vrot.lane.b32.xlu0 %v770, 24
        %v1548 = vpop.permute.xlu0 %1547
        %1549 = vrot.lane.b32.xlu0 %v771, 24
        %v1550 = vpop.permute.xlu0 %1549
        %1551 = vrot.lane.b32.xlu0 %v772, 24
        %v1552 = vpop.permute.xlu0 %1551
        %1553 = vrot.lane.b32.xlu0 %v773, 24
        %v1554 = vpop.permute.xlu0 %1553
        %1555 = vrot.lane.b32.xlu0 %v774, 24
        %v1556 = vpop.permute.xlu0 %1555
        %1557 = vrot.lane.b32.xlu0 %v775, 24
        %v1558 = vpop.permute.xlu0 %1557
        %1559 = vrot.lane.b32.xlu0 %v776, 24
        %v1560 = vpop.permute.xlu0 %1559
        %1561 = vrot.lane.b32.xlu0 %v777, 24
        %v1562 = vpop.permute.xlu0 %1561
        %1563 = vrot.lane.b32.xlu0 %v778, 24
        %v1564 = vpop.permute.xlu0 %1563
        %1565 = vrot.lane.b32.xlu0 %v779, 24
        %v1566 = vpop.permute.xlu0 %1565
        %1567 = vrot.lane.b32.xlu0 %v780, 24
        %v1568 = vpop.permute.xlu0 %1567
        %1569 = vrot.lane.b32.xlu0 %v781, 24
        %v1570 = vpop.permute.xlu0 %1569
        %1571 = vrot.lane.b32.xlu0 %v782, 24
        %v1572 = vpop.permute.xlu0 %1571
        %1573 = vrot.lane.b32.xlu0 %v783, 24
        %v1574 = vpop.permute.xlu0 %1573
        %1575 = vrot.lane.b32.xlu0 %v784, 24
        %v1576 = vpop.permute.xlu0 %1575
        %1577 = vrot.lane.b32.xlu0 %v785, 24
        %v1578 = vpop.permute.xlu0 %1577
        %1579 = vrot.lane.b32.xlu0 %v786, 24
        %v1580 = vpop.permute.xlu0 %1579
        %1581 = vrot.lane.b32.xlu0 %v787, 24
        %v1582 = vpop.permute.xlu0 %1581
        %1583 = vrot.lane.b32.xlu0 %v788, 24
        %v1584 = vpop.permute.xlu0 %1583
        %1585 = vrot.lane.b32.xlu0 %v789, 24
        %v1586 = vpop.permute.xlu0 %1585
        %1587 = vrot.lane.b32.xlu0 %v790, 24
        %v1588 = vpop.permute.xlu0 %1587
        %1589 = vrot.lane.b32.xlu0 %v791, 24
        %v1590 = vpop.permute.xlu0 %1589
        %1591 = vrot.lane.b32.xlu0 %v792, 24
        %v1592 = vpop.permute.xlu0 %1591
        %1657 = vrot.lane.b32.xlu0 %v793, 28
        %v1658 = vpop.permute.xlu0 %1657
        %1659 = vrot.lane.b32.xlu0 %v794, 28
        %v1660 = vpop.permute.xlu0 %1659
        %1661 = vrot.lane.b32.xlu0 %v795, 28
        %v1662 = vpop.permute.xlu0 %1661
        %1663 = vrot.lane.b32.xlu0 %v796, 28
        %v1664 = vpop.permute.xlu0 %1663
        %1665 = vrot.lane.b32.xlu0 %v797, 28
        %v1666 = vpop.permute.xlu0 %1665
        %1667 = vrot.lane.b32.xlu0 %v798, 28
        %v1668 = vpop.permute.xlu0 %1667
        %1669 = vrot.lane.b32.xlu0 %v799, 28
        %v1670 = vpop.permute.xlu0 %1669
        %1671 = vrot.lane.b32.xlu0 %v800, 28
        %v1672 = vpop.permute.xlu0 %1671
        %1673 = vrot.lane.b32.xlu0 %v801, 28
        %v1674 = vpop.permute.xlu0 %1673
        %1675 = vrot.lane.b32.xlu0 %v802, 28
        %v1676 = vpop.permute.xlu0 %1675
        %1677 = vrot.lane.b32.xlu0 %v803, 28
        %v1678 = vpop.permute.xlu0 %1677
        %1679 = vrot.lane.b32.xlu0 %v804, 28
        %v1680 = vpop.permute.xlu0 %1679
        %1681 = vrot.lane.b32.xlu0 %v805, 28
        %v1682 = vpop.permute.xlu0 %1681
        %1683 = vrot.lane.b32.xlu0 %v806, 28
        %v1684 = vpop.permute.xlu0 %1683
        %1685 = vrot.lane.b32.xlu0 %v807, 28
        %v1686 = vpop.permute.xlu0 %1685
        %1687 = vrot.lane.b32.xlu0 %v808, 28
        %v1688 = vpop.permute.xlu0 %1687
        %1689 = vrot.lane.b32.xlu0 %v809, 28
        %v1690 = vpop.permute.xlu0 %1689
        %1691 = vrot.lane.b32.xlu0 %v810, 28
        %v1692 = vpop.permute.xlu0 %1691
        %1693 = vrot.lane.b32.xlu0 %v811, 28
        %v1694 = vpop.permute.xlu0 %1693
        %1695 = vrot.lane.b32.xlu0 %v812, 28
        %v1696 = vpop.permute.xlu0 %1695
        %1697 = vrot.lane.b32.xlu0 %v813, 28
        %v1698 = vpop.permute.xlu0 %1697
        %1699 = vrot.lane.b32.xlu0 %v814, 28
        %v1700 = vpop.permute.xlu0 %1699
        %1701 = vrot.lane.b32.xlu0 %v815, 28
        %v1702 = vpop.permute.xlu0 %1701
        %1703 = vrot.lane.b32.xlu0 %v816, 28
        %v1704 = vpop.permute.xlu0 %1703
        %1705 = vrot.lane.b32.xlu0 %v817, 28
        %v1706 = vpop.permute.xlu0 %1705
        %1707 = vrot.lane.b32.xlu0 %v818, 28
        %v1708 = vpop.permute.xlu0 %1707
        %1709 = vrot.lane.b32.xlu0 %v819, 28
        %v1710 = vpop.permute.xlu0 %1709
        %1711 = vrot.lane.b32.xlu0 %v820, 28
        %v1712 = vpop.permute.xlu0 %1711
        %1713 = vrot.lane.b32.xlu0 %v821, 28
        %v1714 = vpop.permute.xlu0 %1713
        %1715 = vrot.lane.b32.xlu0 %v822, 28
        %v1716 = vpop.permute.xlu0 %1715
        %1717 = vrot.lane.b32.xlu0 %v823, 28
        %v1718 = vpop.permute.xlu0 %1717
        %1719 = vrot.lane.b32.xlu0 %v824, 28
        %v1720 = vpop.permute.xlu0 %1719
        %1785 = vrot.lane.b32.xlu0 %v825, 32
        %v1786 = vpop.permute.xlu0 %1785
        %1787 = vrot.lane.b32.xlu0 %v826, 32
        %v1788 = vpop.permute.xlu0 %1787
        %1789 = vrot.lane.b32.xlu0 %v827, 32
        %v1790 = vpop.permute.xlu0 %1789
        %1791 = vrot.lane.b32.xlu0 %v828, 32
        %v1792 = vpop.permute.xlu0 %1791
        %1793 = vrot.lane.b32.xlu0 %v829, 32
        %v1794 = vpop.permute.xlu0 %1793
        %1795 = vrot.lane.b32.xlu0 %v830, 32
        %v1796 = vpop.permute.xlu0 %1795
        %1797 = vrot.lane.b32.xlu0 %v831, 32
        %v1798 = vpop.permute.xlu0 %1797
        %1799 = vrot.lane.b32.xlu0 %v832, 32
        %v1800 = vpop.permute.xlu0 %1799
        %1801 = vrot.lane.b32.xlu0 %v833, 32
        %v1802 = vpop.permute.xlu0 %1801
        %1803 = vrot.lane.b32.xlu0 %v834, 32
        %v1804 = vpop.permute.xlu0 %1803
        %1805 = vrot.lane.b32.xlu0 %v835, 32
        %v1806 = vpop.permute.xlu0 %1805
        %1807 = vrot.lane.b32.xlu0 %v836, 32
        %v1808 = vpop.permute.xlu0 %1807
        %1809 = vrot.lane.b32.xlu0 %v837, 32
        %v1810 = vpop.permute.xlu0 %1809
        %1811 = vrot.lane.b32.xlu0 %v838, 32
        %v1812 = vpop.permute.xlu0 %1811
        %1813 = vrot.lane.b32.xlu0 %v839, 32
        %v1814 = vpop.permute.xlu0 %1813
        %1815 = vrot.lane.b32.xlu0 %v840, 32
        %v1816 = vpop.permute.xlu0 %1815
        %1817 = vrot.lane.b32.xlu0 %v841, 32
        %v1818 = vpop.permute.xlu0 %1817
        %1819 = vrot.lane.b32.xlu0 %v842, 32
        %v1820 = vpop.permute.xlu0 %1819
        %1821 = vrot.lane.b32.xlu0 %v843, 32
        %v1822 = vpop.permute.xlu0 %1821
        %1823 = vrot.lane.b32.xlu0 %v844, 32
        %v1824 = vpop.permute.xlu0 %1823
        %1825 = vrot.lane.b32.xlu0 %v845, 32
        %v1826 = vpop.permute.xlu0 %1825
        %1827 = vrot.lane.b32.xlu0 %v846, 32
        %v1828 = vpop.permute.xlu0 %1827
        %1829 = vrot.lane.b32.xlu0 %v847, 32
        %v1830 = vpop.permute.xlu0 %1829
        %1831 = vrot.lane.b32.xlu0 %v848, 32
        %v1832 = vpop.permute.xlu0 %1831
        %1833 = vrot.lane.b32.xlu0 %v849, 32
        %v1834 = vpop.permute.xlu0 %1833
        %1835 = vrot.lane.b32.xlu0 %v850, 32
        %v1836 = vpop.permute.xlu0 %1835
        %1837 = vrot.lane.b32.xlu0 %v851, 32
        %v1838 = vpop.permute.xlu0 %1837
        %1839 = vrot.lane.b32.xlu0 %v852, 32
        %v1840 = vpop.permute.xlu0 %1839
        %1841 = vrot.lane.b32.xlu0 %v853, 32
        %v1842 = vpop.permute.xlu0 %1841
        %1843 = vrot.lane.b32.xlu0 %v854, 32
        %v1844 = vpop.permute.xlu0 %1843
        %1845 = vrot.lane.b32.xlu0 %v855, 32
        %v1846 = vpop.permute.xlu0 %1845
        %1847 = vrot.lane.b32.xlu0 %v856, 32
        %v1848 = vpop.permute.xlu0 %1847
        %v1881 = vsel %vm359, %v568, %v890
        %v1882 = vsel %vm359, %v569, %v892
        %v1883 = vsel %vm359, %v570, %v894
        %v1884 = vsel %vm359, %v571, %v896
        %v1885 = vsel %vm359, %v572, %v898
        %v1886 = vsel %vm359, %v573, %v900
        %v1887 = vsel %vm359, %v574, %v902
        %v1888 = vsel %vm359, %v575, %v904
        %v1889 = vsel %vm359, %v576, %v906
        %v1890 = vsel %vm359, %v577, %v908
        %v1891 = vsel %vm359, %v578, %v910
        %v1892 = vsel %vm359, %v579, %v912
        %v1893 = vsel %vm359, %v580, %v914
        %v1894 = vsel %vm359, %v581, %v916
        %v1895 = vsel %vm359, %v582, %v918
        %v1896 = vsel %vm359, %v583, %v920
        %v1897 = vsel %vm359, %v584, %v922
        %v1898 = vsel %vm359, %v585, %v924
        %v1899 = vsel %vm359, %v586, %v926
        %v1900 = vsel %vm359, %v587, %v928
        %v1901 = vsel %vm359, %v588, %v930
        %v1902 = vsel %vm359, %v589, %v932
        %v1903 = vsel %vm359, %v590, %v934
        %v1904 = vsel %vm359, %v591, %v936
        %v1905 = vsel %vm359, %v592, %v938
        %v1906 = vsel %vm359, %v593, %v940
        %v1907 = vsel %vm359, %v594, %v942
        %v1908 = vsel %vm359, %v595, %v944
        %v1909 = vsel %vm359, %v596, %v946
        %v1910 = vsel %vm359, %v597, %v948
        %v1911 = vsel %vm359, %v598, %v950
        %v1912 = vsel %vm359, %v599, %v952
        %v1913 = vsel %vm415, %v1881, %v1018
        %v1914 = vsel %vm415, %v1882, %v1020
        %v1915 = vsel %vm415, %v1883, %v1022
        %v1916 = vsel %vm415, %v1884, %v1024
        %v1917 = vsel %vm415, %v1885, %v1026
        %v1918 = vsel %vm415, %v1886, %v1028
        %v1919 = vsel %vm415, %v1887, %v1030
        %v1920 = vsel %vm415, %v1888, %v1032
        %v1921 = vsel %vm415, %v1889, %v1034
        %v1922 = vsel %vm415, %v1890, %v1036
        %v1923 = vsel %vm415, %v1891, %v1038
        %v1924 = vsel %vm415, %v1892, %v1040
        %v1925 = vsel %vm415, %v1893, %v1042
        %v1926 = vsel %vm415, %v1894, %v1044
        %v1927 = vsel %vm415, %v1895, %v1046
        %v1928 = vsel %vm415, %v1896, %v1048
        %v1929 = vsel %vm415, %v1897, %v1050
        %v1930 = vsel %vm415, %v1898, %v1052
        %v1931 = vsel %vm415, %v1899, %v1054
        %v1932 = vsel %vm415, %v1900, %v1056
        %v1933 = vsel %vm415, %v1901, %v1058
        %v1934 = vsel %vm415, %v1902, %v1060
        %v1935 = vsel %vm415, %v1903, %v1062
        %v1936 = vsel %vm415, %v1904, %v1064
        %v1937 = vsel %vm415, %v1905, %v1066
        %v1938 = vsel %vm415, %v1906, %v1068
        %v1939 = vsel %vm415, %v1907, %v1070
        %v1940 = vsel %vm415, %v1908, %v1072
        %v1941 = vsel %vm415, %v1909, %v1074
        %v1942 = vsel %vm415, %v1910, %v1076
        %v1943 = vsel %vm415, %v1911, %v1078
        %v1944 = vsel %vm415, %v1912, %v1080
        %vm1945 = vcmask 97280
        %v1946 = vsel %vm1945, %v1913, %v1146
        %v1947 = vsel %vm1945, %v1914, %v1148
        %v1948 = vsel %vm1945, %v1915, %v1150
        %v1949 = vsel %vm1945, %v1916, %v1152
        %v1950 = vsel %vm1945, %v1917, %v1154
        %v1951 = vsel %vm1945, %v1918, %v1156
        %v1952 = vsel %vm1945, %v1919, %v1158
        %v1953 = vsel %vm1945, %v1920, %v1160
        %v1954 = vsel %vm1945, %v1921, %v1162
        %v1955 = vsel %vm1945, %v1922, %v1164
        %v1956 = vsel %vm1945, %v1923, %v1166
        %v1957 = vsel %vm1945, %v1924, %v1168
        %v1958 = vsel %vm1945, %v1925, %v1170
        %v1959 = vsel %vm1945, %v1926, %v1172
        %v1960 = vsel %vm1945, %v1927, %v1174
        %v1961 = vsel %vm1945, %v1928, %v1176
        %v1962 = vsel %vm1945, %v1929, %v1178
        %v1963 = vsel %vm1945, %v1930, %v1180
        %v1964 = vsel %vm1945, %v1931, %v1182
        %v1965 = vsel %vm1945, %v1932, %v1184
        %v1966 = vsel %vm1945, %v1933, %v1186
        %v1967 = vsel %vm1945, %v1934, %v1188
        %v1968 = vsel %vm1945, %v1935, %v1190
        %v1969 = vsel %vm1945, %v1936, %v1192
        %v1970 = vsel %vm1945, %v1937, %v1194
        %v1971 = vsel %vm1945, %v1938, %v1196
        %v1972 = vsel %vm1945, %v1939, %v1198
        %v1973 = vsel %vm1945, %v1940, %v1200
        %v1974 = vsel %vm1945, %v1941, %v1202
        %v1975 = vsel %vm1945, %v1942, %v1204
        %v1976 = vsel %vm1945, %v1943, %v1206
        %v1977 = vsel %vm1945, %v1944, %v1208
        %vm1978 = vcmask 130048
        %v1979 = vsel %vm1978, %v1946, %v1274
        %v1980 = vsel %vm1978, %v1947, %v1276
        %v1981 = vsel %vm1978, %v1948, %v1278
        %v1982 = vsel %vm1978, %v1949, %v1280
        %v1983 = vsel %vm1978, %v1950, %v1282
        %v1984 = vsel %vm1978, %v1951, %v1284
        %v1985 = vsel %vm1978, %v1952, %v1286
        %v1986 = vsel %vm1978, %v1953, %v1288
        %v1987 = vsel %vm1978, %v1954, %v1290
        %v1988 = vsel %vm1978, %v1955, %v1292
        %v1989 = vsel %vm1978, %v1956, %v1294
        %v1990 = vsel %vm1978, %v1957, %v1296
        %v1991 = vsel %vm1978, %v1958, %v1298
        %v1992 = vsel %vm1978, %v1959, %v1300
        %v1993 = vsel %vm1978, %v1960, %v1302
        %v1994 = vsel %vm1978, %v1961, %v1304
        %v1995 = vsel %vm1978, %v1962, %v1306
        %v1996 = vsel %vm1978, %v1963, %v1308
        %v1997 = vsel %vm1978, %v1964, %v1310
        %v1998 = vsel %vm1978, %v1965, %v1312
        %v1999 = vsel %vm1978, %v1966, %v1314
        %v2000 = vsel %vm1978, %v1967, %v1316
        %v2001 = vsel %vm1978, %v1968, %v1318
        %v2002 = vsel %vm1978, %v1969, %v1320
        %v2003 = vsel %vm1978, %v1970, %v1322
        %v2004 = vsel %vm1978, %v1971, %v1324
        %v2005 = vsel %vm1978, %v1972, %v1326
        %v2006 = vsel %vm1978, %v1973, %v1328
        %v2007 = vsel %vm1978, %v1974, %v1330
        %v2008 = vsel %vm1978, %v1975, %v1332
        %v2009 = vsel %vm1978, %v1976, %v1334
        %v2010 = vsel %vm1978, %v1977, %v1336
        %vm2011 = vcmask 162816
        %v2012 = vsel %vm2011, %v1979, %v1402
        %v2013 = vsel %vm2011, %v1980, %v1404
        %v2014 = vsel %vm2011, %v1981, %v1406
        %v2015 = vsel %vm2011, %v1982, %v1408
        %v2016 = vsel %vm2011, %v1983, %v1410
        %v2017 = vsel %vm2011, %v1984, %v1412
        %v2018 = vsel %vm2011, %v1985, %v1414
        %v2019 = vsel %vm2011, %v1986, %v1416
        %v2020 = vsel %vm2011, %v1987, %v1418
        %v2021 = vsel %vm2011, %v1988, %v1420
        %v2022 = vsel %vm2011, %v1989, %v1422
        %v2023 = vsel %vm2011, %v1990, %v1424
        %v2024 = vsel %vm2011, %v1991, %v1426
        %v2025 = vsel %vm2011, %v1992, %v1428
        %v2026 = vsel %vm2011, %v1993, %v1430
        %v2027 = vsel %vm2011, %v1994, %v1432
        %v2028 = vsel %vm2011, %v1995, %v1434
        %v2029 = vsel %vm2011, %v1996, %v1436
        %v2030 = vsel %vm2011, %v1997, %v1438
        %v2031 = vsel %vm2011, %v1998, %v1440
        %v2032 = vsel %vm2011, %v1999, %v1442
        %v2033 = vsel %vm2011, %v2000, %v1444
        %v2034 = vsel %vm2011, %v2001, %v1446
        %v2035 = vsel %vm2011, %v2002, %v1448
        %v2036 = vsel %vm2011, %v2003, %v1450
        %v2037 = vsel %vm2011, %v2004, %v1452
        %v2038 = vsel %vm2011, %v2005, %v1454
        %v2039 = vsel %vm2011, %v2006, %v1456
        %v2040 = vsel %vm2011, %v2007, %v1458
        %v2041 = vsel %vm2011, %v2008, %v1460
        %v2042 = vsel %vm2011, %v2009, %v1462
        %v2043 = vsel %vm2011, %v2010, %v1464
        %vm2044 = vcmask 195584
        %v2045 = vsel %vm2044, %v2012, %v1530
        %v2046 = vsel %vm2044, %v2013, %v1532
        %v2047 = vsel %vm2044, %v2014, %v1534
        %v2048 = vsel %vm2044, %v2015, %v1536
        %v2049 = vsel %vm2044, %v2016, %v1538
        %v2050 = vsel %vm2044, %v2017, %v1540
        %v2051 = vsel %vm2044, %v2018, %v1542
        %v2052 = vsel %vm2044, %v2019, %v1544
        %v2053 = vsel %vm2044, %v2020, %v1546
        %v2054 = vsel %vm2044, %v2021, %v1548
        %v2055 = vsel %vm2044, %v2022, %v1550
        %v2056 = vsel %vm2044, %v2023, %v1552
        %v2057 = vsel %vm2044, %v2024, %v1554
        %v2058 = vsel %vm2044, %v2025, %v1556
        %v2059 = vsel %vm2044, %v2026, %v1558
        %v2060 = vsel %vm2044, %v2027, %v1560
        %v2061 = vsel %vm2044, %v2028, %v1562
        %v2062 = vsel %vm2044, %v2029, %v1564
        %v2063 = vsel %vm2044, %v2030, %v1566
        %v2064 = vsel %vm2044, %v2031, %v1568
        %v2065 = vsel %vm2044, %v2032, %v1570
        %v2066 = vsel %vm2044, %v2033, %v1572
        %v2067 = vsel %vm2044, %v2034, %v1574
        %v2068 = vsel %vm2044, %v2035, %v1576
        %v2069 = vsel %vm2044, %v2036, %v1578
        %v2070 = vsel %vm2044, %v2037, %v1580
        %v2071 = vsel %vm2044, %v2038, %v1582
        %v2072 = vsel %vm2044, %v2039, %v1584
        %v2073 = vsel %vm2044, %v2040, %v1586
        %v2074 = vsel %vm2044, %v2041, %v1588
        %v2075 = vsel %vm2044, %v2042, %v1590
        %v2076 = vsel %vm2044, %v2043, %v1592
        %vm2077 = vcmask 228352
        %v2078 = vsel %vm2077, %v2045, %v1658
        %v2079 = vsel %vm2077, %v2046, %v1660
        %v2080 = vsel %vm2077, %v2047, %v1662
        %v2081 = vsel %vm2077, %v2048, %v1664
        %v2082 = vsel %vm2077, %v2049, %v1666
        %v2083 = vsel %vm2077, %v2050, %v1668
        %v2084 = vsel %vm2077, %v2051, %v1670
        %v2085 = vsel %vm2077, %v2052, %v1672
        %v2086 = vsel %vm2077, %v2053, %v1674
        %v2087 = vsel %vm2077, %v2054, %v1676
        %v2088 = vsel %vm2077, %v2055, %v1678
        %v2089 = vsel %vm2077, %v2056, %v1680
        %v2090 = vsel %vm2077, %v2057, %v1682
        %v2091 = vsel %vm2077, %v2058, %v1684
        %v2092 = vsel %vm2077, %v2059, %v1686
        %v2093 = vsel %vm2077, %v2060, %v1688
        %v2094 = vsel %vm2077, %v2061, %v1690
        %v2095 = vsel %vm2077, %v2062, %v1692
        %v2096 = vsel %vm2077, %v2063, %v1694
        %v2097 = vsel %vm2077, %v2064, %v1696
        %v2098 = vsel %vm2077, %v2065, %v1698
        %v2099 = vsel %vm2077, %v2066, %v1700
        %v2100 = vsel %vm2077, %v2067, %v1702
        %v2101 = vsel %vm2077, %v2068, %v1704
        %v2102 = vsel %vm2077, %v2069, %v1706
        %v2103 = vsel %vm2077, %v2070, %v1708
        %v2104 = vsel %vm2077, %v2071, %v1710
        %v2105 = vsel %vm2077, %v2072, %v1712
        %v2106 = vsel %vm2077, %v2073, %v1714
        %v2107 = vsel %vm2077, %v2074, %v1716
        %v2108 = vsel %vm2077, %v2075, %v1718
        %v2109 = vsel %vm2077, %v2076, %v1720
        %vm2110 = vcmask 261120
        %v2111 = vsel %vm2110, %v2078, %v1786
        %v2112 = vsel %vm2110, %v2079, %v1788
        %v2113 = vsel %vm2110, %v2080, %v1790
        %v2114 = vsel %vm2110, %v2081, %v1792
        %v2115 = vsel %vm2110, %v2082, %v1794
        %v2116 = vsel %vm2110, %v2083, %v1796
        %v2117 = vsel %vm2110, %v2084, %v1798
        %v2118 = vsel %vm2110, %v2085, %v1800
        %v2119 = vsel %vm2110, %v2086, %v1802
        %v2120 = vsel %vm2110, %v2087, %v1804
        %v2121 = vsel %vm2110, %v2088, %v1806
        %v2122 = vsel %vm2110, %v2089, %v1808
        %v2123 = vsel %vm2110, %v2090, %v1810
        %v2124 = vsel %vm2110, %v2091, %v1812
        %v2125 = vsel %vm2110, %v2092, %v1814
        %v2126 = vsel %vm2110, %v2093, %v1816
        %v2127 = vsel %vm2110, %v2094, %v1818
        %v2128 = vsel %vm2110, %v2095, %v1820
        %v2129 = vsel %vm2110, %v2096, %v1822
        %v2130 = vsel %vm2110, %v2097, %v1824
        %v2131 = vsel %vm2110, %v2098, %v1826
        %v2132 = vsel %vm2110, %v2099, %v1828
        %v2133 = vsel %vm2110, %v2100, %v1830
        %v2134 = vsel %vm2110, %v2101, %v1832
        %v2135 = vsel %vm2110, %v2102, %v1834
        %v2136 = vsel %vm2110, %v2103, %v1836
        %v2137 = vsel %vm2110, %v2104, %v1838
        %v2138 = vsel %vm2110, %v2105, %v1840
        %v2139 = vsel %vm2110, %v2106, %v1842
        %v2140 = vsel %vm2110, %v2107, %v1844
        %v2141 = vsel %vm2110, %v2108, %v1846
        %v2142 = vsel %vm2110, %v2109, %v1848
        %v2143 = vpack.c.bf16 %v2112, %v2111
        %v2144 = vpack.c.bf16 %v2114, %v2113
        %v2145 = vpack.c.bf16 %v2116, %v2115
        %v2146 = vpack.c.bf16 %v2118, %v2117
        %v2147 = vpack.c.bf16 %v2120, %v2119
        %v2148 = vpack.c.bf16 %v2122, %v2121
        %v2149 = vpack.c.bf16 %v2124, %v2123
        %v2150 = vpack.c.bf16 %v2126, %v2125
        %v2151 = vpack.c.bf16 %v2128, %v2127
        %v2152 = vpack.c.bf16 %v2130, %v2129
        %v2153 = vpack.c.bf16 %v2132, %v2131
        %v2154 = vpack.c.bf16 %v2134, %v2133
        %v2155 = vpack.c.bf16 %v2136, %v2135
        %v2156 = vpack.c.bf16 %v2138, %v2137
        %v2157 = vpack.c.bf16 %v2140, %v2139
        %v2158 = vpack.c.bf16 %v2142, %v2141
        %v2159 = vld [vmem:[%s1] sm:$0xf]
        %v2160 = vld [vmem:[%s1 + $0x4] sm:$0xf]
        %v2161 = vld [vmem:[%s1 + $0x8] sm:$0xf]
        %v2162 = vld [vmem:[%s1 + $0xc] sm:$0xf]
        %v2163 = vld [vmem:[%s1 + $0x10] sm:$0x3]
        %v2169 = vunpack.c.l.b16 %v2159
        %v2170 = vunpack.c.l.b16 %v2160
        %v2171 = vunpack.c.l.b16 %v2161
        %v2172 = vunpack.c.l.b16 %v2162
        %v2173 = vunpack.c.l.b16 %v2163
        %v2174 = vpack.c.b16 %v2170, %v2169
        %v2175 = vpack.c.b16 %v2172, %v2171
        %v2176 = vpack.c.b16 %v2173, %v2173
        %vm2179 = vcmask 293888
        %v2181 = vsel %vm2179, %v2143, 0
        %v2184 = vsel %vm2179, %v2144, 0
        %v2187 = vsel %vm2179, %v2145, 0
        %v2190 = vsel %vm2179, %v2146, 0
        %v2193 = vsel %vm2179, %v2147, 0
        %v2196 = vsel %vm2179, %v2148, 0
        %v2199 = vsel %vm2179, %v2149, 0
        %v2202 = vsel %vm2179, %v2150, 0
        %v2205 = vsel %vm2179, %v2151, 0
        %v2208 = vsel %vm2179, %v2152, 0
        %v2211 = vsel %vm2179, %v2153, 0
        %v2214 = vsel %vm2179, %v2154, 0
        %v2217 = vsel %vm2179, %v2155, 0
        %v2220 = vsel %vm2179, %v2156, 0
        %v2223 = vsel %vm2179, %v2157, 0
        %v2226 = vsel %vm2179, %v2158, 0
        %vm2228 = vcmask 1041408
        %v2230 = vsel %vm2228, %v2176, 0
        %2232 = vmatprep.subr.bf16.mxu0 0
        %2233 = vmatpush1.bf16.msra.mxu0 %v2174
        %2234 = vmatprep.subr.bf16.mxu0 0
        %2235 = vmatpush1.bf16.msra.mxu0 %v2175
        %2236 = vmatprep.subr.bf16.mxu0 0
        %2237 = vmatpush1.bf16.msra.mxu0 %v2230
        %2238 = vmatprep.subr.bf16.mxu0 0
        %2239 = vmatpush1.bf16.msra.mxu0 0
        %2240 = vmatprep.subr.bf16.mxu0 0
        %2241 = vmatpush1.bf16.msra.mxu0 0
        %2242 = vmatprep.subr.bf16.mxu0 0
        %2243 = vmatpush1.bf16.msra.mxu0 0
        %2244 = vmatprep.subr.bf16.mxu0 0
        %2245 = vmatpush1.bf16.msra.mxu0 0
        %2246 = vmatprep.subr.bf16.mxu0 0
        %2247 = vmatpush1.bf16.msra.mxu0 0
        %2248 = vmatprep.subr.bf16.mxu0 0
        %2249 = vmatpush1.bf16.msra.mxu0 0
        %2250 = vmatprep.subr.bf16.mxu0 0
        %2251 = vmatpush1.bf16.msra.mxu0 0
        %2252 = vmatprep.subr.bf16.mxu0 0
        %2253 = vmatpush1.bf16.msra.mxu0 0
        %2254 = vmatprep.subr.bf16.mxu0 0
        %2255 = vmatpush1.bf16.msra.mxu0 0
        %2256 = vmatprep.subr.bf16.mxu0 0
        %2257 = vmatpush1.bf16.msra.mxu0 0
        %2258 = vmatprep.subr.bf16.mxu0 0
        %2259 = vmatpush1.bf16.msra.mxu0 0
        %2260 = vmatprep.subr.bf16.mxu0 0
        %2261 = vmatpush1.bf16.msra.mxu0 0
        %2262 = vmatprep.subr.bf16.mxu0 0
        %2263 = vmatpush1.bf16.msra.mxu0 0
        %2264 = vmatprep.mubr.bf16.mxu0 0
        %2265 = vmatmul.mubr.bf16.gmra.mrb[0].mxu0 %v2181
        %v2266 = vpop.f32.mrb[0].mxu0
        %v2267 = vadd.f32 0.0, %v2266
        %v2268 = vpop.f32.mrb[0].mxu0
        %v2269 = vpop.f32.mrb[0].mxu0
        %v2270 = vadd.f32 0.0, %v2269
        %v2271 = vpop.f32.mrb[0].mxu0
        %2272 = vmatprep.mubr.bf16.mxu0 0
        %2273 = vmatmul.mubr.bf16.gmra.mrb[0].mxu0 %v2184
        %v2274 = vpop.f32.mrb[0].mxu0
        %v2275 = vadd.f32 0.0, %v2274
        %v2276 = vpop.f32.mrb[0].mxu0
        %v2277 = vpop.f32.mrb[0].mxu0
        %v2278 = vadd.f32 0.0, %v2277
        %v2279 = vpop.f32.mrb[0].mxu0
        %2280 = vmatprep.mubr.bf16.mxu0 0
        %2281 = vmatmul.mubr.bf16.gmra.mrb[0].mxu0 %v2187
        %v2282 = vpop.f32.mrb[0].mxu0
        %v2283 = vadd.f32 0.0, %v2282
        %v2284 = vpop.f32.mrb[0].mxu0
        %v2285 = vpop.f32.mrb[0].mxu0
        %v2286 = vadd.f32 0.0, %v2285
        %v2287 = vpop.f32.mrb[0].mxu0
        %2288 = vmatprep.mubr.bf16.mxu0 0
        %2289 = vmatmul.mubr.bf16.gmra.mrb[0].mxu0 %v2190
        %v2290 = vpop.f32.mrb[0].mxu0
        %v2291 = vadd.f32 0.0, %v2290
        %v2292 = vpop.f32.mrb[0].mxu0
        %v2293 = vpop.f32.mrb[0].mxu0
        %v2294 = vadd.f32 0.0, %v2293
        %v2295 = vpop.f32.mrb[0].mxu0
        %2296 = vmatprep.mubr.bf16.mxu0 0
        %2297 = vmatmul.mubr.bf16.gmra.mrb[0].mxu0 %v2193
        %v2298 = vpop.f32.mrb[0].mxu0
        %v2299 = vadd.f32 0.0, %v2298
        %v2300 = vpop.f32.mrb[0].mxu0
        %v2301 = vpop.f32.mrb[0].mxu0
        %v2302 = vadd.f32 0.0, %v2301
        %v2303 = vpop.f32.mrb[0].mxu0
        %2304 = vmatprep.mubr.bf16.mxu0 0
        %2305 = vmatmul.mubr.bf16.gmra.mrb[0].mxu0 %v2196
        %v2306 = vpop.f32.mrb[0].mxu0
        %v2307 = vadd.f32 0.0, %v2306
        %v2308 = vpop.f32.mrb[0].mxu0
        %v2309 = vpop.f32.mrb[0].mxu0
        %v2310 = vadd.f32 0.0, %v2309
        %v2311 = vpop.f32.mrb[0].mxu0
        %2312 = vmatprep.mubr.bf16.mxu0 0
        %2313 = vmatmul.mubr.bf16.gmra.mrb[0].mxu0 %v2199
        %v2314 = vpop.f32.mrb[0].mxu0
        %v2315 = vadd.f32 0.0, %v2314
        %v2316 = vpop.f32.mrb[0].mxu0
        %v2317 = vpop.f32.mrb[0].mxu0
        %v2318 = vadd.f32 0.0, %v2317
        %v2319 = vpop.f32.mrb[0].mxu0
        %2320 = vmatprep.mubr.bf16.mxu0 0
        %2321 = vmatmul.mubr.bf16.gmra.mrb[0].mxu0 %v2202
        %v2322 = vpop.f32.mrb[0].mxu0
        %v2323 = vadd.f32 0.0, %v2322
        %v2324 = vpop.f32.mrb[0].mxu0
        %v2325 = vpop.f32.mrb[0].mxu0
        %v2326 = vadd.f32 0.0, %v2325
        %v2327 = vpop.f32.mrb[0].mxu0
        %2328 = vmatprep.mubr.bf16.mxu0 0
        %2329 = vmatmul.mubr.bf16.gmra.mrb[0].mxu0 %v2205
        %v2330 = vpop.f32.mrb[0].mxu0
        %v2331 = vadd.f32 0.0, %v2330
        %v2332 = vpop.f32.mrb[0].mxu0
        %v2333 = vpop.f32.mrb[0].mxu0
        %v2334 = vadd.f32 0.0, %v2333
        %v2335 = vpop.f32.mrb[0].mxu0
        %2336 = vmatprep.mubr.bf16.mxu0 0
        %2337 = vmatmul.mubr.bf16.gmra.mrb[0].mxu0 %v2208
        %v2338 = vpop.f32.mrb[0].mxu0
        %v2339 = vadd.f32 0.0, %v2338
        %v2340 = vpop.f32.mrb[0].mxu0
        %v2341 = vpop.f32.mrb[0].mxu0
        %v2342 = vadd.f32 0.0, %v2341
        %v2343 = vpop.f32.mrb[0].mxu0
        %2344 = vmatprep.mubr.bf16.mxu0 0
        %2345 = vmatmul.mubr.bf16.gmra.mrb[0].mxu0 %v2211
        %v2346 = vpop.f32.mrb[0].mxu0
        %v2347 = vadd.f32 0.0, %v2346
        %v2348 = vpop.f32.mrb[0].mxu0
        %v2349 = vpop.f32.mrb[0].mxu0
        %v2350 = vadd.f32 0.0, %v2349
        %v2351 = vpop.f32.mrb[0].mxu0
        %2352 = vmatprep.mubr.bf16.mxu0 0
        %2353 = vmatmul.mubr.bf16.gmra.mrb[0].mxu0 %v2214
        %v2354 = vpop.f32.mrb[0].mxu0
        %v2355 = vadd.f32 0.0, %v2354
        %v2356 = vpop.f32.mrb[0].mxu0
        %v2357 = vpop.f32.mrb[0].mxu0
        %v2358 = vadd.f32 0.0, %v2357
        %v2359 = vpop.f32.mrb[0].mxu0
        %2360 = vmatprep.mubr.bf16.mxu0 0
        %2361 = vmatmul.mubr.bf16.gmra.mrb[0].mxu0 %v2217
        %v2362 = vpop.f32.mrb[0].mxu0
        %v2363 = vadd.f32 0.0, %v2362
        %v2364 = vpop.f32.mrb[0].mxu0
        %v2365 = vpop.f32.mrb[0].mxu0
        %v2366 = vadd.f32 0.0, %v2365
        %v2367 = vpop.f32.mrb[0].mxu0
        %2368 = vmatprep.mubr.bf16.mxu0 0
        %2369 = vmatmul.mubr.bf16.gmra.mrb[0].mxu0 %v2220
        %v2370 = vpop.f32.mrb[0].mxu0
        %v2371 = vadd.f32 0.0, %v2370
        %v2372 = vpop.f32.mrb[0].mxu0
        %v2373 = vpop.f32.mrb[0].mxu0
        %v2374 = vadd.f32 0.0, %v2373
        %v2375 = vpop.f32.mrb[0].mxu0
        %2376 = vmatprep.mubr.bf16.mxu0 0
        %2377 = vmatmul.mubr.bf16.gmra.mrb[0].mxu0 %v2223
        %v2378 = vpop.f32.mrb[0].mxu0
        %v2379 = vadd.f32 0.0, %v2378
        %v2380 = vpop.f32.mrb[0].mxu0
        %v2381 = vpop.f32.mrb[0].mxu0
        %v2382 = vadd.f32 0.0, %v2381
        %v2383 = vpop.f32.mrb[0].mxu0
        %2384 = vmatprep.mubr.bf16.mxu0 0
        %2385 = vmatmul.mubr.bf16.gmra.mrb[0].mxu0 %v2226
        %v2386 = vpop.f32.mrb[0].mxu0
        %v2387 = vadd.f32 0.0, %v2386
        %v2388 = vpop.f32.mrb[0].mxu0
        %v2389 = vpop.f32.mrb[0].mxu0
        %v2390 = vadd.f32 0.0, %v2389
        %v2391 = vpop.f32.mrb[0].mxu0
        %2392 = vdwg.mxu0
        %v2393 = vld [vmem:[%s2] sm:$0x1]
        %v2395 = vlaneseq
        %v2396 = vshrl.u32 %v2395, 7
        %v2397 = vsub.s32 0, %v2396
        %v2398 = vrot.slane %v2393, %v2397
        %v2400 = vmul.f32 %v2267, %v2398
        %v2401 = vmul.f32 %v2270, %v2398
        %v2402 = vmul.f32 %v2275, %v2398
        %v2403 = vmul.f32 %v2278, %v2398
        %v2404 = vmul.f32 %v2283, %v2398
        %v2405 = vmul.f32 %v2286, %v2398
        %v2406 = vmul.f32 %v2291, %v2398
        %v2407 = vmul.f32 %v2294, %v2398
        %v2408 = vmul.f32 %v2299, %v2398
        %v2409 = vmul.f32 %v2302, %v2398
        %v2410 = vmul.f32 %v2307, %v2398
        %v2411 = vmul.f32 %v2310, %v2398
        %v2412 = vmul.f32 %v2315, %v2398
        %v2413 = vmul.f32 %v2318, %v2398
        %v2414 = vmul.f32 %v2323, %v2398
        %v2415 = vmul.f32 %v2326, %v2398
        %v2416 = vmul.f32 %v2331, %v2398
        %v2417 = vmul.f32 %v2334, %v2398
        %v2418 = vmul.f32 %v2339, %v2398
        %v2419 = vmul.f32 %v2342, %v2398
        %v2420 = vmul.f32 %v2347, %v2398
        %v2421 = vmul.f32 %v2350, %v2398
        %v2422 = vmul.f32 %v2355, %v2398
        %v2423 = vmul.f32 %v2358, %v2398
        %v2424 = vmul.f32 %v2363, %v2398
        %v2425 = vmul.f32 %v2366, %v2398
        %v2426 = vmul.f32 %v2371, %v2398
        %v2427 = vmul.f32 %v2374, %v2398
        %v2428 = vmul.f32 %v2379, %v2398
        %v2429 = vmul.f32 %v2382, %v2398
        %v2430 = vmul.f32 %v2387, %v2398
        %v2431 = vmul.f32 %v2390, %v2398
        %v2432 = vld [vmem:[%s3] sm:$0x1]
        %v2434 = vlaneseq
        %v2435 = vshrl.u32 %v2434, 7
        %v2436 = vsub.s32 0, %v2435
        %v2437 = vrot.slane %v2432, %v2436
        %v2439 = vadd.f32 %v2400, %v2437
        %v2440 = vadd.f32 %v2401, %v2437
        %v2441 = vadd.f32 %v2402, %v2437
        %v2442 = vadd.f32 %v2403, %v2437
        %v2443 = vadd.f32 %v2404, %v2437
        %v2444 = vadd.f32 %v2405, %v2437
        %v2445 = vadd.f32 %v2406, %v2437
        %v2446 = vadd.f32 %v2407, %v2437
        %v2447 = vadd.f32 %v2408, %v2437
        %v2448 = vadd.f32 %v2409, %v2437
        %v2449 = vadd.f32 %v2410, %v2437
        %v2450 = vadd.f32 %v2411, %v2437
        %v2451 = vadd.f32 %v2412, %v2437
        %v2452 = vadd.f32 %v2413, %v2437
        %v2453 = vadd.f32 %v2414, %v2437
        %v2454 = vadd.f32 %v2415, %v2437
        %v2455 = vadd.f32 %v2416, %v2437
        %v2456 = vadd.f32 %v2417, %v2437
        %v2457 = vadd.f32 %v2418, %v2437
        %v2458 = vadd.f32 %v2419, %v2437
        %v2459 = vadd.f32 %v2420, %v2437
        %v2460 = vadd.f32 %v2421, %v2437
        %v2461 = vadd.f32 %v2422, %v2437
        %v2462 = vadd.f32 %v2423, %v2437
        %v2463 = vadd.f32 %v2424, %v2437
        %v2464 = vadd.f32 %v2425, %v2437
        %v2465 = vadd.f32 %v2426, %v2437
        %v2466 = vadd.f32 %v2427, %v2437
        %v2467 = vadd.f32 %v2428, %v2437
        %v2468 = vadd.f32 %v2429, %v2437
        %v2469 = vadd.f32 %v2430, %v2437
        %v2470 = vadd.f32 %v2431, %v2437
        %v2471 = vmax.f32 %v2439, 0.0
        %v2472 = vmax.f32 %v2440, 0.0
        %v2473 = vmax.f32 %v2441, 0.0
        %v2474 = vmax.f32 %v2442, 0.0
        %v2475 = vmax.f32 %v2443, 0.0
        %v2476 = vmax.f32 %v2444, 0.0
        %v2477 = vmax.f32 %v2445, 0.0
        %v2478 = vmax.f32 %v2446, 0.0
        %v2479 = vmax.f32 %v2447, 0.0
        %v2480 = vmax.f32 %v2448, 0.0
        %v2481 = vmax.f32 %v2449, 0.0
        %v2482 = vmax.f32 %v2450, 0.0
        %v2483 = vmax.f32 %v2451, 0.0
        %v2484 = vmax.f32 %v2452, 0.0
        %v2485 = vmax.f32 %v2453, 0.0
        %v2486 = vmax.f32 %v2454, 0.0
        %v2487 = vmax.f32 %v2455, 0.0
        %v2488 = vmax.f32 %v2456, 0.0
        %v2489 = vmax.f32 %v2457, 0.0
        %v2490 = vmax.f32 %v2458, 0.0
        %v2491 = vmax.f32 %v2459, 0.0
        %v2492 = vmax.f32 %v2460, 0.0
        %v2493 = vmax.f32 %v2461, 0.0
        %v2494 = vmax.f32 %v2462, 0.0
        %v2495 = vmax.f32 %v2463, 0.0
        %v2496 = vmax.f32 %v2464, 0.0
        %v2497 = vmax.f32 %v2465, 0.0
        %v2498 = vmax.f32 %v2466, 0.0
        %v2499 = vmax.f32 %v2467, 0.0
        %v2500 = vmax.f32 %v2468, 0.0
        %v2501 = vmax.f32 %v2469, 0.0
        %v2502 = vmax.f32 %v2470, 0.0
        %s2503 = scalar_lea.vmem [#allocation3], 24
        %2504 = vst.msk [vmem:[%s2503 + $0x1] sm:$0xff] %vm415, %v2471
        %2505 = vst.msk [vmem:[%s2503 + $0x9] sm:$0xff] %vm415, %v2472
        %2506 = vst.msk [vmem:[%s2503 + $0x19] sm:$0xff] %vm415, %v2473
        %2507 = vst.msk [vmem:[%s2503 + $0x21] sm:$0xff] %vm415, %v2474
        %2508 = vst.msk [vmem:[%s2503 + $0x31] sm:$0xff] %vm415, %v2475
        %2509 = vst.msk [vmem:[%s2503 + $0x39] sm:$0xff] %vm415, %v2476
        %2510 = vst.msk [vmem:[%s2503 + $0x49] sm:$0xff] %vm415, %v2477
        %2511 = vst.msk [vmem:[%s2503 + $0x51] sm:$0xff] %vm415, %v2478
        %2512 = vst.msk [vmem:[%s2503 + $0x61] sm:$0xff] %vm415, %v2479
        %2513 = vst.msk [vmem:[%s2503 + $0x69] sm:$0xff] %vm415, %v2480
        %2514 = vst.msk [vmem:[%s2503 + $0x79] sm:$0xff] %vm415, %v2481
        %2515 = vst.msk [vmem:[%s2503 + $0x81] sm:$0xff] %vm415, %v2482
        %2516 = vst.msk [vmem:[%s2503 + $0x91] sm:$0xff] %vm415, %v2483
        %2517 = vst.msk [vmem:[%s2503 + $0x99] sm:$0xff] %vm415, %v2484
        %2518 = vst.msk [vmem:[%s2503 + $0xa9] sm:$0xff] %vm415, %v2485
        %2519 = vst.msk [vmem:[%s2503 + $0xb1] sm:$0xff] %vm415, %v2486
        %2520 = vst.msk [vmem:[%s2503 + $0xc1] sm:$0xff] %vm415, %v2487
        %2521 = vst.msk [vmem:[%s2503 + $0xc9] sm:$0xff] %vm415, %v2488
        %2522 = vst.msk [vmem:[%s2503 + $0xd9] sm:$0xff] %vm415, %v2489
        %2523 = vst.msk [vmem:[%s2503 + $0xe1] sm:$0xff] %vm415, %v2490
        %2524 = vst.msk [vmem:[%s2503 + $0xf1] sm:$0xff] %vm415, %v2491
        %2525 = vst.msk [vmem:[%s2503 + $0xf9] sm:$0xff] %vm415, %v2492
        %2526 = vst.msk [vmem:[%s2503 + $0x109] sm:$0xff] %vm415, %v2493
        %2527 = vst.msk [vmem:[%s2503 + $0x111] sm:$0xff] %vm415, %v2494
        %2528 = vst.msk [vmem:[%s2503 + $0x121] sm:$0xff] %vm415, %v2495
        %2529 = vst.msk [vmem:[%s2503 + $0x129] sm:$0xff] %vm415, %v2496
        %2530 = vst.msk [vmem:[%s2503 + $0x139] sm:$0xff] %vm415, %v2497
        %2531 = vst.msk [vmem:[%s2503 + $0x141] sm:$0xff] %vm415, %v2498
        %2532 = vst.msk [vmem:[%s2503 + $0x151] sm:$0xff] %vm415, %v2499
        %2533 = vst.msk [vmem:[%s2503 + $0x159] sm:$0xff] %vm415, %v2500
        %2534 = vst.msk [vmem:[%s2503 + $0x169] sm:$0xff] %vm415, %v2501
        %2535 = vst.msk [vmem:[%s2503 + $0x171] sm:$0xff] %vm415, %v2502
        %v2536 = vld [vmem:[#allocation3] sm:$0xff]
        %v2537 = vld [vmem:[#allocation3 + $0x8] sm:$0xff]
        %v2538 = vld [vmem:[#allocation3 + $0x18] sm:$0xff]
        %v2539 = vld [vmem:[#allocation3 + $0x20] sm:$0xff]
        %v2540 = vld [vmem:[#allocation3 + $0x30] sm:$0xff]
        %v2541 = vld [vmem:[#allocation3 + $0x38] sm:$0xff]
        %v2542 = vld [vmem:[#allocation3 + $0x48] sm:$0xff]
        %v2543 = vld [vmem:[#allocation3 + $0x50] sm:$0xff]
        %v2544 = vld [vmem:[#allocation3 + $0x60] sm:$0xff]
        %v2545 = vld [vmem:[#allocation3 + $0x68] sm:$0xff]
        %v2546 = vld [vmem:[#allocation3 + $0x78] sm:$0xff]
        %v2547 = vld [vmem:[#allocation3 + $0x80] sm:$0xff]
        %v2548 = vld [vmem:[#allocation3 + $0x90] sm:$0xff]
        %v2549 = vld [vmem:[#allocation3 + $0x98] sm:$0xff]
        %v2550 = vld [vmem:[#allocation3 + $0xa8] sm:$0xff]
        %v2551 = vld [vmem:[#allocation3 + $0xb0] sm:$0xff]
        %v2552 = vld [vmem:[#allocation3 + $0xc0] sm:$0xff]
        %v2553 = vld [vmem:[#allocation3 + $0xc8] sm:$0xff]
        %v2554 = vld [vmem:[#allocation3 + $0xd8] sm:$0xff]
        %v2555 = vld [vmem:[#allocation3 + $0xe0] sm:$0xff]
        %v2556 = vld [vmem:[#allocation3 + $0xf0] sm:$0xff]
        %v2557 = vld [vmem:[#allocation3 + $0xf8] sm:$0xff]
        %v2558 = vld [vmem:[#allocation3 + $0x108] sm:$0xff]
        %v2559 = vld [vmem:[#allocation3 + $0x110] sm:$0xff]
        %v2560 = vld [vmem:[#allocation3 + $0x120] sm:$0xff]
        %v2561 = vld [vmem:[#allocation3 + $0x128] sm:$0xff]
        %v2562 = vld [vmem:[#allocation3 + $0x138] sm:$0xff]
        %v2563 = vld [vmem:[#allocation3 + $0x140] sm:$0xff]
        %v2564 = vld [vmem:[#allocation3 + $0x150] sm:$0xff]
        %v2565 = vld [vmem:[#allocation3 + $0x158] sm:$0xff]
        %v2566 = vld [vmem:[#allocation3 + $0x168] sm:$0xff]
        %v2567 = vld [vmem:[#allocation3 + $0x170] sm:$0xff]
        %v2568 = vld [vmem:[#allocation3 + $0x1] sm:$0xff]
        %v2569 = vld [vmem:[#allocation3 + $0x9] sm:$0xff]
        %v2570 = vld [vmem:[#allocation3 + $0x19] sm:$0xff]
        %v2571 = vld [vmem:[#allocation3 + $0x21] sm:$0xff]
        %v2572 = vld [vmem:[#allocation3 + $0x31] sm:$0xff]
        %v2573 = vld [vmem:[#allocation3 + $0x39] sm:$0xff]
        %v2574 = vld [vmem:[#allocation3 + $0x49] sm:$0xff]
        %v2575 = vld [vmem:[#allocation3 + $0x51] sm:$0xff]
        %v2576 = vld [vmem:[#allocation3 + $0x61] sm:$0xff]
        %v2577 = vld [vmem:[#allocation3 + $0x69] sm:$0xff]
        %v2578 = vld [vmem:[#allocation3 + $0x79] sm:$0xff]
        %v2579 = vld [vmem:[#allocation3 + $0x81] sm:$0xff]
        %v2580 = vld [vmem:[#allocation3 + $0x91] sm:$0xff]
        %v2581 = vld [vmem:[#allocation3 + $0x99] sm:$0xff]
        %v2582 = vld [vmem:[#allocation3 + $0xa9] sm:$0xff]
        %v2583 = vld [vmem:[#allocation3 + $0xb1] sm:$0xff]
        %v2584 = vld [vmem:[#allocation3 + $0xc1] sm:$0xff]
        %v2585 = vld [vmem:[#allocation3 + $0xc9] sm:$0xff]
        %v2586 = vld [vmem:[#allocation3 + $0xd9] sm:$0xff]
        %v2587 = vld [vmem:[#allocation3 + $0xe1] sm:$0xff]
        %v2588 = vld [vmem:[#allocation3 + $0xf1] sm:$0xff]
        %v2589 = vld [vmem:[#allocation3 + $0xf9] sm:$0xff]
        %v2590 = vld [vmem:[#allocation3 + $0x109] sm:$0xff]
        %v2591 = vld [vmem:[#allocation3 + $0x111] sm:$0xff]
        %v2592 = vld [vmem:[#allocation3 + $0x121] sm:$0xff]
        %v2593 = vld [vmem:[#allocation3 + $0x129] sm:$0xff]
        %v2594 = vld [vmem:[#allocation3 + $0x139] sm:$0xff]
        %v2595 = vld [vmem:[#allocation3 + $0x141] sm:$0xff]
        %v2596 = vld [vmem:[#allocation3 + $0x151] sm:$0xff]
        %v2597 = vld [vmem:[#allocation3 + $0x159] sm:$0xff]
        %v2598 = vld [vmem:[#allocation3 + $0x169] sm:$0xff]
        %v2599 = vld [vmem:[#allocation3 + $0x171] sm:$0xff]
        %v2600 = vld [vmem:[#allocation3 + $0x2] sm:$0xff]
        %v2601 = vld [vmem:[#allocation3 + $0xa] sm:$0xff]
        %v2602 = vld [vmem:[#allocation3 + $0x1a] sm:$0xff]
        %v2603 = vld [vmem:[#allocation3 + $0x22] sm:$0xff]
        %v2604 = vld [vmem:[#allocation3 + $0x32] sm:$0xff]
        %v2605 = vld [vmem:[#allocation3 + $0x3a] sm:$0xff]
        %v2606 = vld [vmem:[#allocation3 + $0x4a] sm:$0xff]
        %v2607 = vld [vmem:[#allocation3 + $0x52] sm:$0xff]
        %v2608 = vld [vmem:[#allocation3 + $0x62] sm:$0xff]
        %v2609 = vld [vmem:[#allocation3 + $0x6a] sm:$0xff]
        %v2610 = vld [vmem:[#allocation3 + $0x7a] sm:$0xff]
        %v2611 = vld [vmem:[#allocation3 + $0x82] sm:$0xff]
        %v2612 = vld [vmem:[#allocation3 + $0x92] sm:$0xff]
        %v2613 = vld [vmem:[#allocation3 + $0x9a] sm:$0xff]
        %v2614 = vld [vmem:[#allocation3 + $0xaa] sm:$0xff]
        %v2615 = vld [vmem:[#allocation3 + $0xb2] sm:$0xff]
        %v2616 = vld [vmem:[#allocation3 + $0xc2] sm:$0xff]
        %v2617 = vld [vmem:[#allocation3 + $0xca] sm:$0xff]
        %v2618 = vld [vmem:[#allocation3 + $0xda] sm:$0xff]
        %v2619 = vld [vmem:[#allocation3 + $0xe2] sm:$0xff]
        %v2620 = vld [vmem:[#allocation3 + $0xf2] sm:$0xff]
        %v2621 = vld [vmem:[#allocation3 + $0xfa] sm:$0xff]
        %v2622 = vld [vmem:[#allocation3 + $0x10a] sm:$0xff]
        %v2623 = vld [vmem:[#allocation3 + $0x112] sm:$0xff]
        %v2624 = vld [vmem:[#allocation3 + $0x122] sm:$0xff]
        %v2625 = vld [vmem:[#allocation3 + $0x12a] sm:$0xff]
        %v2626 = vld [vmem:[#allocation3 + $0x13a] sm:$0xff]
        %v2627 = vld [vmem:[#allocation3 + $0x142] sm:$0xff]
        %v2628 = vld [vmem:[#allocation3 + $0x152] sm:$0xff]
        %v2629 = vld [vmem:[#allocation3 + $0x15a] sm:$0xff]
        %v2630 = vld [vmem:[#allocation3 + $0x16a] sm:$0xff]
        %v2631 = vld [vmem:[#allocation3 + $0x172] sm:$0xff]
        %v2632 = vld [vmem:[%s2503] sm:$0xff]
        %v2633 = vld [vmem:[%s2503 + $0x8] sm:$0xff]
        %v2634 = vld [vmem:[%s2503 + $0x18] sm:$0xff]
        %v2635 = vld [vmem:[%s2503 + $0x20] sm:$0xff]
        %v2636 = vld [vmem:[%s2503 + $0x30] sm:$0xff]
        %v2637 = vld [vmem:[%s2503 + $0x38] sm:$0xff]
        %v2638 = vld [vmem:[%s2503 + $0x48] sm:$0xff]
        %v2639 = vld [vmem:[%s2503 + $0x50] sm:$0xff]
        %v2640 = vld [vmem:[%s2503 + $0x60] sm:$0xff]
        %v2641 = vld [vmem:[%s2503 + $0x68] sm:$0xff]
        %v2642 = vld [vmem:[%s2503 + $0x78] sm:$0xff]
        %v2643 = vld [vmem:[%s2503 + $0x80] sm:$0xff]
        %v2644 = vld [vmem:[%s2503 + $0x90] sm:$0xff]
        %v2645 = vld [vmem:[%s2503 + $0x98] sm:$0xff]
        %v2646 = vld [vmem:[%s2503 + $0xa8] sm:$0xff]
        %v2647 = vld [vmem:[%s2503 + $0xb0] sm:$0xff]
        %v2648 = vld [vmem:[%s2503 + $0xc0] sm:$0xff]
        %v2649 = vld [vmem:[%s2503 + $0xc8] sm:$0xff]
        %v2650 = vld [vmem:[%s2503 + $0xd8] sm:$0xff]
        %v2651 = vld [vmem:[%s2503 + $0xe0] sm:$0xff]
        %v2652 = vld [vmem:[%s2503 + $0xf0] sm:$0xff]
        %v2653 = vld [vmem:[%s2503 + $0xf8] sm:$0xff]
        %v2654 = vld [vmem:[%s2503 + $0x108] sm:$0xff]
        %v2655 = vld [vmem:[%s2503 + $0x110] sm:$0xff]
        %v2656 = vld [vmem:[%s2503 + $0x120] sm:$0xff]
        %v2657 = vld [vmem:[%s2503 + $0x128] sm:$0xff]
        %v2658 = vld [vmem:[%s2503 + $0x138] sm:$0xff]
        %v2659 = vld [vmem:[%s2503 + $0x140] sm:$0xff]
        %v2660 = vld [vmem:[%s2503 + $0x150] sm:$0xff]
        %v2661 = vld [vmem:[%s2503 + $0x158] sm:$0xff]
        %v2662 = vld [vmem:[%s2503 + $0x168] sm:$0xff]
        %v2663 = vld [vmem:[%s2503 + $0x170] sm:$0xff]
        %v2664 = vld [vmem:[%s2503 + $0x1] sm:$0xff]
        %v2665 = vld [vmem:[%s2503 + $0x9] sm:$0xff]
        %v2666 = vld [vmem:[%s2503 + $0x19] sm:$0xff]
        %v2667 = vld [vmem:[%s2503 + $0x21] sm:$0xff]
        %v2668 = vld [vmem:[%s2503 + $0x31] sm:$0xff]
        %v2669 = vld [vmem:[%s2503 + $0x39] sm:$0xff]
        %v2670 = vld [vmem:[%s2503 + $0x49] sm:$0xff]
        %v2671 = vld [vmem:[%s2503 + $0x51] sm:$0xff]
        %v2672 = vld [vmem:[%s2503 + $0x61] sm:$0xff]
        %v2673 = vld [vmem:[%s2503 + $0x69] sm:$0xff]
        %v2674 = vld [vmem:[%s2503 + $0x79] sm:$0xff]
        %v2675 = vld [vmem:[%s2503 + $0x81] sm:$0xff]
        %v2676 = vld [vmem:[%s2503 + $0x91] sm:$0xff]
        %v2677 = vld [vmem:[%s2503 + $0x99] sm:$0xff]
        %v2678 = vld [vmem:[%s2503 + $0xa9] sm:$0xff]
        %v2679 = vld [vmem:[%s2503 + $0xb1] sm:$0xff]
        %v2680 = vld [vmem:[%s2503 + $0xc1] sm:$0xff]
        %v2681 = vld [vmem:[%s2503 + $0xc9] sm:$0xff]
        %v2682 = vld [vmem:[%s2503 + $0xd9] sm:$0xff]
        %v2683 = vld [vmem:[%s2503 + $0xe1] sm:$0xff]
        %v2684 = vld [vmem:[%s2503 + $0xf1] sm:$0xff]
        %v2685 = vld [vmem:[%s2503 + $0xf9] sm:$0xff]
        %v2686 = vld [vmem:[%s2503 + $0x109] sm:$0xff]
        %v2687 = vld [vmem:[%s2503 + $0x111] sm:$0xff]
        %v2688 = vld [vmem:[%s2503 + $0x121] sm:$0xff]
        %v2689 = vld [vmem:[%s2503 + $0x129] sm:$0xff]
        %v2690 = vld [vmem:[%s2503 + $0x139] sm:$0xff]
        %v2691 = vld [vmem:[%s2503 + $0x141] sm:$0xff]
        %v2692 = vld [vmem:[%s2503 + $0x151] sm:$0xff]
        %v2693 = vld [vmem:[%s2503 + $0x159] sm:$0xff]
        %v2694 = vld [vmem:[%s2503 + $0x169] sm:$0xff]
        %v2695 = vld [vmem:[%s2503 + $0x171] sm:$0xff]
        %v2696 = vld [vmem:[%s2503 + $0x2] sm:$0xff]
        %v2697 = vld [vmem:[%s2503 + $0xa] sm:$0xff]
        %v2698 = vld [vmem:[%s2503 + $0x1a] sm:$0xff]
        %v2699 = vld [vmem:[%s2503 + $0x22] sm:$0xff]
        %v2700 = vld [vmem:[%s2503 + $0x32] sm:$0xff]
        %v2701 = vld [vmem:[%s2503 + $0x3a] sm:$0xff]
        %v2702 = vld [vmem:[%s2503 + $0x4a] sm:$0xff]
        %v2703 = vld [vmem:[%s2503 + $0x52] sm:$0xff]
        %v2704 = vld [vmem:[%s2503 + $0x62] sm:$0xff]
        %v2705 = vld [vmem:[%s2503 + $0x6a] sm:$0xff]
        %v2706 = vld [vmem:[%s2503 + $0x7a] sm:$0xff]
        %v2707 = vld [vmem:[%s2503 + $0x82] sm:$0xff]
        %v2708 = vld [vmem:[%s2503 + $0x92] sm:$0xff]
        %v2709 = vld [vmem:[%s2503 + $0x9a] sm:$0xff]
        %v2710 = vld [vmem:[%s2503 + $0xaa] sm:$0xff]
        %v2711 = vld [vmem:[%s2503 + $0xb2] sm:$0xff]
        %v2712 = vld [vmem:[%s2503 + $0xc2] sm:$0xff]
        %v2713 = vld [vmem:[%s2503 + $0xca] sm:$0xff]
        %v2714 = vld [vmem:[%s2503 + $0xda] sm:$0xff]
        %v2715 = vld [vmem:[%s2503 + $0xe2] sm:$0xff]
        %v2716 = vld [vmem:[%s2503 + $0xf2] sm:$0xff]
        %v2717 = vld [vmem:[%s2503 + $0xfa] sm:$0xff]
        %v2718 = vld [vmem:[%s2503 + $0x10a] sm:$0xff]
        %v2719 = vld [vmem:[%s2503 + $0x112] sm:$0xff]
        %v2720 = vld [vmem:[%s2503 + $0x122] sm:$0xff]
        %v2721 = vld [vmem:[%s2503 + $0x12a] sm:$0xff]
        %v2722 = vld [vmem:[%s2503 + $0x13a] sm:$0xff]
        %v2723 = vld [vmem:[%s2503 + $0x142] sm:$0xff]
        %v2724 = vld [vmem:[%s2503 + $0x152] sm:$0xff]
        %v2725 = vld [vmem:[%s2503 + $0x15a] sm:$0xff]
        %v2726 = vld [vmem:[%s2503 + $0x16a] sm:$0xff]
        %v2727 = vld [vmem:[%s2503 + $0x172] sm:$0xff]
        %s2728 = scalar_lea.vmem [#allocation3], 48
        %v2729 = vld [vmem:[%s2728] sm:$0xff]
        %v2730 = vld [vmem:[%s2728 + $0x8] sm:$0xff]
        %v2731 = vld [vmem:[%s2728 + $0x18] sm:$0xff]
        %v2732 = vld [vmem:[%s2728 + $0x20] sm:$0xff]
        %v2733 = vld [vmem:[%s2728 + $0x30] sm:$0xff]
        %v2734 = vld [vmem:[%s2728 + $0x38] sm:$0xff]
        %v2735 = vld [vmem:[%s2728 + $0x48] sm:$0xff]
        %v2736 = vld [vmem:[%s2728 + $0x50] sm:$0xff]
        %v2737 = vld [vmem:[%s2728 + $0x60] sm:$0xff]
        %v2738 = vld [vmem:[%s2728 + $0x68] sm:$0xff]
        %v2739 = vld [vmem:[%s2728 + $0x78] sm:$0xff]
        %v2740 = vld [vmem:[%s2728 + $0x80] sm:$0xff]
        %v2741 = vld [vmem:[%s2728 + $0x90] sm:$0xff]
        %v2742 = vld [vmem:[%s2728 + $0x98] sm:$0xff]
        %v2743 = vld [vmem:[%s2728 + $0xa8] sm:$0xff]
        %v2744 = vld [vmem:[%s2728 + $0xb0] sm:$0xff]
        %v2745 = vld [vmem:[%s2728 + $0xc0] sm:$0xff]
        %v2746 = vld [vmem:[%s2728 + $0xc8] sm:$0xff]
        %v2747 = vld [vmem:[%s2728 + $0xd8] sm:$0xff]
        %v2748 = vld [vmem:[%s2728 + $0xe0] sm:$0xff]
        %v2749 = vld [vmem:[%s2728 + $0xf0] sm:$0xff]
        %v2750 = vld [vmem:[%s2728 + $0xf8] sm:$0xff]
        %v2751 = vld [vmem:[%s2728 + $0x108] sm:$0xff]
        %v2752 = vld [vmem:[%s2728 + $0x110] sm:$0xff]
        %v2753 = vld [vmem:[%s2728 + $0x120] sm:$0xff]
        %v2754 = vld [vmem:[%s2728 + $0x128] sm:$0xff]
        %v2755 = vld [vmem:[%s2728 + $0x138] sm:$0xff]
        %v2756 = vld [vmem:[%s2728 + $0x140] sm:$0xff]
        %v2757 = vld [vmem:[%s2728 + $0x150] sm:$0xff]
        %v2758 = vld [vmem:[%s2728 + $0x158] sm:$0xff]
        %v2759 = vld [vmem:[%s2728 + $0x168] sm:$0xff]
        %v2760 = vld [vmem:[%s2728 + $0x170] sm:$0xff]
        %v2761 = vld [vmem:[%s2728 + $0x1] sm:$0xff]
        %v2762 = vld [vmem:[%s2728 + $0x9] sm:$0xff]
        %v2763 = vld [vmem:[%s2728 + $0x19] sm:$0xff]
        %v2764 = vld [vmem:[%s2728 + $0x21] sm:$0xff]
        %v2765 = vld [vmem:[%s2728 + $0x31] sm:$0xff]
        %v2766 = vld [vmem:[%s2728 + $0x39] sm:$0xff]
        %v2767 = vld [vmem:[%s2728 + $0x49] sm:$0xff]
        %v2768 = vld [vmem:[%s2728 + $0x51] sm:$0xff]
        %v2769 = vld [vmem:[%s2728 + $0x61] sm:$0xff]
        %v2770 = vld [vmem:[%s2728 + $0x69] sm:$0xff]
        %v2771 = vld [vmem:[%s2728 + $0x79] sm:$0xff]
        %v2772 = vld [vmem:[%s2728 + $0x81] sm:$0xff]
        %v2773 = vld [vmem:[%s2728 + $0x91] sm:$0xff]
        %v2774 = vld [vmem:[%s2728 + $0x99] sm:$0xff]
        %v2775 = vld [vmem:[%s2728 + $0xa9] sm:$0xff]
        %v2776 = vld [vmem:[%s2728 + $0xb1] sm:$0xff]
        %v2777 = vld [vmem:[%s2728 + $0xc1] sm:$0xff]
        %v2778 = vld [vmem:[%s2728 + $0xc9] sm:$0xff]
        %v2779 = vld [vmem:[%s2728 + $0xd9] sm:$0xff]
        %v2780 = vld [vmem:[%s2728 + $0xe1] sm:$0xff]
        %v2781 = vld [vmem:[%s2728 + $0xf1] sm:$0xff]
        %v2782 = vld [vmem:[%s2728 + $0xf9] sm:$0xff]
        %v2783 = vld [vmem:[%s2728 + $0x109] sm:$0xff]
        %v2784 = vld [vmem:[%s2728 + $0x111] sm:$0xff]
        %v2785 = vld [vmem:[%s2728 + $0x121] sm:$0xff]
        %v2786 = vld [vmem:[%s2728 + $0x129] sm:$0xff]
        %v2787 = vld [vmem:[%s2728 + $0x139] sm:$0xff]
        %v2788 = vld [vmem:[%s2728 + $0x141] sm:$0xff]
        %v2789 = vld [vmem:[%s2728 + $0x151] sm:$0xff]
        %v2790 = vld [vmem:[%s2728 + $0x159] sm:$0xff]
        %v2791 = vld [vmem:[%s2728 + $0x169] sm:$0xff]
        %v2792 = vld [vmem:[%s2728 + $0x171] sm:$0xff]
        %v2793 = vld [vmem:[%s2728 + $0x2] sm:$0xff]
        %v2794 = vld [vmem:[%s2728 + $0xa] sm:$0xff]
        %v2795 = vld [vmem:[%s2728 + $0x1a] sm:$0xff]
        %v2796 = vld [vmem:[%s2728 + $0x22] sm:$0xff]
        %v2797 = vld [vmem:[%s2728 + $0x32] sm:$0xff]
        %v2798 = vld [vmem:[%s2728 + $0x3a] sm:$0xff]
        %v2799 = vld [vmem:[%s2728 + $0x4a] sm:$0xff]
        %v2800 = vld [vmem:[%s2728 + $0x52] sm:$0xff]
        %v2801 = vld [vmem:[%s2728 + $0x62] sm:$0xff]
        %v2802 = vld [vmem:[%s2728 + $0x6a] sm:$0xff]
        %v2803 = vld [vmem:[%s2728 + $0x7a] sm:$0xff]
        %v2804 = vld [vmem:[%s2728 + $0x82] sm:$0xff]
        %v2805 = vld [vmem:[%s2728 + $0x92] sm:$0xff]
        %v2806 = vld [vmem:[%s2728 + $0x9a] sm:$0xff]
        %v2807 = vld [vmem:[%s2728 + $0xaa] sm:$0xff]
        %v2808 = vld [vmem:[%s2728 + $0xb2] sm:$0xff]
        %v2809 = vld [vmem:[%s2728 + $0xc2] sm:$0xff]
        %v2810 = vld [vmem:[%s2728 + $0xca] sm:$0xff]
        %v2811 = vld [vmem:[%s2728 + $0xda] sm:$0xff]
        %v2812 = vld [vmem:[%s2728 + $0xe2] sm:$0xff]
        %v2813 = vld [vmem:[%s2728 + $0xf2] sm:$0xff]
        %v2814 = vld [vmem:[%s2728 + $0xfa] sm:$0xff]
        %v2815 = vld [vmem:[%s2728 + $0x10a] sm:$0xff]
        %v2816 = vld [vmem:[%s2728 + $0x112] sm:$0xff]
        %v2817 = vld [vmem:[%s2728 + $0x122] sm:$0xff]
        %v2818 = vld [vmem:[%s2728 + $0x12a] sm:$0xff]
        %v2819 = vld [vmem:[%s2728 + $0x13a] sm:$0xff]
        %v2820 = vld [vmem:[%s2728 + $0x142] sm:$0xff]
        %v2821 = vld [vmem:[%s2728 + $0x152] sm:$0xff]
        %v2822 = vld [vmem:[%s2728 + $0x15a] sm:$0xff]
        %v2823 = vld [vmem:[%s2728 + $0x16a] sm:$0xff]
        %v2824 = vld [vmem:[%s2728 + $0x172] sm:$0xff]
        %2857 = vrot.lane.b32.xlu0 %v2568, 8
        %v2858 = vpop.permute.xlu0 %2857
        %2859 = vrot.lane.b32.xlu0 %v2569, 8
        %v2860 = vpop.permute.xlu0 %2859
        %2861 = vrot.lane.b32.xlu0 %v2570, 8
        %v2862 = vpop.permute.xlu0 %2861
        %2863 = vrot.lane.b32.xlu0 %v2571, 8
        %v2864 = vpop.permute.xlu0 %2863
        %2865 = vrot.lane.b32.xlu0 %v2572, 8
        %v2866 = vpop.permute.xlu0 %2865
        %2867 = vrot.lane.b32.xlu0 %v2573, 8
        %v2868 = vpop.permute.xlu0 %2867
        %2869 = vrot.lane.b32.xlu0 %v2574, 8
        %v2870 = vpop.permute.xlu0 %2869
        %2871 = vrot.lane.b32.xlu0 %v2575, 8
        %v2872 = vpop.permute.xlu0 %2871
        %2873 = vrot.lane.b32.xlu0 %v2576, 8
        %v2874 = vpop.permute.xlu0 %2873
        %2875 = vrot.lane.b32.xlu0 %v2577, 8
        %v2876 = vpop.permute.xlu0 %2875
        %2877 = vrot.lane.b32.xlu0 %v2578, 8
        %v2878 = vpop.permute.xlu0 %2877
        %2879 = vrot.lane.b32.xlu0 %v2579, 8
        %v2880 = vpop.permute.xlu0 %2879
        %2881 = vrot.lane.b32.xlu0 %v2580, 8
        %v2882 = vpop.permute.xlu0 %2881
        %2883 = vrot.lane.b32.xlu0 %v2581, 8
        %v2884 = vpop.permute.xlu0 %2883
        %2885 = vrot.lane.b32.xlu0 %v2582, 8
        %v2886 = vpop.permute.xlu0 %2885
        %2887 = vrot.lane.b32.xlu0 %v2583, 8
        %v2888 = vpop.permute.xlu0 %2887
        %2889 = vrot.lane.b32.xlu0 %v2584, 8
        %v2890 = vpop.permute.xlu0 %2889
        %2891 = vrot.lane.b32.xlu0 %v2585, 8
        %v2892 = vpop.permute.xlu0 %2891
        %2893 = vrot.lane.b32.xlu0 %v2586, 8
        %v2894 = vpop.permute.xlu0 %2893
        %2895 = vrot.lane.b32.xlu0 %v2587, 8
        %v2896 = vpop.permute.xlu0 %2895
        %2897 = vrot.lane.b32.xlu0 %v2588, 8
        %v2898 = vpop.permute.xlu0 %2897
        %2899 = vrot.lane.b32.xlu0 %v2589, 8
        %v2900 = vpop.permute.xlu0 %2899
        %2901 = vrot.lane.b32.xlu0 %v2590, 8
        %v2902 = vpop.permute.xlu0 %2901
        %2903 = vrot.lane.b32.xlu0 %v2591, 8
        %v2904 = vpop.permute.xlu0 %2903
        %2905 = vrot.lane.b32.xlu0 %v2592, 8
        %v2906 = vpop.permute.xlu0 %2905
        %2907 = vrot.lane.b32.xlu0 %v2593, 8
        %v2908 = vpop.permute.xlu0 %2907
        %2909 = vrot.lane.b32.xlu0 %v2594, 8
        %v2910 = vpop.permute.xlu0 %2909
        %2911 = vrot.lane.b32.xlu0 %v2595, 8
        %v2912 = vpop.permute.xlu0 %2911
        %2913 = vrot.lane.b32.xlu0 %v2596, 8
        %v2914 = vpop.permute.xlu0 %2913
        %2915 = vrot.lane.b32.xlu0 %v2597, 8
        %v2916 = vpop.permute.xlu0 %2915
        %2917 = vrot.lane.b32.xlu0 %v2598, 8
        %v2918 = vpop.permute.xlu0 %2917
        %2919 = vrot.lane.b32.xlu0 %v2599, 8
        %v2920 = vpop.permute.xlu0 %2919
        %2985 = vrot.lane.b32.xlu0 %v2600, 16
        %v2986 = vpop.permute.xlu0 %2985
        %2987 = vrot.lane.b32.xlu0 %v2601, 16
        %v2988 = vpop.permute.xlu0 %2987
        %2989 = vrot.lane.b32.xlu0 %v2602, 16
        %v2990 = vpop.permute.xlu0 %2989
        %2991 = vrot.lane.b32.xlu0 %v2603, 16
        %v2992 = vpop.permute.xlu0 %2991
        %2993 = vrot.lane.b32.xlu0 %v2604, 16
        %v2994 = vpop.permute.xlu0 %2993
        %2995 = vrot.lane.b32.xlu0 %v2605, 16
        %v2996 = vpop.permute.xlu0 %2995
        %2997 = vrot.lane.b32.xlu0 %v2606, 16
        %v2998 = vpop.permute.xlu0 %2997
        %2999 = vrot.lane.b32.xlu0 %v2607, 16
        %v3000 = vpop.permute.xlu0 %2999
        %3001 = vrot.lane.b32.xlu0 %v2608, 16
        %v3002 = vpop.permute.xlu0 %3001
        %3003 = vrot.lane.b32.xlu0 %v2609, 16
        %v3004 = vpop.permute.xlu0 %3003
        %3005 = vrot.lane.b32.xlu0 %v2610, 16
        %v3006 = vpop.permute.xlu0 %3005
        %3007 = vrot.lane.b32.xlu0 %v2611, 16
        %v3008 = vpop.permute.xlu0 %3007
        %3009 = vrot.lane.b32.xlu0 %v2612, 16
        %v3010 = vpop.permute.xlu0 %3009
        %3011 = vrot.lane.b32.xlu0 %v2613, 16
        %v3012 = vpop.permute.xlu0 %3011
        %3013 = vrot.lane.b32.xlu0 %v2614, 16
        %v3014 = vpop.permute.xlu0 %3013
        %3015 = vrot.lane.b32.xlu0 %v2615, 16
        %v3016 = vpop.permute.xlu0 %3015
        %3017 = vrot.lane.b32.xlu0 %v2616, 16
        %v3018 = vpop.permute.xlu0 %3017
        %3019 = vrot.lane.b32.xlu0 %v2617, 16
        %v3020 = vpop.permute.xlu0 %3019
        %3021 = vrot.lane.b32.xlu0 %v2618, 16
        %v3022 = vpop.permute.xlu0 %3021
        %3023 = vrot.lane.b32.xlu0 %v2619, 16
        %v3024 = vpop.permute.xlu0 %3023
        %3025 = vrot.lane.b32.xlu0 %v2620, 16
        %v3026 = vpop.permute.xlu0 %3025
        %3027 = vrot.lane.b32.xlu0 %v2621, 16
        %v3028 = vpop.permute.xlu0 %3027
        %3029 = vrot.lane.b32.xlu0 %v2622, 16
        %v3030 = vpop.permute.xlu0 %3029
        %3031 = vrot.lane.b32.xlu0 %v2623, 16
        %v3032 = vpop.permute.xlu0 %3031
        %3033 = vrot.lane.b32.xlu0 %v2624, 16
        %v3034 = vpop.permute.xlu0 %3033
        %3035 = vrot.lane.b32.xlu0 %v2625, 16
        %v3036 = vpop.permute.xlu0 %3035
        %3037 = vrot.lane.b32.xlu0 %v2626, 16
        %v3038 = vpop.permute.xlu0 %3037
        %3039 = vrot.lane.b32.xlu0 %v2627, 16
        %v3040 = vpop.permute.xlu0 %3039
        %3041 = vrot.lane.b32.xlu0 %v2628, 16
        %v3042 = vpop.permute.xlu0 %3041
        %3043 = vrot.lane.b32.xlu0 %v2629, 16
        %v3044 = vpop.permute.xlu0 %3043
        %3045 = vrot.lane.b32.xlu0 %v2630, 16
        %v3046 = vpop.permute.xlu0 %3045
        %3047 = vrot.lane.b32.xlu0 %v2631, 16
        %v3048 = vpop.permute.xlu0 %3047
        %3113 = vrot.lane.b32.xlu0 %v2632, 24
        %v3114 = vpop.permute.xlu0 %3113
        %3115 = vrot.lane.b32.xlu0 %v2633, 24
        %v3116 = vpop.permute.xlu0 %3115
        %3117 = vrot.lane.b32.xlu0 %v2634, 24
        %v3118 = vpop.permute.xlu0 %3117
        %3119 = vrot.lane.b32.xlu0 %v2635, 24
        %v3120 = vpop.permute.xlu0 %3119
        %3121 = vrot.lane.b32.xlu0 %v2636, 24
        %v3122 = vpop.permute.xlu0 %3121
        %3123 = vrot.lane.b32.xlu0 %v2637, 24
        %v3124 = vpop.permute.xlu0 %3123
        %3125 = vrot.lane.b32.xlu0 %v2638, 24
        %v3126 = vpop.permute.xlu0 %3125
        %3127 = vrot.lane.b32.xlu0 %v2639, 24
        %v3128 = vpop.permute.xlu0 %3127
        %3129 = vrot.lane.b32.xlu0 %v2640, 24
        %v3130 = vpop.permute.xlu0 %3129
        %3131 = vrot.lane.b32.xlu0 %v2641, 24
        %v3132 = vpop.permute.xlu0 %3131
        %3133 = vrot.lane.b32.xlu0 %v2642, 24
        %v3134 = vpop.permute.xlu0 %3133
        %3135 = vrot.lane.b32.xlu0 %v2643, 24
        %v3136 = vpop.permute.xlu0 %3135
        %3137 = vrot.lane.b32.xlu0 %v2644, 24
        %v3138 = vpop.permute.xlu0 %3137
        %3139 = vrot.lane.b32.xlu0 %v2645, 24
        %v3140 = vpop.permute.xlu0 %3139
        %3141 = vrot.lane.b32.xlu0 %v2646, 24
        %v3142 = vpop.permute.xlu0 %3141
        %3143 = vrot.lane.b32.xlu0 %v2647, 24
        %v3144 = vpop.permute.xlu0 %3143
        %3145 = vrot.lane.b32.xlu0 %v2648, 24
        %v3146 = vpop.permute.xlu0 %3145
        %3147 = vrot.lane.b32.xlu0 %v2649, 24
        %v3148 = vpop.permute.xlu0 %3147
        %3149 = vrot.lane.b32.xlu0 %v2650, 24
        %v3150 = vpop.permute.xlu0 %3149
        %3151 = vrot.lane.b32.xlu0 %v2651, 24
        %v3152 = vpop.permute.xlu0 %3151
        %3153 = vrot.lane.b32.xlu0 %v2652, 24
        %v3154 = vpop.permute.xlu0 %3153
        %3155 = vrot.lane.b32.xlu0 %v2653, 24
        %v3156 = vpop.permute.xlu0 %3155
        %3157 = vrot.lane.b32.xlu0 %v2654, 24
        %v3158 = vpop.permute.xlu0 %3157
        %3159 = vrot.lane.b32.xlu0 %v2655, 24
        %v3160 = vpop.permute.xlu0 %3159
        %3161 = vrot.lane.b32.xlu0 %v2656, 24
        %v3162 = vpop.permute.xlu0 %3161
        %3163 = vrot.lane.b32.xlu0 %v2657, 24
        %v3164 = vpop.permute.xlu0 %3163
        %3165 = vrot.lane.b32.xlu0 %v2658, 24
        %v3166 = vpop.permute.xlu0 %3165
        %3167 = vrot.lane.b32.xlu0 %v2659, 24
        %v3168 = vpop.permute.xlu0 %3167
        %3169 = vrot.lane.b32.xlu0 %v2660, 24
        %v3170 = vpop.permute.xlu0 %3169
        %3171 = vrot.lane.b32.xlu0 %v2661, 24
        %v3172 = vpop.permute.xlu0 %3171
        %3173 = vrot.lane.b32.xlu0 %v2662, 24
        %v3174 = vpop.permute.xlu0 %3173
        %3175 = vrot.lane.b32.xlu0 %v2663, 24
        %v3176 = vpop.permute.xlu0 %3175
        %3241 = vrot.lane.b32.xlu0 %v2664, 32
        %v3242 = vpop.permute.xlu0 %3241
        %3243 = vrot.lane.b32.xlu0 %v2665, 32
        %v3244 = vpop.permute.xlu0 %3243
        %3245 = vrot.lane.b32.xlu0 %v2666, 32
        %v3246 = vpop.permute.xlu0 %3245
        %3247 = vrot.lane.b32.xlu0 %v2667, 32
        %v3248 = vpop.permute.xlu0 %3247
        %3249 = vrot.lane.b32.xlu0 %v2668, 32
        %v3250 = vpop.permute.xlu0 %3249
        %3251 = vrot.lane.b32.xlu0 %v2669, 32
        %v3252 = vpop.permute.xlu0 %3251
        %3253 = vrot.lane.b32.xlu0 %v2670, 32
        %v3254 = vpop.permute.xlu0 %3253
        %3255 = vrot.lane.b32.xlu0 %v2671, 32
        %v3256 = vpop.permute.xlu0 %3255
        %3257 = vrot.lane.b32.xlu0 %v2672, 32
        %v3258 = vpop.permute.xlu0 %3257
        %3259 = vrot.lane.b32.xlu0 %v2673, 32
        %v3260 = vpop.permute.xlu0 %3259
        %3261 = vrot.lane.b32.xlu0 %v2674, 32
        %v3262 = vpop.permute.xlu0 %3261
        %3263 = vrot.lane.b32.xlu0 %v2675, 32
        %v3264 = vpop.permute.xlu0 %3263
        %3265 = vrot.lane.b32.xlu0 %v2676, 32
        %v3266 = vpop.permute.xlu0 %3265
        %3267 = vrot.lane.b32.xlu0 %v2677, 32
        %v3268 = vpop.permute.xlu0 %3267
        %3269 = vrot.lane.b32.xlu0 %v2678, 32
        %v3270 = vpop.permute.xlu0 %3269
        %3271 = vrot.lane.b32.xlu0 %v2679, 32
        %v3272 = vpop.permute.xlu0 %3271
        %3273 = vrot.lane.b32.xlu0 %v2680, 32
        %v3274 = vpop.permute.xlu0 %3273
        %3275 = vrot.lane.b32.xlu0 %v2681, 32
        %v3276 = vpop.permute.xlu0 %3275
        %3277 = vrot.lane.b32.xlu0 %v2682, 32
        %v3278 = vpop.permute.xlu0 %3277
        %3279 = vrot.lane.b32.xlu0 %v2683, 32
        %v3280 = vpop.permute.xlu0 %3279
        %3281 = vrot.lane.b32.xlu0 %v2684, 32
        %v3282 = vpop.permute.xlu0 %3281
        %3283 = vrot.lane.b32.xlu0 %v2685, 32
        %v3284 = vpop.permute.xlu0 %3283
        %3285 = vrot.lane.b32.xlu0 %v2686, 32
        %v3286 = vpop.permute.xlu0 %3285
        %3287 = vrot.lane.b32.xlu0 %v2687, 32
        %v3288 = vpop.permute.xlu0 %3287
        %3289 = vrot.lane.b32.xlu0 %v2688, 32
        %v3290 = vpop.permute.xlu0 %3289
        %3291 = vrot.lane.b32.xlu0 %v2689, 32
        %v3292 = vpop.permute.xlu0 %3291
        %3293 = vrot.lane.b32.xlu0 %v2690, 32
        %v3294 = vpop.permute.xlu0 %3293
        %3295 = vrot.lane.b32.xlu0 %v2691, 32
        %v3296 = vpop.permute.xlu0 %3295
        %3297 = vrot.lane.b32.xlu0 %v2692, 32
        %v3298 = vpop.permute.xlu0 %3297
        %3299 = vrot.lane.b32.xlu0 %v2693, 32
        %v3300 = vpop.permute.xlu0 %3299
        %3301 = vrot.lane.b32.xlu0 %v2694, 32
        %v3302 = vpop.permute.xlu0 %3301
        %3303 = vrot.lane.b32.xlu0 %v2695, 32
        %v3304 = vpop.permute.xlu0 %3303
        %3369 = vrot.lane.b32.xlu0 %v2696, 40
        %v3370 = vpop.permute.xlu0 %3369
        %3371 = vrot.lane.b32.xlu0 %v2697, 40
        %v3372 = vpop.permute.xlu0 %3371
        %3373 = vrot.lane.b32.xlu0 %v2698, 40
        %v3374 = vpop.permute.xlu0 %3373
        %3375 = vrot.lane.b32.xlu0 %v2699, 40
        %v3376 = vpop.permute.xlu0 %3375
        %3377 = vrot.lane.b32.xlu0 %v2700, 40
        %v3378 = vpop.permute.xlu0 %3377
        %3379 = vrot.lane.b32.xlu0 %v2701, 40
        %v3380 = vpop.permute.xlu0 %3379
        %3381 = vrot.lane.b32.xlu0 %v2702, 40
        %v3382 = vpop.permute.xlu0 %3381
        %3383 = vrot.lane.b32.xlu0 %v2703, 40
        %v3384 = vpop.permute.xlu0 %3383
        %3385 = vrot.lane.b32.xlu0 %v2704, 40
        %v3386 = vpop.permute.xlu0 %3385
        %3387 = vrot.lane.b32.xlu0 %v2705, 40
        %v3388 = vpop.permute.xlu0 %3387
        %3389 = vrot.lane.b32.xlu0 %v2706, 40
        %v3390 = vpop.permute.xlu0 %3389
        %3391 = vrot.lane.b32.xlu0 %v2707, 40
        %v3392 = vpop.permute.xlu0 %3391
        %3393 = vrot.lane.b32.xlu0 %v2708, 40
        %v3394 = vpop.permute.xlu0 %3393
        %3395 = vrot.lane.b32.xlu0 %v2709, 40
        %v3396 = vpop.permute.xlu0 %3395
        %3397 = vrot.lane.b32.xlu0 %v2710, 40
        %v3398 = vpop.permute.xlu0 %3397
        %3399 = vrot.lane.b32.xlu0 %v2711, 40
        %v3400 = vpop.permute.xlu0 %3399
        %3401 = vrot.lane.b32.xlu0 %v2712, 40
        %v3402 = vpop.permute.xlu0 %3401
        %3403 = vrot.lane.b32.xlu0 %v2713, 40
        %v3404 = vpop.permute.xlu0 %3403
        %3405 = vrot.lane.b32.xlu0 %v2714, 40
        %v3406 = vpop.permute.xlu0 %3405
        %3407 = vrot.lane.b32.xlu0 %v2715, 40
        %v3408 = vpop.permute.xlu0 %3407
        %3409 = vrot.lane.b32.xlu0 %v2716, 40
        %v3410 = vpop.permute.xlu0 %3409
        %3411 = vrot.lane.b32.xlu0 %v2717, 40
        %v3412 = vpop.permute.xlu0 %3411
        %3413 = vrot.lane.b32.xlu0 %v2718, 40
        %v3414 = vpop.permute.xlu0 %3413
        %3415 = vrot.lane.b32.xlu0 %v2719, 40
        %v3416 = vpop.permute.xlu0 %3415
        %3417 = vrot.lane.b32.xlu0 %v2720, 40
        %v3418 = vpop.permute.xlu0 %3417
        %3419 = vrot.lane.b32.xlu0 %v2721, 40
        %v3420 = vpop.permute.xlu0 %3419
        %3421 = vrot.lane.b32.xlu0 %v2722, 40
        %v3422 = vpop.permute.xlu0 %3421
        %3423 = vrot.lane.b32.xlu0 %v2723, 40
        %v3424 = vpop.permute.xlu0 %3423
        %3425 = vrot.lane.b32.xlu0 %v2724, 40
        %v3426 = vpop.permute.xlu0 %3425
        %3427 = vrot.lane.b32.xlu0 %v2725, 40
        %v3428 = vpop.permute.xlu0 %3427
        %3429 = vrot.lane.b32.xlu0 %v2726, 40
        %v3430 = vpop.permute.xlu0 %3429
        %3431 = vrot.lane.b32.xlu0 %v2727, 40
        %v3432 = vpop.permute.xlu0 %3431
        %3497 = vrot.lane.b32.xlu0 %v2729, 48
        %v3498 = vpop.permute.xlu0 %3497
        %3499 = vrot.lane.b32.xlu0 %v2730, 48
        %v3500 = vpop.permute.xlu0 %3499
        %3501 = vrot.lane.b32.xlu0 %v2731, 48
        %v3502 = vpop.permute.xlu0 %3501
        %3503 = vrot.lane.b32.xlu0 %v2732, 48
        %v3504 = vpop.permute.xlu0 %3503
        %3505 = vrot.lane.b32.xlu0 %v2733, 48
        %v3506 = vpop.permute.xlu0 %3505
        %3507 = vrot.lane.b32.xlu0 %v2734, 48
        %v3508 = vpop.permute.xlu0 %3507
        %3509 = vrot.lane.b32.xlu0 %v2735, 48
        %v3510 = vpop.permute.xlu0 %3509
        %3511 = vrot.lane.b32.xlu0 %v2736, 48
        %v3512 = vpop.permute.xlu0 %3511
        %3513 = vrot.lane.b32.xlu0 %v2737, 48
        %v3514 = vpop.permute.xlu0 %3513
        %3515 = vrot.lane.b32.xlu0 %v2738, 48
        %v3516 = vpop.permute.xlu0 %3515
        %3517 = vrot.lane.b32.xlu0 %v2739, 48
        %v3518 = vpop.permute.xlu0 %3517
        %3519 = vrot.lane.b32.xlu0 %v2740, 48
        %v3520 = vpop.permute.xlu0 %3519
        %3521 = vrot.lane.b32.xlu0 %v2741, 48
        %v3522 = vpop.permute.xlu0 %3521
        %3523 = vrot.lane.b32.xlu0 %v2742, 48
        %v3524 = vpop.permute.xlu0 %3523
        %3525 = vrot.lane.b32.xlu0 %v2743, 48
        %v3526 = vpop.permute.xlu0 %3525
        %3527 = vrot.lane.b32.xlu0 %v2744, 48
        %v3528 = vpop.permute.xlu0 %3527
        %3529 = vrot.lane.b32.xlu0 %v2745, 48
        %v3530 = vpop.permute.xlu0 %3529
        %3531 = vrot.lane.b32.xlu0 %v2746, 48
        %v3532 = vpop.permute.xlu0 %3531
        %3533 = vrot.lane.b32.xlu0 %v2747, 48
        %v3534 = vpop.permute.xlu0 %3533
        %3535 = vrot.lane.b32.xlu0 %v2748, 48
        %v3536 = vpop.permute.xlu0 %3535
        %3537 = vrot.lane.b32.xlu0 %v2749, 48
        %v3538 = vpop.permute.xlu0 %3537
        %3539 = vrot.lane.b32.xlu0 %v2750, 48
        %v3540 = vpop.permute.xlu0 %3539
        %3541 = vrot.lane.b32.xlu0 %v2751, 48
        %v3542 = vpop.permute.xlu0 %3541
        %3543 = vrot.lane.b32.xlu0 %v2752, 48
        %v3544 = vpop.permute.xlu0 %3543
        %3545 = vrot.lane.b32.xlu0 %v2753, 48
        %v3546 = vpop.permute.xlu0 %3545
        %3547 = vrot.lane.b32.xlu0 %v2754, 48
        %v3548 = vpop.permute.xlu0 %3547
        %3549 = vrot.lane.b32.xlu0 %v2755, 48
        %v3550 = vpop.permute.xlu0 %3549
        %3551 = vrot.lane.b32.xlu0 %v2756, 48
        %v3552 = vpop.permute.xlu0 %3551
        %3553 = vrot.lane.b32.xlu0 %v2757, 48
        %v3554 = vpop.permute.xlu0 %3553
        %3555 = vrot.lane.b32.xlu0 %v2758, 48
        %v3556 = vpop.permute.xlu0 %3555
        %3557 = vrot.lane.b32.xlu0 %v2759, 48
        %v3558 = vpop.permute.xlu0 %3557
        %3559 = vrot.lane.b32.xlu0 %v2760, 48
        %v3560 = vpop.permute.xlu0 %3559
        %3625 = vrot.lane.b32.xlu0 %v2761, 56
        %v3626 = vpop.permute.xlu0 %3625
        %3627 = vrot.lane.b32.xlu0 %v2762, 56
        %v3628 = vpop.permute.xlu0 %3627
        %3629 = vrot.lane.b32.xlu0 %v2763, 56
        %v3630 = vpop.permute.xlu0 %3629
        %3631 = vrot.lane.b32.xlu0 %v2764, 56
        %v3632 = vpop.permute.xlu0 %3631
        %3633 = vrot.lane.b32.xlu0 %v2765, 56
        %v3634 = vpop.permute.xlu0 %3633
        %3635 = vrot.lane.b32.xlu0 %v2766, 56
        %v3636 = vpop.permute.xlu0 %3635
        %3637 = vrot.lane.b32.xlu0 %v2767, 56
        %v3638 = vpop.permute.xlu0 %3637
        %3639 = vrot.lane.b32.xlu0 %v2768, 56
        %v3640 = vpop.permute.xlu0 %3639
        %3641 = vrot.lane.b32.xlu0 %v2769, 56
        %v3642 = vpop.permute.xlu0 %3641
        %3643 = vrot.lane.b32.xlu0 %v2770, 56
        %v3644 = vpop.permute.xlu0 %3643
        %3645 = vrot.lane.b32.xlu0 %v2771, 56
        %v3646 = vpop.permute.xlu0 %3645
        %3647 = vrot.lane.b32.xlu0 %v2772, 56
        %v3648 = vpop.permute.xlu0 %3647
        %3649 = vrot.lane.b32.xlu0 %v2773, 56
        %v3650 = vpop.permute.xlu0 %3649
        %3651 = vrot.lane.b32.xlu0 %v2774, 56
        %v3652 = vpop.permute.xlu0 %3651
        %3653 = vrot.lane.b32.xlu0 %v2775, 56
        %v3654 = vpop.permute.xlu0 %3653
        %3655 = vrot.lane.b32.xlu0 %v2776, 56
        %v3656 = vpop.permute.xlu0 %3655
        %3657 = vrot.lane.b32.xlu0 %v2777, 56
        %v3658 = vpop.permute.xlu0 %3657
        %3659 = vrot.lane.b32.xlu0 %v2778, 56
        %v3660 = vpop.permute.xlu0 %3659
        %3661 = vrot.lane.b32.xlu0 %v2779, 56
        %v3662 = vpop.permute.xlu0 %3661
        %3663 = vrot.lane.b32.xlu0 %v2780, 56
        %v3664 = vpop.permute.xlu0 %3663
        %3665 = vrot.lane.b32.xlu0 %v2781, 56
        %v3666 = vpop.permute.xlu0 %3665
        %3667 = vrot.lane.b32.xlu0 %v2782, 56
        %v3668 = vpop.permute.xlu0 %3667
        %3669 = vrot.lane.b32.xlu0 %v2783, 56
        %v3670 = vpop.permute.xlu0 %3669
        %3671 = vrot.lane.b32.xlu0 %v2784, 56
        %v3672 = vpop.permute.xlu0 %3671
        %3673 = vrot.lane.b32.xlu0 %v2785, 56
        %v3674 = vpop.permute.xlu0 %3673
        %3675 = vrot.lane.b32.xlu0 %v2786, 56
        %v3676 = vpop.permute.xlu0 %3675
        %3677 = vrot.lane.b32.xlu0 %v2787, 56
        %v3678 = vpop.permute.xlu0 %3677
        %3679 = vrot.lane.b32.xlu0 %v2788, 56
        %v3680 = vpop.permute.xlu0 %3679
        %3681 = vrot.lane.b32.xlu0 %v2789, 56
        %v3682 = vpop.permute.xlu0 %3681
        %3683 = vrot.lane.b32.xlu0 %v2790, 56
        %v3684 = vpop.permute.xlu0 %3683
        %3685 = vrot.lane.b32.xlu0 %v2791, 56
        %v3686 = vpop.permute.xlu0 %3685
        %3687 = vrot.lane.b32.xlu0 %v2792, 56
        %v3688 = vpop.permute.xlu0 %3687
        %3753 = vrot.lane.b32.xlu0 %v2793, 64
        %v3754 = vpop.permute.xlu0 %3753
        %3755 = vrot.lane.b32.xlu0 %v2794, 64
        %v3756 = vpop.permute.xlu0 %3755
        %3757 = vrot.lane.b32.xlu0 %v2795, 64
        %v3758 = vpop.permute.xlu0 %3757
        %3759 = vrot.lane.b32.xlu0 %v2796, 64
        %v3760 = vpop.permute.xlu0 %3759
        %3761 = vrot.lane.b32.xlu0 %v2797, 64
        %v3762 = vpop.permute.xlu0 %3761
        %3763 = vrot.lane.b32.xlu0 %v2798, 64
        %v3764 = vpop.permute.xlu0 %3763
        %3765 = vrot.lane.b32.xlu0 %v2799, 64
        %v3766 = vpop.permute.xlu0 %3765
        %3767 = vrot.lane.b32.xlu0 %v2800, 64
        %v3768 = vpop.permute.xlu0 %3767
        %3769 = vrot.lane.b32.xlu0 %v2801, 64
        %v3770 = vpop.permute.xlu0 %3769
        %3771 = vrot.lane.b32.xlu0 %v2802, 64
        %v3772 = vpop.permute.xlu0 %3771
        %3773 = vrot.lane.b32.xlu0 %v2803, 64
        %v3774 = vpop.permute.xlu0 %3773
        %3775 = vrot.lane.b32.xlu0 %v2804, 64
        %v3776 = vpop.permute.xlu0 %3775
        %3777 = vrot.lane.b32.xlu0 %v2805, 64
        %v3778 = vpop.permute.xlu0 %3777
        %3779 = vrot.lane.b32.xlu0 %v2806, 64
        %v3780 = vpop.permute.xlu0 %3779
        %3781 = vrot.lane.b32.xlu0 %v2807, 64
        %v3782 = vpop.permute.xlu0 %3781
        %3783 = vrot.lane.b32.xlu0 %v2808, 64
        %v3784 = vpop.permute.xlu0 %3783
        %3785 = vrot.lane.b32.xlu0 %v2809, 64
        %v3786 = vpop.permute.xlu0 %3785
        %3787 = vrot.lane.b32.xlu0 %v2810, 64
        %v3788 = vpop.permute.xlu0 %3787
        %3789 = vrot.lane.b32.xlu0 %v2811, 64
        %v3790 = vpop.permute.xlu0 %3789
        %3791 = vrot.lane.b32.xlu0 %v2812, 64
        %v3792 = vpop.permute.xlu0 %3791
        %3793 = vrot.lane.b32.xlu0 %v2813, 64
        %v3794 = vpop.permute.xlu0 %3793
        %3795 = vrot.lane.b32.xlu0 %v2814, 64
        %v3796 = vpop.permute.xlu0 %3795
        %3797 = vrot.lane.b32.xlu0 %v2815, 64
        %v3798 = vpop.permute.xlu0 %3797
        %3799 = vrot.lane.b32.xlu0 %v2816, 64
        %v3800 = vpop.permute.xlu0 %3799
        %3801 = vrot.lane.b32.xlu0 %v2817, 64
        %v3802 = vpop.permute.xlu0 %3801
        %3803 = vrot.lane.b32.xlu0 %v2818, 64
        %v3804 = vpop.permute.xlu0 %3803
        %3805 = vrot.lane.b32.xlu0 %v2819, 64
        %v3806 = vpop.permute.xlu0 %3805
        %3807 = vrot.lane.b32.xlu0 %v2820, 64
        %v3808 = vpop.permute.xlu0 %3807
        %3809 = vrot.lane.b32.xlu0 %v2821, 64
        %v3810 = vpop.permute.xlu0 %3809
        %3811 = vrot.lane.b32.xlu0 %v2822, 64
        %v3812 = vpop.permute.xlu0 %3811
        %3813 = vrot.lane.b32.xlu0 %v2823, 64
        %v3814 = vpop.permute.xlu0 %3813
        %3815 = vrot.lane.b32.xlu0 %v2824, 64
        %v3816 = vpop.permute.xlu0 %3815
        %v3849 = vsel %vm415, %v2536, %v2858
        %v3850 = vsel %vm415, %v2537, %v2860
        %v3851 = vsel %vm415, %v2538, %v2862
        %v3852 = vsel %vm415, %v2539, %v2864
        %v3853 = vsel %vm415, %v2540, %v2866
        %v3854 = vsel %vm415, %v2541, %v2868
        %v3855 = vsel %vm415, %v2542, %v2870
        %v3856 = vsel %vm415, %v2543, %v2872
        %v3857 = vsel %vm415, %v2544, %v2874
        %v3858 = vsel %vm415, %v2545, %v2876
        %v3859 = vsel %vm415, %v2546, %v2878
        %v3860 = vsel %vm415, %v2547, %v2880
        %v3861 = vsel %vm415, %v2548, %v2882
        %v3862 = vsel %vm415, %v2549, %v2884
        %v3863 = vsel %vm415, %v2550, %v2886
        %v3864 = vsel %vm415, %v2551, %v2888
        %v3865 = vsel %vm415, %v2552, %v2890
        %v3866 = vsel %vm415, %v2553, %v2892
        %v3867 = vsel %vm415, %v2554, %v2894
        %v3868 = vsel %vm415, %v2555, %v2896
        %v3869 = vsel %vm415, %v2556, %v2898
        %v3870 = vsel %vm415, %v2557, %v2900
        %v3871 = vsel %vm415, %v2558, %v2902
        %v3872 = vsel %vm415, %v2559, %v2904
        %v3873 = vsel %vm415, %v2560, %v2906
        %v3874 = vsel %vm415, %v2561, %v2908
        %v3875 = vsel %vm415, %v2562, %v2910
        %v3876 = vsel %vm415, %v2563, %v2912
        %v3877 = vsel %vm415, %v2564, %v2914
        %v3878 = vsel %vm415, %v2565, %v2916
        %v3879 = vsel %vm415, %v2566, %v2918
        %v3880 = vsel %vm415, %v2567, %v2920
        %v3881 = vsel %vm1978, %v3849, %v2986
        %v3882 = vsel %vm1978, %v3850, %v2988
        %v3883 = vsel %vm1978, %v3851, %v2990
        %v3884 = vsel %vm1978, %v3852, %v2992
        %v3885 = vsel %vm1978, %v3853, %v2994
        %v3886 = vsel %vm1978, %v3854, %v2996
        %v3887 = vsel %vm1978, %v3855, %v2998
        %v3888 = vsel %vm1978, %v3856, %v3000
        %v3889 = vsel %vm1978, %v3857, %v3002
        %v3890 = vsel %vm1978, %v3858, %v3004
        %v3891 = vsel %vm1978, %v3859, %v3006
        %v3892 = vsel %vm1978, %v3860, %v3008
        %v3893 = vsel %vm1978, %v3861, %v3010
        %v3894 = vsel %vm1978, %v3862, %v3012
        %v3895 = vsel %vm1978, %v3863, %v3014
        %v3896 = vsel %vm1978, %v3864, %v3016
        %v3897 = vsel %vm1978, %v3865, %v3018
        %v3898 = vsel %vm1978, %v3866, %v3020
        %v3899 = vsel %vm1978, %v3867, %v3022
        %v3900 = vsel %vm1978, %v3868, %v3024
        %v3901 = vsel %vm1978, %v3869, %v3026
        %v3902 = vsel %vm1978, %v3870, %v3028
        %v3903 = vsel %vm1978, %v3871, %v3030
        %v3904 = vsel %vm1978, %v3872, %v3032
        %v3905 = vsel %vm1978, %v3873, %v3034
        %v3906 = vsel %vm1978, %v3874, %v3036
        %v3907 = vsel %vm1978, %v3875, %v3038
        %v3908 = vsel %vm1978, %v3876, %v3040
        %v3909 = vsel %vm1978, %v3877, %v3042
        %v3910 = vsel %vm1978, %v3878, %v3044
        %v3911 = vsel %vm1978, %v3879, %v3046
        %v3912 = vsel %vm1978, %v3880, %v3048
        %v3913 = vsel %vm2044, %v3881, %v3114
        %v3914 = vsel %vm2044, %v3882, %v3116
        %v3915 = vsel %vm2044, %v3883, %v3118
        %v3916 = vsel %vm2044, %v3884, %v3120
        %v3917 = vsel %vm2044, %v3885, %v3122
        %v3918 = vsel %vm2044, %v3886, %v3124
        %v3919 = vsel %vm2044, %v3887, %v3126
        %v3920 = vsel %vm2044, %v3888, %v3128
        %v3921 = vsel %vm2044, %v3889, %v3130
        %v3922 = vsel %vm2044, %v3890, %v3132
        %v3923 = vsel %vm2044, %v3891, %v3134
        %v3924 = vsel %vm2044, %v3892, %v3136
        %v3925 = vsel %vm2044, %v3893, %v3138
        %v3926 = vsel %vm2044, %v3894, %v3140
        %v3927 = vsel %vm2044, %v3895, %v3142
        %v3928 = vsel %vm2044, %v3896, %v3144
        %v3929 = vsel %vm2044, %v3897, %v3146
        %v3930 = vsel %vm2044, %v3898, %v3148
        %v3931 = vsel %vm2044, %v3899, %v3150
        %v3932 = vsel %vm2044, %v3900, %v3152
        %v3933 = vsel %vm2044, %v3901, %v3154
        %v3934 = vsel %vm2044, %v3902, %v3156
        %v3935 = vsel %vm2044, %v3903, %v3158
        %v3936 = vsel %vm2044, %v3904, %v3160
        %v3937 = vsel %vm2044, %v3905, %v3162
        %v3938 = vsel %vm2044, %v3906, %v3164
        %v3939 = vsel %vm2044, %v3907, %v3166
        %v3940 = vsel %vm2044, %v3908, %v3168
        %v3941 = vsel %vm2044, %v3909, %v3170
        %v3942 = vsel %vm2044, %v3910, %v3172
        %v3943 = vsel %vm2044, %v3911, %v3174
        %v3944 = vsel %vm2044, %v3912, %v3176
        %v3945 = vsel %vm2110, %v3913, %v3242
        %v3946 = vsel %vm2110, %v3914, %v3244
        %v3947 = vsel %vm2110, %v3915, %v3246
        %v3948 = vsel %vm2110, %v3916, %v3248
        %v3949 = vsel %vm2110, %v3917, %v3250
        %v3950 = vsel %vm2110, %v3918, %v3252
        %v3951 = vsel %vm2110, %v3919, %v3254
        %v3952 = vsel %vm2110, %v3920, %v3256
        %v3953 = vsel %vm2110, %v3921, %v3258
        %v3954 = vsel %vm2110, %v3922, %v3260
        %v3955 = vsel %vm2110, %v3923, %v3262
        %v3956 = vsel %vm2110, %v3924, %v3264
        %v3957 = vsel %vm2110, %v3925, %v3266
        %v3958 = vsel %vm2110, %v3926, %v3268
        %v3959 = vsel %vm2110, %v3927, %v3270
        %v3960 = vsel %vm2110, %v3928, %v3272
        %v3961 = vsel %vm2110, %v3929, %v3274
        %v3962 = vsel %vm2110, %v3930, %v3276
        %v3963 = vsel %vm2110, %v3931, %v3278
        %v3964 = vsel %vm2110, %v3932, %v3280
        %v3965 = vsel %vm2110, %v3933, %v3282
        %v3966 = vsel %vm2110, %v3934, %v3284
        %v3967 = vsel %vm2110, %v3935, %v3286
        %v3968 = vsel %vm2110, %v3936, %v3288
        %v3969 = vsel %vm2110, %v3937, %v3290
        %v3970 = vsel %vm2110, %v3938, %v3292
        %v3971 = vsel %vm2110, %v3939, %v3294
        %v3972 = vsel %vm2110, %v3940, %v3296
        %v3973 = vsel %vm2110, %v3941, %v3298
        %v3974 = vsel %vm2110, %v3942, %v3300
        %v3975 = vsel %vm2110, %v3943, %v3302
        %v3976 = vsel %vm2110, %v3944, %v3304
        %vm3977 = vcmask 326656
        %v3978 = vsel %vm3977, %v3945, %v3370
        %v3979 = vsel %vm3977, %v3946, %v3372
        %v3980 = vsel %vm3977, %v3947, %v3374
        %v3981 = vsel %vm3977, %v3948, %v3376
        %v3982 = vsel %vm3977, %v3949, %v3378
        %v3983 = vsel %vm3977, %v3950, %v3380
        %v3984 = vsel %vm3977, %v3951, %v3382
        %v3985 = vsel %vm3977, %v3952, %v3384
        %v3986 = vsel %vm3977, %v3953, %v3386
        %v3987 = vsel %vm3977, %v3954, %v3388
        %v3988 = vsel %vm3977, %v3955, %v3390
        %v3989 = vsel %vm3977, %v3956, %v3392
        %v3990 = vsel %vm3977, %v3957, %v3394
        %v3991 = vsel %vm3977, %v3958, %v3396
        %v3992 = vsel %vm3977, %v3959, %v3398
        %v3993 = vsel %vm3977, %v3960, %v3400
        %v3994 = vsel %vm3977, %v3961, %v3402
        %v3995 = vsel %vm3977, %v3962, %v3404
        %v3996 = vsel %vm3977, %v3963, %v3406
        %v3997 = vsel %vm3977, %v3964, %v3408
        %v3998 = vsel %vm3977, %v3965, %v3410
        %v3999 = vsel %vm3977, %v3966, %v3412
        %v4000 = vsel %vm3977, %v3967, %v3414
        %v4001 = vsel %vm3977, %v3968, %v3416
        %v4002 = vsel %vm3977, %v3969, %v3418
        %v4003 = vsel %vm3977, %v3970, %v3420
        %v4004 = vsel %vm3977, %v3971, %v3422
        %v4005 = vsel %vm3977, %v3972, %v3424
        %v4006 = vsel %vm3977, %v3973, %v3426
        %v4007 = vsel %vm3977, %v3974, %v3428
        %v4008 = vsel %vm3977, %v3975, %v3430
        %v4009 = vsel %vm3977, %v3976, %v3432
        %vm4010 = vcmask 392192
        %v4011 = vsel %vm4010, %v3978, %v3498
        %v4012 = vsel %vm4010, %v3979, %v3500
        %v4013 = vsel %vm4010, %v3980, %v3502
        %v4014 = vsel %vm4010, %v3981, %v3504
        %v4015 = vsel %vm4010, %v3982, %v3506
        %v4016 = vsel %vm4010, %v3983, %v3508
        %v4017 = vsel %vm4010, %v3984, %v3510
        %v4018 = vsel %vm4010, %v3985, %v3512
        %v4019 = vsel %vm4010, %v3986, %v3514
        %v4020 = vsel %vm4010, %v3987, %v3516
        %v4021 = vsel %vm4010, %v3988, %v3518
        %v4022 = vsel %vm4010, %v3989, %v3520
        %v4023 = vsel %vm4010, %v3990, %v3522
        %v4024 = vsel %vm4010, %v3991, %v3524
        %v4025 = vsel %vm4010, %v3992, %v3526
        %v4026 = vsel %vm4010, %v3993, %v3528
        %v4027 = vsel %vm4010, %v3994, %v3530
        %v4028 = vsel %vm4010, %v3995, %v3532
        %v4029 = vsel %vm4010, %v3996, %v3534
        %v4030 = vsel %vm4010, %v3997, %v3536
        %v4031 = vsel %vm4010, %v3998, %v3538
        %v4032 = vsel %vm4010, %v3999, %v3540
        %v4033 = vsel %vm4010, %v4000, %v3542
        %v4034 = vsel %vm4010, %v4001, %v3544
        %v4035 = vsel %vm4010, %v4002, %v3546
        %v4036 = vsel %vm4010, %v4003, %v3548
        %v4037 = vsel %vm4010, %v4004, %v3550
        %v4038 = vsel %vm4010, %v4005, %v3552
        %v4039 = vsel %vm4010, %v4006, %v3554
        %v4040 = vsel %vm4010, %v4007, %v3556
        %v4041 = vsel %vm4010, %v4008, %v3558
        %v4042 = vsel %vm4010, %v4009, %v3560
        %vm4043 = vcmask 457728
        %v4044 = vsel %vm4043, %v4011, %v3626
        %v4045 = vsel %vm4043, %v4012, %v3628
        %v4046 = vsel %vm4043, %v4013, %v3630
        %v4047 = vsel %vm4043, %v4014, %v3632
        %v4048 = vsel %vm4043, %v4015, %v3634
        %v4049 = vsel %vm4043, %v4016, %v3636
        %v4050 = vsel %vm4043, %v4017, %v3638
        %v4051 = vsel %vm4043, %v4018, %v3640
        %v4052 = vsel %vm4043, %v4019, %v3642
        %v4053 = vsel %vm4043, %v4020, %v3644
        %v4054 = vsel %vm4043, %v4021, %v3646
        %v4055 = vsel %vm4043, %v4022, %v3648
        %v4056 = vsel %vm4043, %v4023, %v3650
        %v4057 = vsel %vm4043, %v4024, %v3652
        %v4058 = vsel %vm4043, %v4025, %v3654
        %v4059 = vsel %vm4043, %v4026, %v3656
        %v4060 = vsel %vm4043, %v4027, %v3658
        %v4061 = vsel %vm4043, %v4028, %v3660
        %v4062 = vsel %vm4043, %v4029, %v3662
        %v4063 = vsel %vm4043, %v4030, %v3664
        %v4064 = vsel %vm4043, %v4031, %v3666
        %v4065 = vsel %vm4043, %v4032, %v3668
        %v4066 = vsel %vm4043, %v4033, %v3670
        %v4067 = vsel %vm4043, %v4034, %v3672
        %v4068 = vsel %vm4043, %v4035, %v3674
        %v4069 = vsel %vm4043, %v4036, %v3676
        %v4070 = vsel %vm4043, %v4037, %v3678
        %v4071 = vsel %vm4043, %v4038, %v3680
        %v4072 = vsel %vm4043, %v4039, %v3682
        %v4073 = vsel %vm4043, %v4040, %v3684
        %v4074 = vsel %vm4043, %v4041, %v3686
        %v4075 = vsel %vm4043, %v4042, %v3688
        %vm4076 = vcmask 523264
        %v4077 = vsel %vm4076, %v4044, %v3754
        %v4078 = vsel %vm4076, %v4045, %v3756
        %v4079 = vsel %vm4076, %v4046, %v3758
        %v4080 = vsel %vm4076, %v4047, %v3760
        %v4081 = vsel %vm4076, %v4048, %v3762
        %v4082 = vsel %vm4076, %v4049, %v3764
        %v4083 = vsel %vm4076, %v4050, %v3766
        %v4084 = vsel %vm4076, %v4051, %v3768
        %v4085 = vsel %vm4076, %v4052, %v3770
        %v4086 = vsel %vm4076, %v4053, %v3772
        %v4087 = vsel %vm4076, %v4054, %v3774
        %v4088 = vsel %vm4076, %v4055, %v3776
        %v4089 = vsel %vm4076, %v4056, %v3778
        %v4090 = vsel %vm4076, %v4057, %v3780
        %v4091 = vsel %vm4076, %v4058, %v3782
        %v4092 = vsel %vm4076, %v4059, %v3784
        %v4093 = vsel %vm4076, %v4060, %v3786
        %v4094 = vsel %vm4076, %v4061, %v3788
        %v4095 = vsel %vm4076, %v4062, %v3790
        %v4096 = vsel %vm4076, %v4063, %v3792
        %v4097 = vsel %vm4076, %v4064, %v3794
        %v4098 = vsel %vm4076, %v4065, %v3796
        %v4099 = vsel %vm4076, %v4066, %v3798
        %v4100 = vsel %vm4076, %v4067, %v3800
        %v4101 = vsel %vm4076, %v4068, %v3802
        %v4102 = vsel %vm4076, %v4069, %v3804
        %v4103 = vsel %vm4076, %v4070, %v3806
        %v4104 = vsel %vm4076, %v4071, %v3808
        %v4105 = vsel %vm4076, %v4072, %v3810
        %v4106 = vsel %vm4076, %v4073, %v3812
        %v4107 = vsel %vm4076, %v4074, %v3814
        %v4108 = vsel %vm4076, %v4075, %v3816
        %v4109 = vpack.c.bf16 %v4078, %v4077
        %v4110 = vpack.c.bf16 %v4080, %v4079
        %v4111 = vpack.c.bf16 %v4082, %v4081
        %v4112 = vpack.c.bf16 %v4084, %v4083
        %v4113 = vpack.c.bf16 %v4086, %v4085
        %v4114 = vpack.c.bf16 %v4088, %v4087
        %v4115 = vpack.c.bf16 %v4090, %v4089
        %v4116 = vpack.c.bf16 %v4092, %v4091
        %v4117 = vpack.c.bf16 %v4094, %v4093
        %v4118 = vpack.c.bf16 %v4096, %v4095
        %v4119 = vpack.c.bf16 %v4098, %v4097
        %v4120 = vpack.c.bf16 %v4100, %v4099
        %v4121 = vpack.c.bf16 %v4102, %v4101
        %v4122 = vpack.c.bf16 %v4104, %v4103
        %v4123 = vpack.c.bf16 %v4106, %v4105
        %v4124 = vpack.c.bf16 %v4108, %v4107
        %v4125 = vld [vmem:[%s4] sm:$0xf]
        %v4126 = vld [vmem:[%s4 + $0x4] sm:$0xf]
        %v4127 = vld [vmem:[%s4 + $0x8] sm:$0xf]
        %v4128 = vld [vmem:[%s4 + $0xc] sm:$0xf]
        %v4129 = vld [vmem:[%s4 + $0x10] sm:$0xf]
        %v4130 = vld [vmem:[%s4 + $0x14] sm:$0xf]
        %v4131 = vld [vmem:[%s4 + $0x18] sm:$0xf]
        %v4132 = vld [vmem:[%s4 + $0x1c] sm:$0xf]
        %v4133 = vld [vmem:[%s4 + $0x20] sm:$0xf]
        %v4143 = vunpack.c.l.b16 %v4125
        %v4144 = vunpack.c.l.b16 %v4126
        %v4145 = vunpack.c.l.b16 %v4127
        %v4146 = vunpack.c.l.b16 %v4128
        %v4147 = vunpack.c.l.b16 %v4129
        %v4148 = vunpack.c.l.b16 %v4130
        %v4149 = vunpack.c.l.b16 %v4131
        %v4150 = vunpack.c.l.b16 %v4132
        %v4151 = vunpack.c.l.b16 %v4133
        %v4152 = vpack.c.b16 %v4144, %v4143
        %v4153 = vpack.c.b16 %v4146, %v4145
        %v4154 = vpack.c.b16 %v4148, %v4147
        %v4155 = vpack.c.b16 %v4150, %v4149
        %v4156 = vpack.c.b16 %v4151, %v4151
        %vm4161 = vcmask 588800
        %v4163 = vsel %vm4161, %v4109, 0
        %v4166 = vsel %vm4161, %v4110, 0
        %v4169 = vsel %vm4161, %v4111, 0
        %v4172 = vsel %vm4161, %v4112, 0
        %v4175 = vsel %vm4161, %v4113, 0
        %v4178 = vsel %vm4161, %v4114, 0
        %v4181 = vsel %vm4161, %v4115, 0
        %v4184 = vsel %vm4161, %v4116, 0
        %v4187 = vsel %vm4161, %v4117, 0
        %v4190 = vsel %vm4161, %v4118, 0
        %v4193 = vsel %vm4161, %v4119, 0
        %v4196 = vsel %vm4161, %v4120, 0
        %v4199 = vsel %vm4161, %v4121, 0
        %v4202 = vsel %vm4161, %v4122, 0
        %v4205 = vsel %vm4161, %v4123, 0
        %v4208 = vsel %vm4161, %v4124, 0
        %vm4210 = vcmask 1043456
        %v4212 = vsel %vm4210, %v4156, 0
        %4214 = vmatprep.subr.bf16.mxu0 0
        %4215 = vmatpush1.bf16.msra.mxu0 %v4152
        %4216 = vmatprep.subr.bf16.mxu0 0
        %4217 = vmatpush1.bf16.msra.mxu0 %v4153
        %4218 = vmatprep.subr.bf16.mxu0 0
        %4219 = vmatpush1.bf16.msra.mxu0 %v4154
        %4220 = vmatprep.subr.bf16.mxu0 0
        %4221 = vmatpush1.bf16.msra.mxu0 %v4155
        %4222 = vmatprep.subr.bf16.mxu0 0
        %4223 = vmatpush1.bf16.msra.mxu0 %v4212
        %4224 = vmatprep.subr.bf16.mxu0 0
        %4225 = vmatpush1.bf16.msra.mxu0 0
        %4226 = vmatprep.subr.bf16.mxu0 0
        %4227 = vmatpush1.bf16.msra.mxu0 0
        %4228 = vmatprep.subr.bf16.mxu0 0
        %4229 = vmatpush1.bf16.msra.mxu0 0
        %4230 = vmatprep.subr.bf16.mxu0 0
        %4231 = vmatpush1.bf16.msra.mxu0 0
        %4232 = vmatprep.subr.bf16.mxu0 0
        %4233 = vmatpush1.bf16.msra.mxu0 0
        %4234 = vmatprep.subr.bf16.mxu0 0
        %4235 = vmatpush1.bf16.msra.mxu0 0
        %4236 = vmatprep.subr.bf16.mxu0 0
        %4237 = vmatpush1.bf16.msra.mxu0 0
        %4238 = vmatprep.subr.bf16.mxu0 0
        %4239 = vmatpush1.bf16.msra.mxu0 0
        %4240 = vmatprep.subr.bf16.mxu0 0
        %4241 = vmatpush1.bf16.msra.mxu0 0
        %4242 = vmatprep.subr.bf16.mxu0 0
        %4243 = vmatpush1.bf16.msra.mxu0 0
        %4244 = vmatprep.subr.bf16.mxu0 0
        %4245 = vmatpush1.bf16.msra.mxu0 0
        %4246 = vmatprep.mubr.bf16.mxu0 0
        %4247 = vmatmul.mubr.bf16.gmra.mrb[0].mxu0 %v4163
        %v4248 = vpop.f32.mrb[0].mxu0
        %v4249 = vadd.f32 0.0, %v4248
        %v4250 = vpop.f32.mrb[0].mxu0
        %v4251 = vpop.f32.mrb[0].mxu0
        %v4252 = vadd.f32 0.0, %v4251
        %v4253 = vpop.f32.mrb[0].mxu0
        %4254 = vmatprep.mubr.bf16.mxu0 0
        %4255 = vmatmul.mubr.bf16.gmra.mrb[0].mxu0 %v4166
        %v4256 = vpop.f32.mrb[0].mxu0
        %v4257 = vadd.f32 0.0, %v4256
        %v4258 = vpop.f32.mrb[0].mxu0
        %v4259 = vpop.f32.mrb[0].mxu0
        %v4260 = vadd.f32 0.0, %v4259
        %v4261 = vpop.f32.mrb[0].mxu0
        %4262 = vmatprep.mubr.bf16.mxu0 0
        %4263 = vmatmul.mubr.bf16.gmra.mrb[0].mxu0 %v4169
        %v4264 = vpop.f32.mrb[0].mxu0
        %v4265 = vadd.f32 0.0, %v4264
        %v4266 = vpop.f32.mrb[0].mxu0
        %v4267 = vpop.f32.mrb[0].mxu0
        %v4268 = vadd.f32 0.0, %v4267
        %v4269 = vpop.f32.mrb[0].mxu0
        %4270 = vmatprep.mubr.bf16.mxu0 0
        %4271 = vmatmul.mubr.bf16.gmra.mrb[0].mxu0 %v4172
        %v4272 = vpop.f32.mrb[0].mxu0
        %v4273 = vadd.f32 0.0, %v4272
        %v4274 = vpop.f32.mrb[0].mxu0
        %v4275 = vpop.f32.mrb[0].mxu0
        %v4276 = vadd.f32 0.0, %v4275
        %v4277 = vpop.f32.mrb[0].mxu0
        %4278 = vmatprep.mubr.bf16.mxu0 0
        %4279 = vmatmul.mubr.bf16.gmra.mrb[0].mxu0 %v4175
        %v4280 = vpop.f32.mrb[0].mxu0
        %v4281 = vadd.f32 0.0, %v4280
        %v4282 = vpop.f32.mrb[0].mxu0
        %v4283 = vpop.f32.mrb[0].mxu0
        %v4284 = vadd.f32 0.0, %v4283
        %v4285 = vpop.f32.mrb[0].mxu0
        %4286 = vmatprep.mubr.bf16.mxu0 0
        %4287 = vmatmul.mubr.bf16.gmra.mrb[0].mxu0 %v4178
        %v4288 = vpop.f32.mrb[0].mxu0
        %v4289 = vadd.f32 0.0, %v4288
        %v4290 = vpop.f32.mrb[0].mxu0
        %v4291 = vpop.f32.mrb[0].mxu0
        %v4292 = vadd.f32 0.0, %v4291
        %v4293 = vpop.f32.mrb[0].mxu0
        %4294 = vmatprep.mubr.bf16.mxu0 0
        %4295 = vmatmul.mubr.bf16.gmra.mrb[0].mxu0 %v4181
        %v4296 = vpop.f32.mrb[0].mxu0
        %v4297 = vadd.f32 0.0, %v4296
        %v4298 = vpop.f32.mrb[0].mxu0
        %v4299 = vpop.f32.mrb[0].mxu0
        %v4300 = vadd.f32 0.0, %v4299
        %v4301 = vpop.f32.mrb[0].mxu0
        %4302 = vmatprep.mubr.bf16.mxu0 0
        %4303 = vmatmul.mubr.bf16.gmra.mrb[0].mxu0 %v4184
        %v4304 = vpop.f32.mrb[0].mxu0
        %v4305 = vadd.f32 0.0, %v4304
        %v4306 = vpop.f32.mrb[0].mxu0
        %v4307 = vpop.f32.mrb[0].mxu0
        %v4308 = vadd.f32 0.0, %v4307
        %v4309 = vpop.f32.mrb[0].mxu0
        %4310 = vmatprep.mubr.bf16.mxu0 0
        %4311 = vmatmul.mubr.bf16.gmra.mrb[0].mxu0 %v4187
        %v4312 = vpop.f32.mrb[0].mxu0
        %v4313 = vadd.f32 0.0, %v4312
        %v4314 = vpop.f32.mrb[0].mxu0
        %v4315 = vpop.f32.mrb[0].mxu0
        %v4316 = vadd.f32 0.0, %v4315
        %v4317 = vpop.f32.mrb[0].mxu0
        %4318 = vmatprep.mubr.bf16.mxu0 0
        %4319 = vmatmul.mubr.bf16.gmra.mrb[0].mxu0 %v4190
        %v4320 = vpop.f32.mrb[0].mxu0
        %v4321 = vadd.f32 0.0, %v4320
        %v4322 = vpop.f32.mrb[0].mxu0
        %v4323 = vpop.f32.mrb[0].mxu0
        %v4324 = vadd.f32 0.0, %v4323
        %v4325 = vpop.f32.mrb[0].mxu0
        %4326 = vmatprep.mubr.bf16.mxu0 0
        %4327 = vmatmul.mubr.bf16.gmra.mrb[0].mxu0 %v4193
        %v4328 = vpop.f32.mrb[0].mxu0
        %v4329 = vadd.f32 0.0, %v4328
        %v4330 = vpop.f32.mrb[0].mxu0
        %v4331 = vpop.f32.mrb[0].mxu0
        %v4332 = vadd.f32 0.0, %v4331
        %v4333 = vpop.f32.mrb[0].mxu0
        %4334 = vmatprep.mubr.bf16.mxu0 0
        %4335 = vmatmul.mubr.bf16.gmra.mrb[0].mxu0 %v4196
        %v4336 = vpop.f32.mrb[0].mxu0
        %v4337 = vadd.f32 0.0, %v4336
        %v4338 = vpop.f32.mrb[0].mxu0
        %v4339 = vpop.f32.mrb[0].mxu0
        %v4340 = vadd.f32 0.0, %v4339
        %v4341 = vpop.f32.mrb[0].mxu0
        %4342 = vmatprep.mubr.bf16.mxu0 0
        %4343 = vmatmul.mubr.bf16.gmra.mrb[0].mxu0 %v4199
        %v4344 = vpop.f32.mrb[0].mxu0
        %v4345 = vadd.f32 0.0, %v4344
        %v4346 = vpop.f32.mrb[0].mxu0
        %v4347 = vpop.f32.mrb[0].mxu0
        %v4348 = vadd.f32 0.0, %v4347
        %v4349 = vpop.f32.mrb[0].mxu0
        %4350 = vmatprep.mubr.bf16.mxu0 0
        %4351 = vmatmul.mubr.bf16.gmra.mrb[0].mxu0 %v4202
        %v4352 = vpop.f32.mrb[0].mxu0
        %v4353 = vadd.f32 0.0, %v4352
        %v4354 = vpop.f32.mrb[0].mxu0
        %v4355 = vpop.f32.mrb[0].mxu0
        %v4356 = vadd.f32 0.0, %v4355
        %v4357 = vpop.f32.mrb[0].mxu0
        %4358 = vmatprep.mubr.bf16.mxu0 0
        %4359 = vmatmul.mubr.bf16.gmra.mrb[0].mxu0 %v4205
        %v4360 = vpop.f32.mrb[0].mxu0
        %v4361 = vadd.f32 0.0, %v4360
        %v4362 = vpop.f32.mrb[0].mxu0
        %v4363 = vpop.f32.mrb[0].mxu0
        %v4364 = vadd.f32 0.0, %v4363
        %v4365 = vpop.f32.mrb[0].mxu0
        %4366 = vmatprep.mubr.bf16.mxu0 0
        %4367 = vmatmul.mubr.bf16.gmra.mrb[0].mxu0 %v4208
        %v4368 = vpop.f32.mrb[0].mxu0
        %v4369 = vadd.f32 0.0, %v4368
        %v4370 = vpop.f32.mrb[0].mxu0
        %v4371 = vpop.f32.mrb[0].mxu0
        %v4372 = vadd.f32 0.0, %v4371
        %v4373 = vpop.f32.mrb[0].mxu0
        %4374 = vdwg.mxu0
        %v4375 = vld [vmem:[%s5] sm:$0x1]
        %v4377 = vlaneseq
        %v4378 = vshrl.u32 %v4377, 7
        %v4379 = vsub.s32 0, %v4378
        %v4380 = vrot.slane %v4375, %v4379
        %v4382 = vmul.f32 %v4249, %v4380
        %v4383 = vmul.f32 %v4252, %v4380
        %v4384 = vmul.f32 %v4257, %v4380
        %v4385 = vmul.f32 %v4260, %v4380
        %v4386 = vmul.f32 %v4265, %v4380
        %v4387 = vmul.f32 %v4268, %v4380
        %v4388 = vmul.f32 %v4273, %v4380
        %v4389 = vmul.f32 %v4276, %v4380
        %v4390 = vmul.f32 %v4281, %v4380
        %v4391 = vmul.f32 %v4284, %v4380
        %v4392 = vmul.f32 %v4289, %v4380
        %v4393 = vmul.f32 %v4292, %v4380
        %v4394 = vmul.f32 %v4297, %v4380
        %v4395 = vmul.f32 %v4300, %v4380
        %v4396 = vmul.f32 %v4305, %v4380
        %v4397 = vmul.f32 %v4308, %v4380
        %v4398 = vmul.f32 %v4313, %v4380
        %v4399 = vmul.f32 %v4316, %v4380
        %v4400 = vmul.f32 %v4321, %v4380
        %v4401 = vmul.f32 %v4324, %v4380
        %v4402 = vmul.f32 %v4329, %v4380
        %v4403 = vmul.f32 %v4332, %v4380
        %v4404 = vmul.f32 %v4337, %v4380
        %v4405 = vmul.f32 %v4340, %v4380
        %v4406 = vmul.f32 %v4345, %v4380
        %v4407 = vmul.f32 %v4348, %v4380
        %v4408 = vmul.f32 %v4353, %v4380
        %v4409 = vmul.f32 %v4356, %v4380
        %v4410 = vmul.f32 %v4361, %v4380
        %v4411 = vmul.f32 %v4364, %v4380
        %v4412 = vmul.f32 %v4369, %v4380
        %v4413 = vmul.f32 %v4372, %v4380
        %v4414 = vld [vmem:[%s6] sm:$0x1]
        %v4416 = vlaneseq
        %v4417 = vshrl.u32 %v4416, 7
        %v4418 = vsub.s32 0, %v4417
        %v4419 = vrot.slane %v4414, %v4418
        %v4421 = vadd.f32 %v4382, %v4419
        %v4422 = vadd.f32 %v4383, %v4419
        %v4423 = vadd.f32 %v4384, %v4419
        %v4424 = vadd.f32 %v4385, %v4419
        %v4425 = vadd.f32 %v4386, %v4419
        %v4426 = vadd.f32 %v4387, %v4419
        %v4427 = vadd.f32 %v4388, %v4419
        %v4428 = vadd.f32 %v4389, %v4419
        %v4429 = vadd.f32 %v4390, %v4419
        %v4430 = vadd.f32 %v4391, %v4419
        %v4431 = vadd.f32 %v4392, %v4419
        %v4432 = vadd.f32 %v4393, %v4419
        %v4433 = vadd.f32 %v4394, %v4419
        %v4434 = vadd.f32 %v4395, %v4419
        %v4435 = vadd.f32 %v4396, %v4419
        %v4436 = vadd.f32 %v4397, %v4419
        %v4437 = vadd.f32 %v4398, %v4419
        %v4438 = vadd.f32 %v4399, %v4419
        %v4439 = vadd.f32 %v4400, %v4419
        %v4440 = vadd.f32 %v4401, %v4419
        %v4441 = vadd.f32 %v4402, %v4419
        %v4442 = vadd.f32 %v4403, %v4419
        %v4443 = vadd.f32 %v4404, %v4419
        %v4444 = vadd.f32 %v4405, %v4419
        %v4445 = vadd.f32 %v4406, %v4419
        %v4446 = vadd.f32 %v4407, %v4419
        %v4447 = vadd.f32 %v4408, %v4419
        %v4448 = vadd.f32 %v4409, %v4419
        %v4449 = vadd.f32 %v4410, %v4419
        %v4450 = vadd.f32 %v4411, %v4419
        %v4451 = vadd.f32 %v4412, %v4419
        %v4452 = vadd.f32 %v4413, %v4419
        %v4453 = vld [vmem:[%s535 + $0x1] sm:$0xff]
        %v4454 = vld [vmem:[%s535 + $0x9] sm:$0xff]
        %v4455 = vld [vmem:[%s535 + $0x19] sm:$0xff]
        %v4456 = vld [vmem:[%s535 + $0x21] sm:$0xff]
        %v4457 = vld [vmem:[%s535 + $0x31] sm:$0xff]
        %v4458 = vld [vmem:[%s535 + $0x39] sm:$0xff]
        %v4459 = vld [vmem:[%s535 + $0x49] sm:$0xff]
        %v4460 = vld [vmem:[%s535 + $0x51] sm:$0xff]
        %v4461 = vld [vmem:[%s535 + $0x61] sm:$0xff]
        %v4462 = vld [vmem:[%s535 + $0x69] sm:$0xff]
        %v4463 = vld [vmem:[%s535 + $0x79] sm:$0xff]
        %v4464 = vld [vmem:[%s535 + $0x81] sm:$0xff]
        %v4465 = vld [vmem:[%s535 + $0x91] sm:$0xff]
        %v4466 = vld [vmem:[%s535 + $0x99] sm:$0xff]
        %v4467 = vld [vmem:[%s535 + $0xa9] sm:$0xff]
        %v4468 = vld [vmem:[%s535 + $0xb1] sm:$0xff]
        %v4469 = vld [vmem:[%s535 + $0xc1] sm:$0xff]
        %v4470 = vld [vmem:[%s535 + $0xc9] sm:$0xff]
        %v4471 = vld [vmem:[%s535 + $0xd9] sm:$0xff]
        %v4472 = vld [vmem:[%s535 + $0xe1] sm:$0xff]
        %v4473 = vld [vmem:[%s535 + $0xf1] sm:$0xff]
        %v4474 = vld [vmem:[%s535 + $0xf9] sm:$0xff]
        %v4475 = vld [vmem:[%s535 + $0x109] sm:$0xff]
        %v4476 = vld [vmem:[%s535 + $0x111] sm:$0xff]
        %v4477 = vld [vmem:[%s535 + $0x121] sm:$0xff]
        %v4478 = vld [vmem:[%s535 + $0x129] sm:$0xff]
        %v4479 = vld [vmem:[%s535 + $0x139] sm:$0xff]
        %v4480 = vld [vmem:[%s535 + $0x141] sm:$0xff]
        %v4481 = vld [vmem:[%s535 + $0x151] sm:$0xff]
        %v4482 = vld [vmem:[%s535 + $0x159] sm:$0xff]
        %v4483 = vld [vmem:[%s535 + $0x169] sm:$0xff]
        %v4484 = vld [vmem:[%s535 + $0x171] sm:$0xff]
        %v4485 = vpack.c.bf16 %v4454, %v4453
        %v4486 = vpack.c.bf16 %v4456, %v4455
        %v4487 = vpack.c.bf16 %v4458, %v4457
        %v4488 = vpack.c.bf16 %v4460, %v4459
        %v4489 = vpack.c.bf16 %v4462, %v4461
        %v4490 = vpack.c.bf16 %v4464, %v4463
        %v4491 = vpack.c.bf16 %v4466, %v4465
        %v4492 = vpack.c.bf16 %v4468, %v4467
        %v4493 = vpack.c.bf16 %v4470, %v4469
        %v4494 = vpack.c.bf16 %v4472, %v4471
        %v4495 = vpack.c.bf16 %v4474, %v4473
        %v4496 = vpack.c.bf16 %v4476, %v4475
        %v4497 = vpack.c.bf16 %v4478, %v4477
        %v4498 = vpack.c.bf16 %v4480, %v4479
        %v4499 = vpack.c.bf16 %v4482, %v4481
        %v4500 = vpack.c.bf16 %v4484, %v4483
        %v4501 = vld [vmem:[%s7] sm:$0x3]
        %v4503 = vsel %vm359, %v4485, 0
        %v4506 = vsel %vm359, %v4486, 0
        %v4509 = vsel %vm359, %v4487, 0
        %v4512 = vsel %vm359, %v4488, 0
        %v4515 = vsel %vm359, %v4489, 0
        %v4518 = vsel %vm359, %v4490, 0
        %v4521 = vsel %vm359, %v4491, 0
        %v4524 = vsel %vm359, %v4492, 0
        %v4527 = vsel %vm359, %v4493, 0
        %v4530 = vsel %vm359, %v4494, 0
        %v4533 = vsel %vm359, %v4495, 0
        %v4536 = vsel %vm359, %v4496, 0
        %v4539 = vsel %vm359, %v4497, 0
        %v4542 = vsel %vm359, %v4498, 0
        %v4545 = vsel %vm359, %v4499, 0
        %v4548 = vsel %vm359, %v4500, 0
        %v4551 = vsel %vm2228, %v4501, 0
        %4553 = vmatprep.subr.bf16.mxu0 0
        %4554 = vmatpush1.bf16.msra.mxu0 %v4551
        %4555 = vmatprep.subr.bf16.mxu0 0
        %4556 = vmatpush1.bf16.msra.mxu0 0
        %4557 = vmatprep.subr.bf16.mxu0 0
        %4558 = vmatpush1.bf16.msra.mxu0 0
        %4559 = vmatprep.subr.bf16.mxu0 0
        %4560 = vmatpush1.bf16.msra.mxu0 0
        %4561 = vmatprep.subr.bf16.mxu0 0
        %4562 = vmatpush1.bf16.msra.mxu0 0
        %4563 = vmatprep.subr.bf16.mxu0 0
        %4564 = vmatpush1.bf16.msra.mxu0 0
        %4565 = vmatprep.subr.bf16.mxu0 0
        %4566 = vmatpush1.bf16.msra.mxu0 0
        %4567 = vmatprep.subr.bf16.mxu0 0
        %4568 = vmatpush1.bf16.msra.mxu0 0
        %4569 = vmatprep.subr.bf16.mxu0 0
        %4570 = vmatpush1.bf16.msra.mxu0 0
        %4571 = vmatprep.subr.bf16.mxu0 0
        %4572 = vmatpush1.bf16.msra.mxu0 0
        %4573 = vmatprep.subr.bf16.mxu0 0
        %4574 = vmatpush1.bf16.msra.mxu0 0
        %4575 = vmatprep.subr.bf16.mxu0 0
        %4576 = vmatpush1.bf16.msra.mxu0 0
        %4577 = vmatprep.subr.bf16.mxu0 0
        %4578 = vmatpush1.bf16.msra.mxu0 0
        %4579 = vmatprep.subr.bf16.mxu0 0
        %4580 = vmatpush1.bf16.msra.mxu0 0
        %4581 = vmatprep.subr.bf16.mxu0 0
        %4582 = vmatpush1.bf16.msra.mxu0 0
        %4583 = vmatprep.subr.bf16.mxu0 0
        %4584 = vmatpush1.bf16.msra.mxu0 0
        %4585 = vmatprep.mubr.bf16.mxu0 0
        %4586 = vmatmul.mubr.bf16.gmra.mrb[0].mxu0 %v4503
        %v4587 = vpop.f32.mrb[0].mxu0
        %v4588 = vadd.f32 0.0, %v4587
        %v4589 = vpop.f32.mrb[0].mxu0
        %v4590 = vpop.f32.mrb[0].mxu0
        %v4591 = vadd.f32 0.0, %v4590
        %v4592 = vpop.f32.mrb[0].mxu0
        %4593 = vmatprep.mubr.bf16.mxu0 0
        %4594 = vmatmul.mubr.bf16.gmra.mrb[0].mxu0 %v4506
        %v4595 = vpop.f32.mrb[0].mxu0
        %v4596 = vadd.f32 0.0, %v4595
        %v4597 = vpop.f32.mrb[0].mxu0
        %v4598 = vpop.f32.mrb[0].mxu0
        %v4599 = vadd.f32 0.0, %v4598
        %v4600 = vpop.f32.mrb[0].mxu0
        %4601 = vmatprep.mubr.bf16.mxu0 0
        %4602 = vmatmul.mubr.bf16.gmra.mrb[0].mxu0 %v4509
        %v4603 = vpop.f32.mrb[0].mxu0
        %v4604 = vadd.f32 0.0, %v4603
        %v4605 = vpop.f32.mrb[0].mxu0
        %v4606 = vpop.f32.mrb[0].mxu0
        %v4607 = vadd.f32 0.0, %v4606
        %v4608 = vpop.f32.mrb[0].mxu0
        %4609 = vmatprep.mubr.bf16.mxu0 0
        %4610 = vmatmul.mubr.bf16.gmra.mrb[0].mxu0 %v4512
        %v4611 = vpop.f32.mrb[0].mxu0
        %v4612 = vadd.f32 0.0, %v4611
        %v4613 = vpop.f32.mrb[0].mxu0
        %v4614 = vpop.f32.mrb[0].mxu0
        %v4615 = vadd.f32 0.0, %v4614
        %v4616 = vpop.f32.mrb[0].mxu0
        %4617 = vmatprep.mubr.bf16.mxu0 0
        %4618 = vmatmul.mubr.bf16.gmra.mrb[0].mxu0 %v4515
        %v4619 = vpop.f32.mrb[0].mxu0
        %v4620 = vadd.f32 0.0, %v4619
        %v4621 = vpop.f32.mrb[0].mxu0
        %v4622 = vpop.f32.mrb[0].mxu0
        %v4623 = vadd.f32 0.0, %v4622
        %v4624 = vpop.f32.mrb[0].mxu0
        %4625 = vmatprep.mubr.bf16.mxu0 0
        %4626 = vmatmul.mubr.bf16.gmra.mrb[0].mxu0 %v4518
        %v4627 = vpop.f32.mrb[0].mxu0
        %v4628 = vadd.f32 0.0, %v4627
        %v4629 = vpop.f32.mrb[0].mxu0
        %v4630 = vpop.f32.mrb[0].mxu0
        %v4631 = vadd.f32 0.0, %v4630
        %v4632 = vpop.f32.mrb[0].mxu0
        %4633 = vmatprep.mubr.bf16.mxu0 0
        %4634 = vmatmul.mubr.bf16.gmra.mrb[0].mxu0 %v4521
        %v4635 = vpop.f32.mrb[0].mxu0
        %v4636 = vadd.f32 0.0, %v4635
        %v4637 = vpop.f32.mrb[0].mxu0
        %v4638 = vpop.f32.mrb[0].mxu0
        %v4639 = vadd.f32 0.0, %v4638
        %v4640 = vpop.f32.mrb[0].mxu0
        %4641 = vmatprep.mubr.bf16.mxu0 0
        %4642 = vmatmul.mubr.bf16.gmra.mrb[0].mxu0 %v4524
        %v4643 = vpop.f32.mrb[0].mxu0
        %v4644 = vadd.f32 0.0, %v4643
        %v4645 = vpop.f32.mrb[0].mxu0
        %v4646 = vpop.f32.mrb[0].mxu0
        %v4647 = vadd.f32 0.0, %v4646
        %v4648 = vpop.f32.mrb[0].mxu0
        %4649 = vmatprep.mubr.bf16.mxu0 0
        %4650 = vmatmul.mubr.bf16.gmra.mrb[0].mxu0 %v4527
        %v4651 = vpop.f32.mrb[0].mxu0
        %v4652 = vadd.f32 0.0, %v4651
        %v4653 = vpop.f32.mrb[0].mxu0
        %v4654 = vpop.f32.mrb[0].mxu0
        %v4655 = vadd.f32 0.0, %v4654
        %v4656 = vpop.f32.mrb[0].mxu0
        %4657 = vmatprep.mubr.bf16.mxu0 0
        %4658 = vmatmul.mubr.bf16.gmra.mrb[0].mxu0 %v4530
        %v4659 = vpop.f32.mrb[0].mxu0
        %v4660 = vadd.f32 0.0, %v4659
        %v4661 = vpop.f32.mrb[0].mxu0
        %v4662 = vpop.f32.mrb[0].mxu0
        %v4663 = vadd.f32 0.0, %v4662
        %v4664 = vpop.f32.mrb[0].mxu0
        %4665 = vmatprep.mubr.bf16.mxu0 0
        %4666 = vmatmul.mubr.bf16.gmra.mrb[0].mxu0 %v4533
        %v4667 = vpop.f32.mrb[0].mxu0
        %v4668 = vadd.f32 0.0, %v4667
        %v4669 = vpop.f32.mrb[0].mxu0
        %v4670 = vpop.f32.mrb[0].mxu0
        %v4671 = vadd.f32 0.0, %v4670
        %v4672 = vpop.f32.mrb[0].mxu0
        %4673 = vmatprep.mubr.bf16.mxu0 0
        %4674 = vmatmul.mubr.bf16.gmra.mrb[0].mxu0 %v4536
        %v4675 = vpop.f32.mrb[0].mxu0
        %v4676 = vadd.f32 0.0, %v4675
        %v4677 = vpop.f32.mrb[0].mxu0
        %v4678 = vpop.f32.mrb[0].mxu0
        %v4679 = vadd.f32 0.0, %v4678
        %v4680 = vpop.f32.mrb[0].mxu0
        %4681 = vmatprep.mubr.bf16.mxu0 0
        %4682 = vmatmul.mubr.bf16.gmra.mrb[0].mxu0 %v4539
        %v4683 = vpop.f32.mrb[0].mxu0
        %v4684 = vadd.f32 0.0, %v4683
        %v4685 = vpop.f32.mrb[0].mxu0
        %v4686 = vpop.f32.mrb[0].mxu0
        %v4687 = vadd.f32 0.0, %v4686
        %v4688 = vpop.f32.mrb[0].mxu0
        %4689 = vmatprep.mubr.bf16.mxu0 0
        %4690 = vmatmul.mubr.bf16.gmra.mrb[0].mxu0 %v4542
        %v4691 = vpop.f32.mrb[0].mxu0
        %v4692 = vadd.f32 0.0, %v4691
        %v4693 = vpop.f32.mrb[0].mxu0
        %v4694 = vpop.f32.mrb[0].mxu0
        %v4695 = vadd.f32 0.0, %v4694
        %v4696 = vpop.f32.mrb[0].mxu0
        %4697 = vmatprep.mubr.bf16.mxu0 0
        %4698 = vmatmul.mubr.bf16.gmra.mrb[0].mxu0 %v4545
        %v4699 = vpop.f32.mrb[0].mxu0
        %v4700 = vadd.f32 0.0, %v4699
        %v4701 = vpop.f32.mrb[0].mxu0
        %v4702 = vpop.f32.mrb[0].mxu0
        %v4703 = vadd.f32 0.0, %v4702
        %v4704 = vpop.f32.mrb[0].mxu0
        %4705 = vmatprep.mubr.bf16.mxu0 0
        %4706 = vmatmul.mubr.bf16.gmra.mrb[0].mxu0 %v4548
        %v4707 = vpop.f32.mrb[0].mxu0
        %v4708 = vadd.f32 0.0, %v4707
        %v4709 = vpop.f32.mrb[0].mxu0
        %v4710 = vpop.f32.mrb[0].mxu0
        %v4711 = vadd.f32 0.0, %v4710
        %v4712 = vpop.f32.mrb[0].mxu0
        %4713 = vdwg.mxu0
        %v4714 = vld [vmem:[%s8] sm:$0x1]
        %v4716 = vlaneseq
        %v4717 = vshrl.u32 %v4716, 7
        %v4718 = vsub.s32 0, %v4717
        %v4719 = vrot.slane %v4714, %v4718
        %v4721 = vmul.f32 %v4588, %v4719
        %v4722 = vmul.f32 %v4591, %v4719
        %v4723 = vmul.f32 %v4596, %v4719
        %v4724 = vmul.f32 %v4599, %v4719
        %v4725 = vmul.f32 %v4604, %v4719
        %v4726 = vmul.f32 %v4607, %v4719
        %v4727 = vmul.f32 %v4612, %v4719
        %v4728 = vmul.f32 %v4615, %v4719
        %v4729 = vmul.f32 %v4620, %v4719
        %v4730 = vmul.f32 %v4623, %v4719
        %v4731 = vmul.f32 %v4628, %v4719
        %v4732 = vmul.f32 %v4631, %v4719
        %v4733 = vmul.f32 %v4636, %v4719
        %v4734 = vmul.f32 %v4639, %v4719
        %v4735 = vmul.f32 %v4644, %v4719
        %v4736 = vmul.f32 %v4647, %v4719
        %v4737 = vmul.f32 %v4652, %v4719
        %v4738 = vmul.f32 %v4655, %v4719
        %v4739 = vmul.f32 %v4660, %v4719
        %v4740 = vmul.f32 %v4663, %v4719
        %v4741 = vmul.f32 %v4668, %v4719
        %v4742 = vmul.f32 %v4671, %v4719
        %v4743 = vmul.f32 %v4676, %v4719
        %v4744 = vmul.f32 %v4679, %v4719
        %v4745 = vmul.f32 %v4684, %v4719
        %v4746 = vmul.f32 %v4687, %v4719
        %v4747 = vmul.f32 %v4692, %v4719
        %v4748 = vmul.f32 %v4695, %v4719
        %v4749 = vmul.f32 %v4700, %v4719
        %v4750 = vmul.f32 %v4703, %v4719
        %v4751 = vmul.f32 %v4708, %v4719
        %v4752 = vmul.f32 %v4711, %v4719
        %v4753 = vld [vmem:[%s9] sm:$0x1]
        %v4755 = vlaneseq
        %v4756 = vshrl.u32 %v4755, 7
        %v4757 = vsub.s32 0, %v4756
        %v4758 = vrot.slane %v4753, %v4757
        %v4760 = vadd.f32 %v4721, %v4758
        %v4761 = vadd.f32 %v4722, %v4758
        %v4762 = vadd.f32 %v4723, %v4758
        %v4763 = vadd.f32 %v4724, %v4758
        %v4764 = vadd.f32 %v4725, %v4758
        %v4765 = vadd.f32 %v4726, %v4758
        %v4766 = vadd.f32 %v4727, %v4758
        %v4767 = vadd.f32 %v4728, %v4758
        %v4768 = vadd.f32 %v4729, %v4758
        %v4769 = vadd.f32 %v4730, %v4758
        %v4770 = vadd.f32 %v4731, %v4758
        %v4771 = vadd.f32 %v4732, %v4758
        %v4772 = vadd.f32 %v4733, %v4758
        %v4773 = vadd.f32 %v4734, %v4758
        %v4774 = vadd.f32 %v4735, %v4758
        %v4775 = vadd.f32 %v4736, %v4758
        %v4776 = vadd.f32 %v4737, %v4758
        %v4777 = vadd.f32 %v4738, %v4758
        %v4778 = vadd.f32 %v4739, %v4758
        %v4779 = vadd.f32 %v4740, %v4758
        %v4780 = vadd.f32 %v4741, %v4758
        %v4781 = vadd.f32 %v4742, %v4758
        %v4782 = vadd.f32 %v4743, %v4758
        %v4783 = vadd.f32 %v4744, %v4758
        %v4784 = vadd.f32 %v4745, %v4758
        %v4785 = vadd.f32 %v4746, %v4758
        %v4786 = vadd.f32 %v4747, %v4758
        %v4787 = vadd.f32 %v4748, %v4758
        %v4788 = vadd.f32 %v4749, %v4758
        %v4789 = vadd.f32 %v4750, %v4758
        %v4790 = vadd.f32 %v4751, %v4758
        %v4791 = vadd.f32 %v4752, %v4758
        %v4792 = vadd.f32 %v4421, %v4760
        %v4793 = vadd.f32 %v4422, %v4761
        %v4794 = vadd.f32 %v4423, %v4762
        %v4795 = vadd.f32 %v4424, %v4763
        %v4796 = vadd.f32 %v4425, %v4764
        %v4797 = vadd.f32 %v4426, %v4765
        %v4798 = vadd.f32 %v4427, %v4766
        %v4799 = vadd.f32 %v4428, %v4767
        %v4800 = vadd.f32 %v4429, %v4768
        %v4801 = vadd.f32 %v4430, %v4769
        %v4802 = vadd.f32 %v4431, %v4770
        %v4803 = vadd.f32 %v4432, %v4771
        %v4804 = vadd.f32 %v4433, %v4772
        %v4805 = vadd.f32 %v4434, %v4773
        %v4806 = vadd.f32 %v4435, %v4774
        %v4807 = vadd.f32 %v4436, %v4775
        %v4808 = vadd.f32 %v4437, %v4776
        %v4809 = vadd.f32 %v4438, %v4777
        %v4810 = vadd.f32 %v4439, %v4778
        %v4811 = vadd.f32 %v4440, %v4779
        %v4812 = vadd.f32 %v4441, %v4780
        %v4813 = vadd.f32 %v4442, %v4781
        %v4814 = vadd.f32 %v4443, %v4782
        %v4815 = vadd.f32 %v4444, %v4783
        %v4816 = vadd.f32 %v4445, %v4784
        %v4817 = vadd.f32 %v4446, %v4785
        %v4818 = vadd.f32 %v4447, %v4786
        %v4819 = vadd.f32 %v4448, %v4787
        %v4820 = vadd.f32 %v4449, %v4788
        %v4821 = vadd.f32 %v4450, %v4789
        %v4822 = vadd.f32 %v4451, %v4790
        %v4823 = vadd.f32 %v4452, %v4791
        %v4824 = vmax.f32 %v4792, 0.0
        %v4825 = vmax.f32 %v4793, 0.0
        %v4826 = vmax.f32 %v4794, 0.0
        %v4827 = vmax.f32 %v4795, 0.0
        %v4828 = vmax.f32 %v4796, 0.0
        %v4829 = vmax.f32 %v4797, 0.0
        %v4830 = vmax.f32 %v4798, 0.0
        %v4831 = vmax.f32 %v4799, 0.0
        %v4832 = vmax.f32 %v4800, 0.0
        %v4833 = vmax.f32 %v4801, 0.0
        %v4834 = vmax.f32 %v4802, 0.0
        %v4835 = vmax.f32 %v4803, 0.0
        %v4836 = vmax.f32 %v4804, 0.0
        %v4837 = vmax.f32 %v4805, 0.0
        %v4838 = vmax.f32 %v4806, 0.0
        %v4839 = vmax.f32 %v4807, 0.0
        %v4840 = vmax.f32 %v4808, 0.0
        %v4841 = vmax.f32 %v4809, 0.0
        %v4842 = vmax.f32 %v4810, 0.0
        %v4843 = vmax.f32 %v4811, 0.0
        %v4844 = vmax.f32 %v4812, 0.0
        %v4845 = vmax.f32 %v4813, 0.0
        %v4846 = vmax.f32 %v4814, 0.0
        %v4847 = vmax.f32 %v4815, 0.0
        %v4848 = vmax.f32 %v4816, 0.0
        %v4849 = vmax.f32 %v4817, 0.0
        %v4850 = vmax.f32 %v4818, 0.0
        %v4851 = vmax.f32 %v4819, 0.0
        %v4852 = vmax.f32 %v4820, 0.0
        %v4853 = vmax.f32 %v4821, 0.0
        %v4854 = vmax.f32 %v4822, 0.0
        %v4855 = vmax.f32 %v4823, 0.0
        %4856 = vxpose.xlu0.b32.start [1/16] %v4824, 128
        %4857 = vxpose.xlu0.b32.cont [2/16] %v4825, 128
        %4858 = vxpose.xlu0.b32.cont [3/16] %v4826, 128
        %4859 = vxpose.xlu0.b32.cont [4/16] %v4827, 128
        %4860 = vxpose.xlu0.b32.cont [5/16] %v4828, 128
        %4861 = vxpose.xlu0.b32.cont [6/16] %v4829, 128
        %4862 = vxpose.xlu0.b32.cont [7/16] %v4830, 128
        %4863 = vxpose.xlu0.b32.cont [8/16] %v4831, 128
        %4864 = vxpose.xlu0.b32.cont [9/16] %v4832, 128
        %4865 = vxpose.xlu0.b32.cont [10/16] %v4833, 128
        %4866 = vxpose.xlu0.b32.cont [11/16] %v4834, 128
        %4867 = vxpose.xlu0.b32.cont [12/16] %v4835, 128
        %4868 = vxpose.xlu0.b32.cont [13/16] %v4836, 128
        %4869 = vxpose.xlu0.b32.cont [14/16] %v4837, 128
        %4870 = vxpose.xlu0.b32.cont [15/16] %v4838, 128
        %4871 = vxpose.xlu0.b32.end [16/16] %v4839, 128
        %v4872 = vpop.trf.xlu0
        %v4873 = vpop.trf.xlu0
        %v4874 = vpop.trf.xlu0
        %v4875 = vpop.trf.xlu0
        %v4876 = vpop.trf.xlu0
        %v4877 = vpop.trf.xlu0
        %v4878 = vpop.trf.xlu0
        %v4879 = vpop.trf.xlu0
        %v4880 = vpop.trf.xlu0
        %v4881 = vpop.trf.xlu0
        %v4882 = vpop.trf.xlu0
        %v4883 = vpop.trf.xlu0
        %v4884 = vpop.trf.xlu0
        %v4885 = vpop.trf.xlu0
        %v4886 = vpop.trf.xlu0
        %v4887 = vpop.trf.xlu0
        %4888 = vxpose.xlu0.b32.start [1/16] %v4840, 128
        %4889 = vxpose.xlu0.b32.cont [2/16] %v4841, 128
        %4890 = vxpose.xlu0.b32.cont [3/16] %v4842, 128
        %4891 = vxpose.xlu0.b32.cont [4/16] %v4843, 128
        %4892 = vxpose.xlu0.b32.cont [5/16] %v4844, 128
        %4893 = vxpose.xlu0.b32.cont [6/16] %v4845, 128
        %4894 = vxpose.xlu0.b32.cont [7/16] %v4846, 128
        %4895 = vxpose.xlu0.b32.cont [8/16] %v4847, 128
        %4896 = vxpose.xlu0.b32.cont [9/16] %v4848, 128
        %4897 = vxpose.xlu0.b32.cont [10/16] %v4849, 128
        %4898 = vxpose.xlu0.b32.cont [11/16] %v4850, 128
        %4899 = vxpose.xlu0.b32.cont [12/16] %v4851, 128
        %4900 = vxpose.xlu0.b32.cont [13/16] %v4852, 128
        %4901 = vxpose.xlu0.b32.cont [14/16] %v4853, 128
        %4902 = vxpose.xlu0.b32.cont [15/16] %v4854, 128
        %4903 = vxpose.xlu0.b32.end [16/16] %v4855, 128
        %v4904 = vpop.trf.xlu0
        %v4905 = vpop.trf.xlu0
        %v4906 = vpop.trf.xlu0
        %v4907 = vpop.trf.xlu0
        %v4908 = vpop.trf.xlu0
        %v4909 = vpop.trf.xlu0
        %v4910 = vpop.trf.xlu0
        %v4911 = vpop.trf.xlu0
        %v4912 = vpop.trf.xlu0
        %v4913 = vpop.trf.xlu0
        %v4914 = vpop.trf.xlu0
        %v4915 = vpop.trf.xlu0
        %v4916 = vpop.trf.xlu0
        %v4917 = vpop.trf.xlu0
        %v4918 = vpop.trf.xlu0
        %v4919 = vpop.trf.xlu0
        %4920 = vst [vmem:[%s352] sm:$0xff] %v4872
        %4921 = vst [vmem:[%s352 + $0x8] sm:$0xff] %v4904
        %s4922 = sand.u32 %s247, 1
        %s4923 = scalar_lea.sflag [#allocation5], %s4922
        %s4924 = sand.u32 %s247, 1
        %s4925 = smul.addr %s4924, 16
        %s4926 = scalar_lea.vmem [#allocation4], %s4925
        // Predicated region
        $region61: #{tpu_custom_call.1} parent=59 // pred_check
          %p4927 = pneg %p257
        $region62: #{tpu_custom_call.1} parent=59 // pred_check_branch
          %4929 = sbr.rel (%p4927) target = $region64
        $region63: #{tpu_custom_call.1} parent=59 // pred_region
          %s4931 = ssub.s32 256, 256
          %4932 = vsyncadd %s4923, %s4931
          %s4933 = smul.addr %s24, 2
          %s4934 = smul.addr %s4933, 128
          %s4935 = scalar_lea.hbm %s10, %s4934
          %s4937 = sshll.u32 %s4926, 4
          %s4938 = int_to_ptr.vmem [resolvable:$true] %s4937
          %4940 = dma.vmem_to_hbm [thread:$0]  %s4938, 256, %s4935, %s4923
        $region64: #{tpu_custom_call.1} parent=59 // pred_fallthru
          _
      $region60: #{tpu_custom_call.1} parent=5 // pred_fallthru
        _
      %p4941 = scmp.le.s32.totalorder 2, %s19
      // Predicated region
      $region65: #{tpu_custom_call.1} parent=5 // pred_check
        %p4942 = pneg %p4941
      $region66: #{tpu_custom_call.1} parent=5 // pred_check_branch
        %4944 = sbr.rel (%p4942) target = $region68
      $region67: #{tpu_custom_call.1} parent=5 // pred_region
        %s4945 = ssub.s32 %s19, 2
        // Predicated region
        $region69: #{tpu_custom_call.1} parent=67 // pred_check
          %p4946 = pneg %p263
        $region70: #{tpu_custom_call.1} parent=67 // pred_check_branch
          %4948 = sbr.rel (%p4946) target = $region72
        $region71: #{tpu_custom_call.1} parent=67 // pred_region
          %s4949 = sand.u32 %s248, 1
          %s4950 = scalar_lea.sflag [#allocation5], %s4949
          %s4951 = sand.u32 %s248, 1
          %s4952 = smul.addr %s4951, 16
          %s4953 = scalar_lea.vmem [#allocation4], %s4952
          %4954 = dma.done %s4950, 256
        $region72: #{tpu_custom_call.1} parent=67 // pred_fallthru
          _
      $region68: #{tpu_custom_call.1} parent=5 // pred_fallthru
        _
    $region6: #{tpu_custom_call.1} parent=1 // loop_footer
      %s23 = sadd.s32 1, %s19
    $region7: #{tpu_custom_call.1} parent=1 // loop_footer_branch
      %18 = sbr.rel target = $region3
    $region8: #{tpu_custom_call.1} parent=1 // loop_exit
      _
    %4955 = vsyncpa [#allocation5], 1
    %s4956 = scalar_lea.sflag [#allocation5], 1
    %4957 = vsyncpa %s4956, 1

</llo_original>
